<compile_context>
chip_gen: v6e
topology: v6e:2x2x1
jax: 0.10.0
libtpu: 0.0.40
codegen_flags: <defaults>
</compile_context>

<pallas_src>
import functools

import jax
import jax.numpy as jnp
from jax import lax
from jax.experimental import pallas as pl
from jax.experimental.pallas import tpu as pltpu


def _grid_sample_kernel(grid_ref, x_ref, o_ref, *, C, D, H, W, fuse_hw):
    # grid_ref: (3, TN) f32   normalized sampling coords (rows: x, y, z)
    # x_ref:    (C*D, H*W) f32  if fuse_hw else (C*D*H, W) f32 (resident)
    # o_ref:    (C, TN) f32   lane-dense output tile
    TN = grid_ref.shape[1]

    gx = grid_ref[0:1, :]  # (1, TN)
    gy = grid_ref[1:2, :]
    gz = grid_ref[2:3, :]

    # Un-normalize (align_corners=False):  pix = ((g + 1) * size - 1) / 2
    ix = ((gx + 1.0) * W - 1.0) * 0.5
    iy = ((gy + 1.0) * H - 1.0) * 0.5
    iz = ((gz + 1.0) * D - 1.0) * 0.5

    x0f = jnp.floor(ix)
    y0f = jnp.floor(iy)
    z0f = jnp.floor(iz)
    tx = ix - x0f  # fractional parts, (1, TN)
    ty = iy - y0f
    tz = iz - z0f
    x0 = x0f.astype(jnp.int32)
    y0 = y0f.astype(jnp.int32)
    z0 = z0f.astype(jnp.int32)

    def axis_weights(size, i0, t):
        # (size, TN) separable interpolation matrix: row i0 -> (1-t),
        # row i0+1 -> t.  Out-of-range corner indices match no row, which
        # implements padding_mode='zeros' with no explicit bounds mask.
        rows = lax.broadcasted_iota(jnp.int32, (size, TN), 0)
        return (jnp.where(rows == i0, 1.0 - t, 0.0)
                + jnp.where(rows == i0 + 1, t, 0.0))

    ww = axis_weights(W, x0, tx)  # (W, TN)
    wh = axis_weights(H, y0, ty)  # (H, TN)
    wd = axis_weights(D, z0, tz)  # (D, TN)

    if fuse_hw:
        # Joint H*W weight via outer product (at most 4 nonzeros per column),
        # then one MXU matmul contracts H and W together:
        #   (C*D, H*W) @ (H*W, TN) -> (C*D, TN)
        whw = (wh.reshape(H, 1, TN) * ww.reshape(1, W, TN)).reshape(H * W, TN)
        a = jnp.dot(x_ref[...], whw, preferred_element_type=jnp.float32)
    else:
        # Fallback for large H*W: contract W on the MXU, then H on the VPU.
        a = jnp.dot(x_ref[...], ww, preferred_element_type=jnp.float32)
        a = jnp.sum(a.reshape(C * D, H, TN) * wh[None, :, :], axis=1)

    # Contract D: broadcast-multiply + sublane reduce -> (C, TN).
    o = jnp.sum(a.reshape(C, D, TN) * wd[None, :, :], axis=1)
    o_ref[...] = o.astype(o_ref.dtype)


def _choose_tile_n(n_total, rows_per_sample,
                   vmem_budget_bytes=8 * 1024 * 1024, max_tile=2048):
    """Pick TN: multiple of 128, divides N, keeps the per-sample f32
    intermediates (rows_per_sample * TN * 4 bytes) under a v7x-safe VMEM
    budget.  Falls back to N itself for tiny problems (N not a multiple of
    128), where the full-extent block is legal."""
    cap = (vmem_budget_bytes // (max(rows_per_sample, 1) * 4)) // 128 * 128
    cap = max(128, min(cap, max_tile, n_total))
    best = 0
    t = 128
    while t <= cap:
        if n_total % t == 0:
            best = t
        t += 128
    return best if best > 0 else n_total


def spatial_deformation_forward(x, deformation_grid, *, tile_n=None):
    """x: (C, D, H, W) f32, deformation_grid: (G, G, G, 3) f32 -> (C, G, G, G)."""
    C, D, H, W = x.shape
    G1, G2, G3, _ = deformation_grid.shape
    N = G1 * G2 * G3

    # Fuse H and W into the MXU contraction when the joint weight stays small.
    fuse_hw = (H * W) <= 1024
    if fuse_hw:
        x2d = x.reshape(C * D, H * W).astype(jnp.float32)
        rows_per_sample = H * W + C * D + (W + H + D) + 8   # whw + a + axis wts
    else:
        x2d = x.reshape(C * D * H, W).astype(jnp.float32)
        rows_per_sample = C * D * H + C * D + (W + H + D) + 8

    grid_t = deformation_grid.reshape(N, 3).T.astype(jnp.float32)  # (3, N)

    if tile_n is None:
        # NOTE: sized for v7x (64 MiB VMEM); v5e/v6e could roughly double it.
        tile_n = _choose_tile_n(N, rows_per_sample)
    assert N % tile_n == 0
    num_tiles = N // tile_n

    kernel = functools.partial(_grid_sample_kernel,
                               C=C, D=D, H=H, W=W, fuse_hw=fuse_hw)

    out_flat = pl.pallas_call(
        kernel,
        out_shape=jax.ShapeDtypeStruct((C, N), jnp.float32),
        grid=(num_tiles,),
        in_specs=[
            # Deformation-grid coords streamed over N (double-buffered).
            pl.BlockSpec((3, tile_n), lambda i: (0, i)),
            # Input volume, fully resident (same block every step -> no re-DMA).
            pl.BlockSpec(x2d.shape, lambda i: (0, 0)),
        ],
        # Lane-dense output tiles.
        out_specs=pl.BlockSpec((C, tile_n), lambda i: (0, i)),
        compiler_params=pltpu.CompilerParams(
            # Output tiles are independent -> shard across TensorCores (v7x).
            dimension_semantics=("parallel",),
        ),
    )(grid_t, x2d)

    return out_flat.reshape(C, G1, G2, G3)


def _grid_sample_ref(x, grid):
    """Pure-JAX reference (trilinear, zeros padding, align_corners=False)."""
    C, D, H, W = x.shape
    G1, G2, G3, _ = grid.shape
    g = grid.reshape(-1, 3)
    ix = ((g[:, 0] + 1.0) * W - 1.0) * 0.5
    iy = ((g[:, 1] + 1.0) * H - 1.0) * 0.5
    iz = ((g[:, 2] + 1.0) * D - 1.0) * 0.5
    x0 = jnp.floor(ix).astype(jnp.int32)
    y0 = jnp.floor(iy).astype(jnp.int32)
    z0 = jnp.floor(iz).astype(jnp.int32)
    tx, ty, tz = ix - x0, iy - y0, iz - z0
    out = jnp.zeros((C, G1 * G2 * G3), jnp.float32)
    for dz in (0, 1):
        wz = tz if dz else (1.0 - tz)
        zi = z0 + dz
        for dy in (0, 1):
            wy = ty if dy else (1.0 - ty)
            yi = y0 + dy
            for dx in (0, 1):
                wx = tx if dx else (1.0 - tx)
                xi = x0 + dx
                w = wz * wy * wx
                valid = ((xi >= 0) & (xi < W) & (yi >= 0) & (yi < H)
                         & (zi >= 0) & (zi < D)).astype(jnp.float32)
                vals = x[:, jnp.clip(zi, 0, D - 1),
                         jnp.clip(yi, 0, H - 1),
                         jnp.clip(xi, 0, W - 1)]  # (C, N)
                out = out + (w * valid)[None, :] * vals
    return out.reshape(C, G1, G2, G3)


if __name__ == "__main__":
    key = jax.random.PRNGKey(0)
    k_grid, k_x, k_wide = jax.random.split(key, 3)

    C, D, H, W = 4, 8, 8, 8       # x: (C, D, H, W)
    G = 16                        # grid_size -> N = 4096, exercises N-tiling

    # Deterministic "parameter" init mirroring torch.randn(G,G,G,3) * 0.1
    deformation_grid = jax.random.normal(k_grid, (G, G, G, 3), jnp.float32) * 0.1
    x = jax.random.normal(k_x, (C, D, H, W), jnp.float32)

    out = jax.block_until_ready(spatial_deformation_forward(x, deformation_grid))
    assert out.shape == (C, G, G, G), out.shape

    ref = jax.block_until_ready(_grid_sample_ref(x, deformation_grid))
    assert jnp.allclose(out, ref, atol=1e-5, rtol=1e-5), float(
        jnp.max(jnp.abs(out - ref))
    )

    # Also exercise zeros-padding: coords that fall outside [-1, 1].
    wide_grid = jax.random.normal(k_wide, (G, G, G, 3), jnp.float32) * 1.5
    out2 = jax.block_until_ready(spatial_deformation_forward(x, wide_grid))
    ref2 = jax.block_until_ready(_grid_sample_ref(x, wide_grid))
    assert jnp.allclose(out2, ref2, atol=1e-5, rtol=1e-5), float(
        jnp.max(jnp.abs(out2 - ref2))
    )

    print("KERNEL_OK")
</pallas_src>

<mosaic_0001>
module attributes {stable_mosaic.version = 11 : i64} {
  func.func @_grid_sample_kernel(%arg0: i32, %arg1: memref<3x2048xf32, #tpu.memory_space<vmem>>, %arg2: memref<32x64xf32, #tpu.memory_space<vmem>>, %arg3: memref<4x2048xf32, #tpu.memory_space<vmem>>) attributes {dimension_semantics = [#tpu.dimension_semantics<parallel>], iteration_bounds = array<i64: 2>, scalar_prefetch = 0 : i64, scratch_operands = 0 : i64, tpu.core_type = #tpu.core_type<tc>, window_params = [{transform_indices = @transform_0, window_bounds = array<i64: 3, 2048>}, {pipeline_mode = #tpu.pipeline_mode<synchronous>, transform_indices = @transform_1, window_bounds = array<i64: 32, 64>}, {transform_indices = @transform_2, window_bounds = array<i64: 4, 2048>}]} {
    %c0 = arith.constant 0 : index
    %c0_0 = arith.constant 0 : index
    %0 = vector.load %arg1[%c0, %c0_0] : memref<3x2048xf32, #tpu.memory_space<vmem>>, vector<1x2048xf32>
    %c1 = arith.constant 1 : index
    %c0_1 = arith.constant 0 : index
    %1 = vector.load %arg1[%c1, %c0_1] : memref<3x2048xf32, #tpu.memory_space<vmem>>, vector<1x2048xf32>
    %c2 = arith.constant 2 : index
    %c0_2 = arith.constant 0 : index
    %2 = vector.load %arg1[%c2, %c0_2] : memref<3x2048xf32, #tpu.memory_space<vmem>>, vector<1x2048xf32>
    %cst = arith.constant 1.000000e+00 : f32
    %3 = vector.broadcast %cst : f32 to vector<1x2048xf32>
    %4 = arith.addf %0, %3 : vector<1x2048xf32>
    %cst_3 = arith.constant 8.000000e+00 : f32
    %5 = vector.broadcast %cst_3 : f32 to vector<1x2048xf32>
    %6 = arith.mulf %4, %5 : vector<1x2048xf32>
    %cst_4 = arith.constant 1.000000e+00 : f32
    %7 = vector.broadcast %cst_4 : f32 to vector<1x2048xf32>
    %8 = arith.subf %6, %7 : vector<1x2048xf32>
    %cst_5 = arith.constant 5.000000e-01 : f32
    %9 = vector.broadcast %cst_5 : f32 to vector<1x2048xf32>
    %10 = arith.mulf %8, %9 : vector<1x2048xf32>
    %cst_6 = arith.constant 1.000000e+00 : f32
    %11 = vector.broadcast %cst_6 : f32 to vector<1x2048xf32>
    %12 = arith.addf %1, %11 : vector<1x2048xf32>
    %cst_7 = arith.constant 8.000000e+00 : f32
    %13 = vector.broadcast %cst_7 : f32 to vector<1x2048xf32>
    %14 = arith.mulf %12, %13 : vector<1x2048xf32>
    %cst_8 = arith.constant 1.000000e+00 : f32
    %15 = vector.broadcast %cst_8 : f32 to vector<1x2048xf32>
    %16 = arith.subf %14, %15 : vector<1x2048xf32>
    %cst_9 = arith.constant 5.000000e-01 : f32
    %17 = vector.broadcast %cst_9 : f32 to vector<1x2048xf32>
    %18 = arith.mulf %16, %17 : vector<1x2048xf32>
    %cst_10 = arith.constant 1.000000e+00 : f32
    %19 = vector.broadcast %cst_10 : f32 to vector<1x2048xf32>
    %20 = arith.addf %2, %19 : vector<1x2048xf32>
    %cst_11 = arith.constant 8.000000e+00 : f32
    %21 = vector.broadcast %cst_11 : f32 to vector<1x2048xf32>
    %22 = arith.mulf %20, %21 : vector<1x2048xf32>
    %cst_12 = arith.constant 1.000000e+00 : f32
    %23 = vector.broadcast %cst_12 : f32 to vector<1x2048xf32>
    %24 = arith.subf %22, %23 : vector<1x2048xf32>
    %cst_13 = arith.constant 5.000000e-01 : f32
    %25 = vector.broadcast %cst_13 : f32 to vector<1x2048xf32>
    %26 = arith.mulf %24, %25 : vector<1x2048xf32>
    %27 = math.floor %10 : vector<1x2048xf32>
    %28 = math.floor %18 : vector<1x2048xf32>
    %29 = math.floor %26 : vector<1x2048xf32>
    %30 = arith.subf %10, %27 : vector<1x2048xf32>
    %31 = arith.subf %18, %28 : vector<1x2048xf32>
    %32 = arith.subf %26, %29 : vector<1x2048xf32>
    %33 = arith.fptosi %27 : vector<1x2048xf32> to vector<1x2048xi32>
    %34 = arith.fptosi %28 : vector<1x2048xf32> to vector<1x2048xi32>
    %35 = arith.fptosi %29 : vector<1x2048xf32> to vector<1x2048xi32>
    %36 = tpu.iota {dimensions = array<i32: 0>} : vector<8x2048xi32>
    %37 = vector.broadcast %33 : vector<1x2048xi32> to vector<8x2048xi32>
    %38 = arith.cmpi eq, %36, %37 : vector<8x2048xi32>
    %cst_14 = arith.constant 1.000000e+00 : f32
    %39 = vector.broadcast %cst_14 : f32 to vector<1x2048xf32>
    %40 = arith.subf %39, %30 : vector<1x2048xf32>
    %cst_15 = arith.constant 0.000000e+00 : f32
    %41 = vector.shape_cast %40 : vector<1x2048xf32> to vector<1x2048xf32>
    %42 = vector.broadcast %41 : vector<1x2048xf32> to vector<8x2048xf32>
    %43 = vector.broadcast %cst_15 : f32 to vector<8x2048xf32>
    %44 = arith.select %38, %42, %43 : vector<8x2048xi1>, vector<8x2048xf32>
    %c1_i32 = arith.constant 1 : i32
    %45 = vector.broadcast %c1_i32 : i32 to vector<1x2048xi32>
    %46 = arith.addi %33, %45 : vector<1x2048xi32>
    %47 = vector.broadcast %46 : vector<1x2048xi32> to vector<8x2048xi32>
    %48 = arith.cmpi eq, %36, %47 : vector<8x2048xi32>
    %cst_16 = arith.constant 0.000000e+00 : f32
    %49 = vector.shape_cast %30 : vector<1x2048xf32> to vector<1x2048xf32>
    %50 = vector.broadcast %49 : vector<1x2048xf32> to vector<8x2048xf32>
    %51 = vector.broadcast %cst_16 : f32 to vector<8x2048xf32>
    %52 = arith.select %48, %50, %51 : vector<8x2048xi1>, vector<8x2048xf32>
    %53 = arith.addf %44, %52 : vector<8x2048xf32>
    %54 = tpu.iota {dimensions = array<i32: 0>} : vector<8x2048xi32>
    %55 = vector.broadcast %34 : vector<1x2048xi32> to vector<8x2048xi32>
    %56 = arith.cmpi eq, %54, %55 : vector<8x2048xi32>
    %cst_17 = arith.constant 1.000000e+00 : f32
    %57 = vector.broadcast %cst_17 : f32 to vector<1x2048xf32>
    %58 = arith.subf %57, %31 : vector<1x2048xf32>
    %cst_18 = arith.constant 0.000000e+00 : f32
    %59 = vector.shape_cast %58 : vector<1x2048xf32> to vector<1x2048xf32>
    %60 = vector.broadcast %59 : vector<1x2048xf32> to vector<8x2048xf32>
    %61 = vector.broadcast %cst_18 : f32 to vector<8x2048xf32>
    %62 = arith.select %56, %60, %61 : vector<8x2048xi1>, vector<8x2048xf32>
    %c1_i32_19 = arith.constant 1 : i32
    %63 = vector.broadcast %c1_i32_19 : i32 to vector<1x2048xi32>
    %64 = arith.addi %34, %63 : vector<1x2048xi32>
    %65 = vector.broadcast %64 : vector<1x2048xi32> to vector<8x2048xi32>
    %66 = arith.cmpi eq, %54, %65 : vector<8x2048xi32>
    %cst_20 = arith.constant 0.000000e+00 : f32
    %67 = vector.shape_cast %31 : vector<1x2048xf32> to vector<1x2048xf32>
    %68 = vector.broadcast %67 : vector<1x2048xf32> to vector<8x2048xf32>
    %69 = vector.broadcast %cst_20 : f32 to vector<8x2048xf32>
    %70 = arith.select %66, %68, %69 : vector<8x2048xi1>, vector<8x2048xf32>
    %71 = arith.addf %62, %70 : vector<8x2048xf32>
    %72 = tpu.iota {dimensions = array<i32: 0>} : vector<8x2048xi32>
    %73 = vector.broadcast %35 : vector<1x2048xi32> to vector<8x2048xi32>
    %74 = arith.cmpi eq, %72, %73 : vector<8x2048xi32>
    %cst_21 = arith.constant 1.000000e+00 : f32
    %75 = vector.broadcast %cst_21 : f32 to vector<1x2048xf32>
    %76 = arith.subf %75, %32 : vector<1x2048xf32>
    %cst_22 = arith.constant 0.000000e+00 : f32
    %77 = vector.shape_cast %76 : vector<1x2048xf32> to vector<1x2048xf32>
    %78 = vector.broadcast %77 : vector<1x2048xf32> to vector<8x2048xf32>
    %79 = vector.broadcast %cst_22 : f32 to vector<8x2048xf32>
    %80 = arith.select %74, %78, %79 : vector<8x2048xi1>, vector<8x2048xf32>
    %c1_i32_23 = arith.constant 1 : i32
    %81 = vector.broadcast %c1_i32_23 : i32 to vector<1x2048xi32>
    %82 = arith.addi %35, %81 : vector<1x2048xi32>
    %83 = vector.broadcast %82 : vector<1x2048xi32> to vector<8x2048xi32>
    %84 = arith.cmpi eq, %72, %83 : vector<8x2048xi32>
    %cst_24 = arith.constant 0.000000e+00 : f32
    %85 = vector.shape_cast %32 : vector<1x2048xf32> to vector<1x2048xf32>
    %86 = vector.broadcast %85 : vector<1x2048xf32> to vector<8x2048xf32>
    %87 = vector.broadcast %cst_24 : f32 to vector<8x2048xf32>
    %88 = arith.select %84, %86, %87 : vector<8x2048xi1>, vector<8x2048xf32>
    %89 = arith.addf %80, %88 : vector<8x2048xf32>
    %90 = vector.shape_cast %71 : vector<8x2048xf32> to vector<8x1x2048xf32>
    %91 = vector.shape_cast %53 : vector<8x2048xf32> to vector<1x8x2048xf32>
    %92 = vector.broadcast %90 : vector<8x1x2048xf32> to vector<8x8x2048xf32>
    %93 = vector.broadcast %91 : vector<1x8x2048xf32> to vector<8x8x2048xf32>
    %94 = arith.mulf %92, %93 : vector<8x8x2048xf32>
    %95 = vector.shape_cast %94 : vector<8x8x2048xf32> to vector<64x2048xf32>
    %c0_25 = arith.constant 0 : index
    %c0_26 = arith.constant 0 : index
    %96 = vector.load %arg2[%c0_25, %c0_26] : memref<32x64xf32, #tpu.memory_space<vmem>>, vector<32x64xf32>
    %cst_27 = arith.constant dense<0.000000e+00> : vector<32x2048xf32>
    %97 = tpu.matmul %96, %95, %cst_27 {dimension_numbers = #tpu.dot_dimension_numbers<[1], [0], [0], [1], [0, 0, 1, 1], [], []>} : vector<32x64xf32>, vector<64x2048xf32>, vector<32x2048xf32> -> vector<32x2048xf32>
    %98 = vector.shape_cast %97 : vector<32x2048xf32> to vector<4x8x2048xf32>
    %99 = vector.shape_cast %89 : vector<8x2048xf32> to vector<1x8x2048xf32>
    %100 = vector.broadcast %99 : vector<1x8x2048xf32> to vector<4x8x2048xf32>
    %101 = arith.mulf %98, %100 : vector<4x8x2048xf32>
    %cst_28 = arith.constant dense<0.000000e+00> : vector<4x2048xf32>
    %102 = vector.multi_reduction <add>, %101, %cst_28 [1] : vector<4x8x2048xf32> to vector<4x2048xf32>
    %c0_29 = arith.constant 0 : index
    %c0_30 = arith.constant 0 : index
    %103 = vector.load %arg3[%c0_29, %c0_30] : memref<4x2048xf32, #tpu.memory_space<vmem>>, vector<4x2048xf32>
    tpu.vector_store %arg3[%c0_29, %c0_30], %102 {strides = array<i32>} : memref<4x2048xf32, #tpu.memory_space<vmem>>, vector<4x2048xf32>,
    return
  }
  func.func @transform_0(%arg0: i32) -> (i32, i32) {
    %c0_i32 = arith.constant 0 : i32
    %c0_i32_0 = arith.constant 0 : i32
    return %c0_i32, %arg0 : i32, i32
  }
  func.func @transform_1(%arg0: i32) -> (i32, i32) {
    %c0_i32 = arith.constant 0 : i32
    %c0_i32_0 = arith.constant 0 : i32
    %c0_i32_1 = arith.constant 0 : i32
    return %c0_i32, %c0_i32_0 : i32, i32
  }
  func.func @transform_2(%arg0: i32) -> (i32, i32) {
    %c0_i32 = arith.constant 0 : i32
    %c0_i32_0 = arith.constant 0 : i32
    return %c0_i32, %arg0 : i32, i32
  }
}

</mosaic_0001>

<llo_original>
// kernel: tpu_custom_call.1
$region0: #{tpu_custom_call.1}
  #allocation0 [shape = 'u32[]', space=smem, size = 0x4, offset = 0x4, fixed_abs, tag = 'smem constant byte address 0x4 - core index']
  #allocation1 [shape = 'u32[144,128]{1,0:T(1,128)}', space=vmem, size = 0x12000, scoped, tag = 'internal scratch']
  %s0 = inlined_call_operand.hbm [shape: f32[3,4096], index: 0, kind: input, shape index: {}]
  %s1 = inlined_call_operand.hbm [shape: f32[32,64], index: 1, kind: input, shape index: {}]
  %s2 = inlined_call_operand.hbm [shape: f32[4,4096], index: 2, kind: output, shape index: {}]
  %s3 = sld [smem:[#allocation0]]
  $region49: #{tpu_custom_call.1} parent=0
    _
  %s5 = ssub.s32 1, %s3
  %s6 = scalar_select 0, %s5, %s3
  $region1: #{tpu_custom_call.1} parent=0
    #allocation2 [shape = 'u8[65536]{0}', space=vmem, size = 0x10000, scoped, tag = 'input window, operand 0']
    #allocation3 [shape = 's32[2]{0}', space=sflag, size = 0x8, scoped, tag = 'scoped memory for tpu_custom_call.1']
    #allocation4 [shape = 's32[2]{0}', space=sflag, size = 0x8, scoped, tag = 'scoped memory for tpu_custom_call.1']
    #allocation5 [shape = 'u8[16384]{0}', space=vmem, size = 0x4000, scoped, tag = 'input window, operand 1, single buffered']
    #allocation6 [shape = 's32[1]{0}', space=sflag, size = 0x4, scoped, tag = 'scoped memory for tpu_custom_call.1']
    #allocation7 [shape = 'u8[65536]{0}', space=vmem, size = 0x10000, scoped, tag = 'output window, operand 0']
    %7 = vsyncpa [#allocation3], 0
    %s8 = scalar_lea.sflag [#allocation3], 1
    %9 = vsyncpa %s8, 0
    %10 = vsyncpa [#allocation6], 0
    %11 = vsyncpa [#allocation4], 0
    %s12 = scalar_lea.sflag [#allocation4], 1
    %13 = vsyncpa %s12, 0
    loop: start=0, step=1, limit=4
    $region2: #{tpu_custom_call.1} parent=1 // loop_pre_header
      _
    $region3: #{tpu_custom_call.1} parent=1 // loop_header
      %s15 = sphi 0, %s19
      %p16 = scmp.ge.s32.totalorder %s15, 4
      %s25 = sphi 0, %s27
      %s28 = sphi 0, %s25
      %s29 = sphi 0, %s28
      %s45 = sphi 0, %s29
      %s49 = sphi 0, %s49
      %s51 = sphi 0, %s49
      %s52 = sphi 0, %s51
      %s66 = sphi 0, %s52
      %s72 = sphi 0, %s74
      %s75 = sphi 0, %s72
      %s76 = sphi 0, %s75
      %s92 = sphi 0, %s76
    $region4: #{tpu_custom_call.1} parent=1 // loop_header_branch
      %18 = sbr.rel (%p16) target = $region8
    $region5: #{tpu_custom_call.1} parent=1 // loop_body
      %s20 = ssub.s32 %s15, 1
      %s21 = ssub.s32 %s15, 2
      %s22 = sadd.s32 %s15, 1
      %s23 = ssub.s32 %s15, %s22
      %p24 = scmp.eq.s32.totalorder %s23, 0
      %s26 = sadd.s32 %s25, 1
      %s27 = scalar_select %p24, %s25, %s26
      %p30 = pneg %p24
      %p31 = scmp.eq.s32.totalorder %s15, 1
      %p32 = por %p30, %p31
      %p33 = scmp.ne.s32.totalorder %s25, %s28
      %p34 = scmp.eq.s32.totalorder %s15, 0
      %p35 = por %p33, %p34
      %p36 = scmp.ne.s32.totalorder %s25, %s28
      %p37 = scmp.eq.s32.totalorder %s20, 1
      %p38 = por %p36, %p37
      %p39 = scmp.ne.s32.totalorder %s28, %s29
      %p40 = scmp.eq.s32.totalorder %s20, 0
      %p41 = por %p39, %p40
      %p42 = scmp.ne.s32.totalorder %s28, %s29
      %p43 = scmp.eq.s32.totalorder %s21, 1
      %p44 = por %p42, %p43
      %p46 = scmp.ne.s32.totalorder %s29, %s45
      %p47 = scmp.eq.s32.totalorder %s21, 0
      %p48 = por %p46, %p47
      %s50 = sadd.s32 %s49, 1
      %p53 = scmp.eq.s32.totalorder %s15, 1
      %p54 = scmp.ne.s32.totalorder %s49, %s51
      %p55 = scmp.eq.s32.totalorder %s15, 0
      %p56 = por %p54, %p55
      %p57 = scmp.ne.s32.totalorder %s49, %s51
      %p58 = scmp.eq.s32.totalorder %s20, 1
      %p59 = por %p57, %p58
      %p60 = scmp.ne.s32.totalorder %s51, %s52
      %p61 = scmp.eq.s32.totalorder %s20, 0
      %p62 = por %p60, %p61
      %p63 = scmp.ne.s32.totalorder %s51, %s52
      %p64 = scmp.eq.s32.totalorder %s21, 1
      %p65 = por %p63, %p64
      %p67 = scmp.ne.s32.totalorder %s52, %s66
      %p68 = scmp.eq.s32.totalorder %s21, 0
      %p69 = por %p67, %p68
      %s70 = ssub.s32 %s15, %s22
      %p71 = scmp.eq.s32.totalorder %s70, 0
      %s73 = sadd.s32 %s72, 1
      %s74 = scalar_select %p71, %s72, %s73
      %p77 = pneg %p71
      %p78 = scmp.eq.s32.totalorder %s15, 1
      %p79 = por %p77, %p78
      %p80 = scmp.ne.s32.totalorder %s72, %s75
      %p81 = scmp.eq.s32.totalorder %s15, 0
      %p82 = por %p80, %p81
      %p83 = scmp.ne.s32.totalorder %s72, %s75
      %p84 = scmp.eq.s32.totalorder %s20, 1
      %p85 = por %p83, %p84
      %p86 = scmp.ne.s32.totalorder %s75, %s76
      %p87 = scmp.eq.s32.totalorder %s20, 0
      %p88 = por %p86, %p87
      %p89 = scmp.ne.s32.totalorder %s75, %s76
      %p90 = scmp.eq.s32.totalorder %s21, 1
      %p91 = por %p89, %p90
      %p93 = scmp.ne.s32.totalorder %s76, %s92
      %p94 = scmp.eq.s32.totalorder %s21, 0
      %p95 = por %p93, %p94
      %p96 = scmp.le.s32.totalorder 1, %s15
      %p97 = scmp.lt.s32.totalorder %s15, 3
      %p98 = pnand %p96, %p97
      %p99 = pneg %p98
      // Predicated region
      $region9: #{tpu_custom_call.1} parent=5 // pred_check
        _
      $region10: #{tpu_custom_call.1} parent=5 // pred_check_branch
        %101 = sbr.rel (%p98) target = $region12
      $region11: #{tpu_custom_call.1} parent=5 // pred_region
        %s102 = ssub.s32 %s15, 1
        // Predicated region
        $region13: #{tpu_custom_call.1} parent=11 // pred_check
          %p103 = pneg %p62
        $region14: #{tpu_custom_call.1} parent=11 // pred_check_branch
          %105 = sbr.rel (%p103) target = $region16
        $region15: #{tpu_custom_call.1} parent=11 // pred_region
          %s107 = ssub.s32 512, 512
          %108 = vsyncadd [#allocation6], %s107
          %s109 = sshll.u32 [#allocation5], 4
          %s110 = int_to_ptr.vmem [resolvable:$true] %s109
          %115 = dma.hbm_to_vmem [thread:$0]  %s1, 512, %s110, [#allocation6], 128, 128, 8
        $region16: #{tpu_custom_call.1} parent=11 // pred_fallthru
          _
      $region12: #{tpu_custom_call.1} parent=5 // pred_fallthru
        _
      %p116 = scmp.lt.s32.totalorder %s15, 2
      // Predicated region
      $region17: #{tpu_custom_call.1} parent=5 // pred_check
        %p117 = pneg %p116
      $region18: #{tpu_custom_call.1} parent=5 // pred_check_branch
        %119 = sbr.rel (%p117) target = $region20
      $region19: #{tpu_custom_call.1} parent=5 // pred_region
        // Predicated region
        $region21: #{tpu_custom_call.1} parent=19 // pred_check
          %p120 = pneg %p35
        $region22: #{tpu_custom_call.1} parent=19 // pred_check_branch
          %122 = sbr.rel (%p120) target = $region24
        $region23: #{tpu_custom_call.1} parent=19 // pred_region
          %s123 = sand.u32 %s25, 1
          %s124 = scalar_lea.sflag [#allocation3], %s123
          %s125 = sand.u32 %s25, 1
          %s126 = smul.addr %s125, 64
          %s127 = scalar_lea.vmem [#allocation2], %s126
          %s128 = smul.u32 16, %s15
          %s130 = ssub.s32 1024, 1024
          %131 = vsyncadd %s124, %s130
          %s132 = smul.addr %s128, 64
          %s133 = scalar_lea.hbm %s0, %s132
          %s135 = sshll.u32 %s127, 4
          %s136 = int_to_ptr.vmem [resolvable:$true] %s135
          %138 = dma.hbm_to_vmem [thread:$0]  %s133, 1024, %s136, %s124
        $region24: #{tpu_custom_call.1} parent=19 // pred_fallthru
          _
      $region20: #{tpu_custom_call.1} parent=5 // pred_fallthru
        _
      %p139 = scmp.le.s32.totalorder 1, %s15
      %p140 = scmp.lt.s32.totalorder %s15, 3
      %p141 = pnand %p139, %p140
      %p142 = pneg %p141
      // Predicated region
      $region25: #{tpu_custom_call.1} parent=5 // pred_check
        _
      $region26: #{tpu_custom_call.1} parent=5 // pred_check_branch
        %144 = sbr.rel (%p141) target = $region28
      $region27: #{tpu_custom_call.1} parent=5 // pred_region
        %s145 = ssub.s32 %s15, 1
        %s146 = sand.u32 %s28, 1
        %s147 = scalar_lea.sflag [#allocation3], %s146
        %s148 = sand.u32 %s28, 1
        %s149 = smul.addr %s148, 64
        %s150 = scalar_lea.vmem [#allocation2], %s149
        // Predicated region
        $region29: #{tpu_custom_call.1} parent=27 // pred_check
          %p151 = pneg %p41
        $region30: #{tpu_custom_call.1} parent=27 // pred_check_branch
          %153 = sbr.rel (%p151) target = $region32
        $region31: #{tpu_custom_call.1} parent=27 // pred_region
          %154 = dma.done %s147, 1024
        $region32: #{tpu_custom_call.1} parent=27 // pred_fallthru
          _
        // Predicated region
        $region33: #{tpu_custom_call.1} parent=27 // pred_check
          %p155 = pneg %p62
        $region34: #{tpu_custom_call.1} parent=27 // pred_check_branch
          %157 = sbr.rel (%p155) target = $region36
        $region35: #{tpu_custom_call.1} parent=27 // pred_region
          %158 = dma.done [#allocation6], 512
        $region36: #{tpu_custom_call.1} parent=27 // pred_fallthru
          _
        %s159 = sand.u32 %s28, 1
        %s160 = scalar_lea.sflag [#allocation3], %s159
        %s161 = sand.u32 %s28, 1
        %s162 = smul.addr %s161, 64
        %s163 = scalar_lea.vmem [#allocation2], %s162
        %p164 = pneg %p41
        %p165 = pneg %p38
        %p166 = pneg %p62
        %p167 = pneg %p59
        %p168 = pneg %p88
        %p169 = pneg %p85
        %s170 = sand.u32 %s75, 1
        %s171 = scalar_lea.sflag [#allocation4], %s170
        %s172 = sand.u32 %s75, 1
        %s173 = smul.addr %s172, 64
        %s174 = scalar_lea.vmem [#allocation7], %s173
        %s175 = smul.u32 16, %s20
        %s176 = smul.u32 16, %s20
        %v177 = vld [vmem:[%s150] ss:$4 sm:$0xff]
        %s178 = scalar_lea.vmem %s150, 32 [#allocation2]
        %v179 = vld [vmem:[%s178] ss:$4 sm:$0xff]
        %s180 = scalar_lea.vmem %s150, 1 [#allocation2]
        %v181 = vld [vmem:[%s180] ss:$4 sm:$0xff]
        %s182 = scalar_lea.vmem %s150, 33 [#allocation2]
        %v183 = vld [vmem:[%s182] ss:$4 sm:$0xff]
        %s184 = scalar_lea.vmem %s150, 2 [#allocation2]
        %v185 = vld [vmem:[%s184] ss:$4 sm:$0xff]
        %s186 = scalar_lea.vmem %s150, 34 [#allocation2]
        %v187 = vld [vmem:[%s186] ss:$4 sm:$0xff]
        %v188 = vadd.f32 %v177, 1.0
        %v189 = vadd.f32 %v179, 1.0
        %v190 = vmul.f32 %v188, 8.0
        %v191 = vmul.f32 %v189, 8.0
        %v192 = vsub.f32 %v190, 1.0
        %v193 = vsub.f32 %v191, 1.0
        %v194 = vmul.f32 %v192, 0.5
        %v195 = vmul.f32 %v193, 0.5
        %v196 = vadd.f32 %v181, 1.0
        %v197 = vadd.f32 %v183, 1.0
        %v198 = vmul.f32 %v196, 8.0
        %v199 = vmul.f32 %v197, 8.0
        %v200 = vsub.f32 %v198, 1.0
        %v201 = vsub.f32 %v199, 1.0
        %v202 = vmul.f32 %v200, 0.5
        %v203 = vmul.f32 %v201, 0.5
        %v204 = vadd.f32 %v185, 1.0
        %v205 = vadd.f32 %v187, 1.0
        %v206 = vmul.f32 %v204, 8.0
        %v207 = vmul.f32 %v205, 8.0
        %v208 = vsub.f32 %v206, 1.0
        %v209 = vsub.f32 %v207, 1.0
        %v210 = vmul.f32 %v208, 0.5
        %v211 = vmul.f32 %v209, 0.5
        %v212 = vfloor.f32 %v194
        %v213 = vfloor.f32 %v195
        %v214 = vfloor.f32 %v202
        %v215 = vfloor.f32 %v203
        %v216 = vfloor.f32 %v210
        %v217 = vfloor.f32 %v211
        %v218 = vsub.f32 %v194, %v212
        %v219 = vsub.f32 %v195, %v213
        %v220 = vsub.f32 %v202, %v214
        %v221 = vsub.f32 %v203, %v215
        %v222 = vsub.f32 %v210, %v216
        %v223 = vsub.f32 %v211, %v217
        %v224 = vcvt.f32.s32.to.zero.pseudo %v212
        %v225 = vcvt.f32.s32.to.zero.pseudo %v213
        %v226 = vcvt.f32.s32.to.zero.pseudo %v214
        %v227 = vcvt.f32.s32.to.zero.pseudo %v215
        %v228 = vcvt.f32.s32.to.zero.pseudo %v216
        %v229 = vcvt.f32.s32.to.zero.pseudo %v217
        %v230 = vlaneseq
        %v231 = vshrl.u32 %v230, 7
        %v232 = vlaneseq
        %v233 = vshrl.u32 %v232, 7
        %v234 = vsub.s32 0, %v233
        %v235 = vrot.slane %v224, %v234
        %v236 = vlaneseq
        %v237 = vshrl.u32 %v236, 7
        %v238 = vsub.s32 1, %v237
        %v239 = vrot.slane %v224, %v238
        %v240 = vlaneseq
        %v241 = vshrl.u32 %v240, 7
        %v242 = vsub.s32 2, %v241
        %v243 = vrot.slane %v224, %v242
        %v244 = vlaneseq
        %v245 = vshrl.u32 %v244, 7
        %v246 = vsub.s32 3, %v245
        %v247 = vrot.slane %v224, %v246
        %v248 = vlaneseq
        %v249 = vshrl.u32 %v248, 7
        %v250 = vsub.s32 4, %v249
        %v251 = vrot.slane %v224, %v250
        %v252 = vlaneseq
        %v253 = vshrl.u32 %v252, 7
        %v254 = vsub.s32 5, %v253
        %v255 = vrot.slane %v224, %v254
        %v256 = vlaneseq
        %v257 = vshrl.u32 %v256, 7
        %v258 = vsub.s32 6, %v257
        %v259 = vrot.slane %v224, %v258
        %v260 = vlaneseq
        %v261 = vshrl.u32 %v260, 7
        %v262 = vsub.s32 7, %v261
        %v263 = vrot.slane %v224, %v262
        %v264 = vlaneseq
        %v265 = vshrl.u32 %v264, 7
        %v266 = vsub.s32 0, %v265
        %v267 = vrot.slane %v225, %v266
        %v268 = vlaneseq
        %v269 = vshrl.u32 %v268, 7
        %v270 = vsub.s32 1, %v269
        %v271 = vrot.slane %v225, %v270
        %v272 = vlaneseq
        %v273 = vshrl.u32 %v272, 7
        %v274 = vsub.s32 2, %v273
        %v275 = vrot.slane %v225, %v274
        %v276 = vlaneseq
        %v277 = vshrl.u32 %v276, 7
        %v278 = vsub.s32 3, %v277
        %v279 = vrot.slane %v225, %v278
        %v280 = vlaneseq
        %v281 = vshrl.u32 %v280, 7
        %v282 = vsub.s32 4, %v281
        %v283 = vrot.slane %v225, %v282
        %v284 = vlaneseq
        %v285 = vshrl.u32 %v284, 7
        %v286 = vsub.s32 5, %v285
        %v287 = vrot.slane %v225, %v286
        %v288 = vlaneseq
        %v289 = vshrl.u32 %v288, 7
        %v290 = vsub.s32 6, %v289
        %v291 = vrot.slane %v225, %v290
        %v292 = vlaneseq
        %v293 = vshrl.u32 %v292, 7
        %v294 = vsub.s32 7, %v293
        %v295 = vrot.slane %v225, %v294
        %vm296 = vcmp.eq.s32.totalorder %v231, %v235
        %vm297 = vcmp.eq.s32.totalorder %v231, %v239
        %vm298 = vcmp.eq.s32.totalorder %v231, %v243
        %vm299 = vcmp.eq.s32.totalorder %v231, %v247
        %vm300 = vcmp.eq.s32.totalorder %v231, %v251
        %vm301 = vcmp.eq.s32.totalorder %v231, %v255
        %vm302 = vcmp.eq.s32.totalorder %v231, %v259
        %vm303 = vcmp.eq.s32.totalorder %v231, %v263
        %vm304 = vcmp.eq.s32.totalorder %v231, %v267
        %vm305 = vcmp.eq.s32.totalorder %v231, %v271
        %vm306 = vcmp.eq.s32.totalorder %v231, %v275
        %vm307 = vcmp.eq.s32.totalorder %v231, %v279
        %vm308 = vcmp.eq.s32.totalorder %v231, %v283
        %vm309 = vcmp.eq.s32.totalorder %v231, %v287
        %vm310 = vcmp.eq.s32.totalorder %v231, %v291
        %vm311 = vcmp.eq.s32.totalorder %v231, %v295
        %v312 = vsub.f32 1.0, %v218
        %v313 = vsub.f32 1.0, %v219
        %v316 = vlaneseq
        %v317 = vshrl.u32 %v316, 7
        %v318 = vsub.s32 0, %v317
        %v319 = vrot.slane %v312, %v318
        %v320 = vlaneseq
        %v321 = vshrl.u32 %v320, 7
        %v322 = vsub.s32 1, %v321
        %v323 = vrot.slane %v312, %v322
        %v324 = vlaneseq
        %v325 = vshrl.u32 %v324, 7
        %v326 = vsub.s32 2, %v325
        %v327 = vrot.slane %v312, %v326
        %v328 = vlaneseq
        %v329 = vshrl.u32 %v328, 7
        %v330 = vsub.s32 3, %v329
        %v331 = vrot.slane %v312, %v330
        %v332 = vlaneseq
        %v333 = vshrl.u32 %v332, 7
        %v334 = vsub.s32 4, %v333
        %v335 = vrot.slane %v312, %v334
        %v336 = vlaneseq
        %v337 = vshrl.u32 %v336, 7
        %v338 = vsub.s32 5, %v337
        %v339 = vrot.slane %v312, %v338
        %v340 = vlaneseq
        %v341 = vshrl.u32 %v340, 7
        %v342 = vsub.s32 6, %v341
        %v343 = vrot.slane %v312, %v342
        %v344 = vlaneseq
        %v345 = vshrl.u32 %v344, 7
        %v346 = vsub.s32 7, %v345
        %v347 = vrot.slane %v312, %v346
        %v348 = vlaneseq
        %v349 = vshrl.u32 %v348, 7
        %v350 = vsub.s32 0, %v349
        %v351 = vrot.slane %v313, %v350
        %v352 = vlaneseq
        %v353 = vshrl.u32 %v352, 7
        %v354 = vsub.s32 1, %v353
        %v355 = vrot.slane %v313, %v354
        %v356 = vlaneseq
        %v357 = vshrl.u32 %v356, 7
        %v358 = vsub.s32 2, %v357
        %v359 = vrot.slane %v313, %v358
        %v360 = vlaneseq
        %v361 = vshrl.u32 %v360, 7
        %v362 = vsub.s32 3, %v361
        %v363 = vrot.slane %v313, %v362
        %v364 = vlaneseq
        %v365 = vshrl.u32 %v364, 7
        %v366 = vsub.s32 4, %v365
        %v367 = vrot.slane %v313, %v366
        %v368 = vlaneseq
        %v369 = vshrl.u32 %v368, 7
        %v370 = vsub.s32 5, %v369
        %v371 = vrot.slane %v313, %v370
        %v372 = vlaneseq
        %v373 = vshrl.u32 %v372, 7
        %v374 = vsub.s32 6, %v373
        %v375 = vrot.slane %v313, %v374
        %v376 = vlaneseq
        %v377 = vshrl.u32 %v376, 7
        %v378 = vsub.s32 7, %v377
        %v379 = vrot.slane %v313, %v378
        %v396 = vsel %vm296, %v319, 0.0
        %v397 = vsel %vm297, %v323, 0.0
        %v398 = vsel %vm298, %v327, 0.0
        %v399 = vsel %vm299, %v331, 0.0
        %v400 = vsel %vm300, %v335, 0.0
        %v401 = vsel %vm301, %v339, 0.0
        %v402 = vsel %vm302, %v343, 0.0
        %v403 = vsel %vm303, %v347, 0.0
        %v404 = vsel %vm304, %v351, 0.0
        %v405 = vsel %vm305, %v355, 0.0
        %v406 = vsel %vm306, %v359, 0.0
        %v407 = vsel %vm307, %v363, 0.0
        %v408 = vsel %vm308, %v367, 0.0
        %v409 = vsel %vm309, %v371, 0.0
        %v410 = vsel %vm310, %v375, 0.0
        %v411 = vsel %vm311, %v379, 0.0
        %v412 = vadd.s32 %v224, 1
        %v413 = vadd.s32 %v225, 1
        %v414 = vlaneseq
        %v415 = vshrl.u32 %v414, 7
        %v416 = vsub.s32 0, %v415
        %v417 = vrot.slane %v412, %v416
        %v418 = vlaneseq
        %v419 = vshrl.u32 %v418, 7
        %v420 = vsub.s32 1, %v419
        %v421 = vrot.slane %v412, %v420
        %v422 = vlaneseq
        %v423 = vshrl.u32 %v422, 7
        %v424 = vsub.s32 2, %v423
        %v425 = vrot.slane %v412, %v424
        %v426 = vlaneseq
        %v427 = vshrl.u32 %v426, 7
        %v428 = vsub.s32 3, %v427
        %v429 = vrot.slane %v412, %v428
        %v430 = vlaneseq
        %v431 = vshrl.u32 %v430, 7
        %v432 = vsub.s32 4, %v431
        %v433 = vrot.slane %v412, %v432
        %v434 = vlaneseq
        %v435 = vshrl.u32 %v434, 7
        %v436 = vsub.s32 5, %v435
        %v437 = vrot.slane %v412, %v436
        %v438 = vlaneseq
        %v439 = vshrl.u32 %v438, 7
        %v440 = vsub.s32 6, %v439
        %v441 = vrot.slane %v412, %v440
        %v442 = vlaneseq
        %v443 = vshrl.u32 %v442, 7
        %v444 = vsub.s32 7, %v443
        %v445 = vrot.slane %v412, %v444
        %v446 = vlaneseq
        %v447 = vshrl.u32 %v446, 7
        %v448 = vsub.s32 0, %v447
        %v449 = vrot.slane %v413, %v448
        %v450 = vlaneseq
        %v451 = vshrl.u32 %v450, 7
        %v452 = vsub.s32 1, %v451
        %v453 = vrot.slane %v413, %v452
        %v454 = vlaneseq
        %v455 = vshrl.u32 %v454, 7
        %v456 = vsub.s32 2, %v455
        %v457 = vrot.slane %v413, %v456
        %v458 = vlaneseq
        %v459 = vshrl.u32 %v458, 7
        %v460 = vsub.s32 3, %v459
        %v461 = vrot.slane %v413, %v460
        %v462 = vlaneseq
        %v463 = vshrl.u32 %v462, 7
        %v464 = vsub.s32 4, %v463
        %v465 = vrot.slane %v413, %v464
        %v466 = vlaneseq
        %v467 = vshrl.u32 %v466, 7
        %v468 = vsub.s32 5, %v467
        %v469 = vrot.slane %v413, %v468
        %v470 = vlaneseq
        %v471 = vshrl.u32 %v470, 7
        %v472 = vsub.s32 6, %v471
        %v473 = vrot.slane %v413, %v472
        %v474 = vlaneseq
        %v475 = vshrl.u32 %v474, 7
        %v476 = vsub.s32 7, %v475
        %v477 = vrot.slane %v413, %v476
        %vm478 = vcmp.eq.s32.totalorder %v231, %v417
        %vm479 = vcmp.eq.s32.totalorder %v231, %v421
        %vm480 = vcmp.eq.s32.totalorder %v231, %v425
        %vm481 = vcmp.eq.s32.totalorder %v231, %v429
        %vm482 = vcmp.eq.s32.totalorder %v231, %v433
        %vm483 = vcmp.eq.s32.totalorder %v231, %v437
        %vm484 = vcmp.eq.s32.totalorder %v231, %v441
        %vm485 = vcmp.eq.s32.totalorder %v231, %v445
        %vm486 = vcmp.eq.s32.totalorder %v231, %v449
        %vm487 = vcmp.eq.s32.totalorder %v231, %v453
        %vm488 = vcmp.eq.s32.totalorder %v231, %v457
        %vm489 = vcmp.eq.s32.totalorder %v231, %v461
        %vm490 = vcmp.eq.s32.totalorder %v231, %v465
        %vm491 = vcmp.eq.s32.totalorder %v231, %v469
        %vm492 = vcmp.eq.s32.totalorder %v231, %v473
        %vm493 = vcmp.eq.s32.totalorder %v231, %v477
        %v496 = vlaneseq
        %v497 = vshrl.u32 %v496, 7
        %v498 = vsub.s32 0, %v497
        %v499 = vrot.slane %v218, %v498
        %v500 = vlaneseq
        %v501 = vshrl.u32 %v500, 7
        %v502 = vsub.s32 1, %v501
        %v503 = vrot.slane %v218, %v502
        %v504 = vlaneseq
        %v505 = vshrl.u32 %v504, 7
        %v506 = vsub.s32 2, %v505
        %v507 = vrot.slane %v218, %v506
        %v508 = vlaneseq
        %v509 = vshrl.u32 %v508, 7
        %v510 = vsub.s32 3, %v509
        %v511 = vrot.slane %v218, %v510
        %v512 = vlaneseq
        %v513 = vshrl.u32 %v512, 7
        %v514 = vsub.s32 4, %v513
        %v515 = vrot.slane %v218, %v514
        %v516 = vlaneseq
        %v517 = vshrl.u32 %v516, 7
        %v518 = vsub.s32 5, %v517
        %v519 = vrot.slane %v218, %v518
        %v520 = vlaneseq
        %v521 = vshrl.u32 %v520, 7
        %v522 = vsub.s32 6, %v521
        %v523 = vrot.slane %v218, %v522
        %v524 = vlaneseq
        %v525 = vshrl.u32 %v524, 7
        %v526 = vsub.s32 7, %v525
        %v527 = vrot.slane %v218, %v526
        %v528 = vlaneseq
        %v529 = vshrl.u32 %v528, 7
        %v530 = vsub.s32 0, %v529
        %v531 = vrot.slane %v219, %v530
        %v532 = vlaneseq
        %v533 = vshrl.u32 %v532, 7
        %v534 = vsub.s32 1, %v533
        %v535 = vrot.slane %v219, %v534
        %v536 = vlaneseq
        %v537 = vshrl.u32 %v536, 7
        %v538 = vsub.s32 2, %v537
        %v539 = vrot.slane %v219, %v538
        %v540 = vlaneseq
        %v541 = vshrl.u32 %v540, 7
        %v542 = vsub.s32 3, %v541
        %v543 = vrot.slane %v219, %v542
        %v544 = vlaneseq
        %v545 = vshrl.u32 %v544, 7
        %v546 = vsub.s32 4, %v545
        %v547 = vrot.slane %v219, %v546
        %v548 = vlaneseq
        %v549 = vshrl.u32 %v548, 7
        %v550 = vsub.s32 5, %v549
        %v551 = vrot.slane %v219, %v550
        %v552 = vlaneseq
        %v553 = vshrl.u32 %v552, 7
        %v554 = vsub.s32 6, %v553
        %v555 = vrot.slane %v219, %v554
        %v556 = vlaneseq
        %v557 = vshrl.u32 %v556, 7
        %v558 = vsub.s32 7, %v557
        %v559 = vrot.slane %v219, %v558
        %v576 = vsel %vm478, %v499, 0.0
        %v577 = vsel %vm479, %v503, 0.0
        %v578 = vsel %vm480, %v507, 0.0
        %v579 = vsel %vm481, %v511, 0.0
        %v580 = vsel %vm482, %v515, 0.0
        %v581 = vsel %vm483, %v519, 0.0
        %v582 = vsel %vm484, %v523, 0.0
        %v583 = vsel %vm485, %v527, 0.0
        %v584 = vsel %vm486, %v531, 0.0
        %v585 = vsel %vm487, %v535, 0.0
        %v586 = vsel %vm488, %v539, 0.0
        %v587 = vsel %vm489, %v543, 0.0
        %v588 = vsel %vm490, %v547, 0.0
        %v589 = vsel %vm491, %v551, 0.0
        %v590 = vsel %vm492, %v555, 0.0
        %v591 = vsel %vm493, %v559, 0.0
        %v592 = vadd.f32 %v396, %v576
        %v593 = vadd.f32 %v397, %v577
        %v594 = vadd.f32 %v398, %v578
        %v595 = vadd.f32 %v399, %v579
        %v596 = vadd.f32 %v400, %v580
        %v597 = vadd.f32 %v401, %v581
        %v598 = vadd.f32 %v402, %v582
        %v599 = vadd.f32 %v403, %v583
        %v600 = vadd.f32 %v404, %v584
        %v601 = vadd.f32 %v405, %v585
        %v602 = vadd.f32 %v406, %v586
        %v603 = vadd.f32 %v407, %v587
        %v604 = vadd.f32 %v408, %v588
        %v605 = vadd.f32 %v409, %v589
        %v606 = vadd.f32 %v410, %v590
        %v607 = vadd.f32 %v411, %v591
        %v608 = vlaneseq
        %v609 = vshrl.u32 %v608, 7
        %v610 = vsub.s32 0, %v609
        %v611 = vrot.slane %v226, %v610
        %v612 = vlaneseq
        %v613 = vshrl.u32 %v612, 7
        %v614 = vsub.s32 1, %v613
        %v615 = vrot.slane %v226, %v614
        %v616 = vlaneseq
        %v617 = vshrl.u32 %v616, 7
        %v618 = vsub.s32 2, %v617
        %v619 = vrot.slane %v226, %v618
        %v620 = vlaneseq
        %v621 = vshrl.u32 %v620, 7
        %v622 = vsub.s32 3, %v621
        %v623 = vrot.slane %v226, %v622
        %v624 = vlaneseq
        %v625 = vshrl.u32 %v624, 7
        %v626 = vsub.s32 4, %v625
        %v627 = vrot.slane %v226, %v626
        %v628 = vlaneseq
        %v629 = vshrl.u32 %v628, 7
        %v630 = vsub.s32 5, %v629
        %v631 = vrot.slane %v226, %v630
        %v632 = vlaneseq
        %v633 = vshrl.u32 %v632, 7
        %v634 = vsub.s32 6, %v633
        %v635 = vrot.slane %v226, %v634
        %v636 = vlaneseq
        %v637 = vshrl.u32 %v636, 7
        %v638 = vsub.s32 7, %v637
        %v639 = vrot.slane %v226, %v638
        %v640 = vlaneseq
        %v641 = vshrl.u32 %v640, 7
        %v642 = vsub.s32 0, %v641
        %v643 = vrot.slane %v227, %v642
        %v644 = vlaneseq
        %v645 = vshrl.u32 %v644, 7
        %v646 = vsub.s32 1, %v645
        %v647 = vrot.slane %v227, %v646
        %v648 = vlaneseq
        %v649 = vshrl.u32 %v648, 7
        %v650 = vsub.s32 2, %v649
        %v651 = vrot.slane %v227, %v650
        %v652 = vlaneseq
        %v653 = vshrl.u32 %v652, 7
        %v654 = vsub.s32 3, %v653
        %v655 = vrot.slane %v227, %v654
        %v656 = vlaneseq
        %v657 = vshrl.u32 %v656, 7
        %v658 = vsub.s32 4, %v657
        %v659 = vrot.slane %v227, %v658
        %v660 = vlaneseq
        %v661 = vshrl.u32 %v660, 7
        %v662 = vsub.s32 5, %v661
        %v663 = vrot.slane %v227, %v662
        %v664 = vlaneseq
        %v665 = vshrl.u32 %v664, 7
        %v666 = vsub.s32 6, %v665
        %v667 = vrot.slane %v227, %v666
        %v668 = vlaneseq
        %v669 = vshrl.u32 %v668, 7
        %v670 = vsub.s32 7, %v669
        %v671 = vrot.slane %v227, %v670
        %vm672 = vcmp.eq.s32.totalorder %v231, %v611
        %vm673 = vcmp.eq.s32.totalorder %v231, %v615
        %vm674 = vcmp.eq.s32.totalorder %v231, %v619
        %vm675 = vcmp.eq.s32.totalorder %v231, %v623
        %vm676 = vcmp.eq.s32.totalorder %v231, %v627
        %vm677 = vcmp.eq.s32.totalorder %v231, %v631
        %vm678 = vcmp.eq.s32.totalorder %v231, %v635
        %vm679 = vcmp.eq.s32.totalorder %v231, %v639
        %vm680 = vcmp.eq.s32.totalorder %v231, %v643
        %vm681 = vcmp.eq.s32.totalorder %v231, %v647
        %vm682 = vcmp.eq.s32.totalorder %v231, %v651
        %vm683 = vcmp.eq.s32.totalorder %v231, %v655
        %vm684 = vcmp.eq.s32.totalorder %v231, %v659
        %vm685 = vcmp.eq.s32.totalorder %v231, %v663
        %vm686 = vcmp.eq.s32.totalorder %v231, %v667
        %vm687 = vcmp.eq.s32.totalorder %v231, %v671
        %v688 = vsub.f32 1.0, %v220
        %v689 = vsub.f32 1.0, %v221
        %v692 = vlaneseq
        %v693 = vshrl.u32 %v692, 7
        %v694 = vsub.s32 0, %v693
        %v695 = vrot.slane %v688, %v694
        %v696 = vlaneseq
        %v697 = vshrl.u32 %v696, 7
        %v698 = vsub.s32 1, %v697
        %v699 = vrot.slane %v688, %v698
        %v700 = vlaneseq
        %v701 = vshrl.u32 %v700, 7
        %v702 = vsub.s32 2, %v701
        %v703 = vrot.slane %v688, %v702
        %v704 = vlaneseq
        %v705 = vshrl.u32 %v704, 7
        %v706 = vsub.s32 3, %v705
        %v707 = vrot.slane %v688, %v706
        %v708 = vlaneseq
        %v709 = vshrl.u32 %v708, 7
        %v710 = vsub.s32 4, %v709
        %v711 = vrot.slane %v688, %v710
        %v712 = vlaneseq
        %v713 = vshrl.u32 %v712, 7
        %v714 = vsub.s32 5, %v713
        %v715 = vrot.slane %v688, %v714
        %v716 = vlaneseq
        %v717 = vshrl.u32 %v716, 7
        %v718 = vsub.s32 6, %v717
        %v719 = vrot.slane %v688, %v718
        %v720 = vlaneseq
        %v721 = vshrl.u32 %v720, 7
        %v722 = vsub.s32 7, %v721
        %v723 = vrot.slane %v688, %v722
        %v724 = vlaneseq
        %v725 = vshrl.u32 %v724, 7
        %v726 = vsub.s32 0, %v725
        %v727 = vrot.slane %v689, %v726
        %v728 = vlaneseq
        %v729 = vshrl.u32 %v728, 7
        %v730 = vsub.s32 1, %v729
        %v731 = vrot.slane %v689, %v730
        %v732 = vlaneseq
        %v733 = vshrl.u32 %v732, 7
        %v734 = vsub.s32 2, %v733
        %v735 = vrot.slane %v689, %v734
        %v736 = vlaneseq
        %v737 = vshrl.u32 %v736, 7
        %v738 = vsub.s32 3, %v737
        %v739 = vrot.slane %v689, %v738
        %v740 = vlaneseq
        %v741 = vshrl.u32 %v740, 7
        %v742 = vsub.s32 4, %v741
        %v743 = vrot.slane %v689, %v742
        %v744 = vlaneseq
        %v745 = vshrl.u32 %v744, 7
        %v746 = vsub.s32 5, %v745
        %v747 = vrot.slane %v689, %v746
        %v748 = vlaneseq
        %v749 = vshrl.u32 %v748, 7
        %v750 = vsub.s32 6, %v749
        %v751 = vrot.slane %v689, %v750
        %v752 = vlaneseq
        %v753 = vshrl.u32 %v752, 7
        %v754 = vsub.s32 7, %v753
        %v755 = vrot.slane %v689, %v754
        %v772 = vsel %vm672, %v695, 0.0
        %v773 = vsel %vm673, %v699, 0.0
        %v774 = vsel %vm674, %v703, 0.0
        %v775 = vsel %vm675, %v707, 0.0
        %v776 = vsel %vm676, %v711, 0.0
        %v777 = vsel %vm677, %v715, 0.0
        %v778 = vsel %vm678, %v719, 0.0
        %v779 = vsel %vm679, %v723, 0.0
        %v780 = vsel %vm680, %v727, 0.0
        %v781 = vsel %vm681, %v731, 0.0
        %v782 = vsel %vm682, %v735, 0.0
        %v783 = vsel %vm683, %v739, 0.0
        %v784 = vsel %vm684, %v743, 0.0
        %v785 = vsel %vm685, %v747, 0.0
        %v786 = vsel %vm686, %v751, 0.0
        %v787 = vsel %vm687, %v755, 0.0
        %v788 = vadd.s32 %v226, 1
        %v789 = vadd.s32 %v227, 1
        %v790 = vlaneseq
        %v791 = vshrl.u32 %v790, 7
        %v792 = vsub.s32 0, %v791
        %v793 = vrot.slane %v788, %v792
        %v794 = vlaneseq
        %v795 = vshrl.u32 %v794, 7
        %v796 = vsub.s32 1, %v795
        %v797 = vrot.slane %v788, %v796
        %v798 = vlaneseq
        %v799 = vshrl.u32 %v798, 7
        %v800 = vsub.s32 2, %v799
        %v801 = vrot.slane %v788, %v800
        %v802 = vlaneseq
        %v803 = vshrl.u32 %v802, 7
        %v804 = vsub.s32 3, %v803
        %v805 = vrot.slane %v788, %v804
        %v806 = vlaneseq
        %v807 = vshrl.u32 %v806, 7
        %v808 = vsub.s32 4, %v807
        %v809 = vrot.slane %v788, %v808
        %v810 = vlaneseq
        %v811 = vshrl.u32 %v810, 7
        %v812 = vsub.s32 5, %v811
        %v813 = vrot.slane %v788, %v812
        %v814 = vlaneseq
        %v815 = vshrl.u32 %v814, 7
        %v816 = vsub.s32 6, %v815
        %v817 = vrot.slane %v788, %v816
        %v818 = vlaneseq
        %v819 = vshrl.u32 %v818, 7
        %v820 = vsub.s32 7, %v819
        %v821 = vrot.slane %v788, %v820
        %v822 = vlaneseq
        %v823 = vshrl.u32 %v822, 7
        %v824 = vsub.s32 0, %v823
        %v825 = vrot.slane %v789, %v824
        %v826 = vlaneseq
        %v827 = vshrl.u32 %v826, 7
        %v828 = vsub.s32 1, %v827
        %v829 = vrot.slane %v789, %v828
        %v830 = vlaneseq
        %v831 = vshrl.u32 %v830, 7
        %v832 = vsub.s32 2, %v831
        %v833 = vrot.slane %v789, %v832
        %v834 = vlaneseq
        %v835 = vshrl.u32 %v834, 7
        %v836 = vsub.s32 3, %v835
        %v837 = vrot.slane %v789, %v836
        %v838 = vlaneseq
        %v839 = vshrl.u32 %v838, 7
        %v840 = vsub.s32 4, %v839
        %v841 = vrot.slane %v789, %v840
        %v842 = vlaneseq
        %v843 = vshrl.u32 %v842, 7
        %v844 = vsub.s32 5, %v843
        %v845 = vrot.slane %v789, %v844
        %v846 = vlaneseq
        %v847 = vshrl.u32 %v846, 7
        %v848 = vsub.s32 6, %v847
        %v849 = vrot.slane %v789, %v848
        %v850 = vlaneseq
        %v851 = vshrl.u32 %v850, 7
        %v852 = vsub.s32 7, %v851
        %v853 = vrot.slane %v789, %v852
        %vm854 = vcmp.eq.s32.totalorder %v231, %v793
        %vm855 = vcmp.eq.s32.totalorder %v231, %v797
        %vm856 = vcmp.eq.s32.totalorder %v231, %v801
        %vm857 = vcmp.eq.s32.totalorder %v231, %v805
        %vm858 = vcmp.eq.s32.totalorder %v231, %v809
        %vm859 = vcmp.eq.s32.totalorder %v231, %v813
        %vm860 = vcmp.eq.s32.totalorder %v231, %v817
        %vm861 = vcmp.eq.s32.totalorder %v231, %v821
        %vm862 = vcmp.eq.s32.totalorder %v231, %v825
        %vm863 = vcmp.eq.s32.totalorder %v231, %v829
        %vm864 = vcmp.eq.s32.totalorder %v231, %v833
        %vm865 = vcmp.eq.s32.totalorder %v231, %v837
        %vm866 = vcmp.eq.s32.totalorder %v231, %v841
        %vm867 = vcmp.eq.s32.totalorder %v231, %v845
        %vm868 = vcmp.eq.s32.totalorder %v231, %v849
        %vm869 = vcmp.eq.s32.totalorder %v231, %v853
        %v872 = vlaneseq
        %v873 = vshrl.u32 %v872, 7
        %v874 = vsub.s32 0, %v873
        %v875 = vrot.slane %v220, %v874
        %v876 = vlaneseq
        %v877 = vshrl.u32 %v876, 7
        %v878 = vsub.s32 1, %v877
        %v879 = vrot.slane %v220, %v878
        %v880 = vlaneseq
        %v881 = vshrl.u32 %v880, 7
        %v882 = vsub.s32 2, %v881
        %v883 = vrot.slane %v220, %v882
        %v884 = vlaneseq
        %v885 = vshrl.u32 %v884, 7
        %v886 = vsub.s32 3, %v885
        %v887 = vrot.slane %v220, %v886
        %v888 = vlaneseq
        %v889 = vshrl.u32 %v888, 7
        %v890 = vsub.s32 4, %v889
        %v891 = vrot.slane %v220, %v890
        %v892 = vlaneseq
        %v893 = vshrl.u32 %v892, 7
        %v894 = vsub.s32 5, %v893
        %v895 = vrot.slane %v220, %v894
        %v896 = vlaneseq
        %v897 = vshrl.u32 %v896, 7
        %v898 = vsub.s32 6, %v897
        %v899 = vrot.slane %v220, %v898
        %v900 = vlaneseq
        %v901 = vshrl.u32 %v900, 7
        %v902 = vsub.s32 7, %v901
        %v903 = vrot.slane %v220, %v902
        %v904 = vlaneseq
        %v905 = vshrl.u32 %v904, 7
        %v906 = vsub.s32 0, %v905
        %v907 = vrot.slane %v221, %v906
        %v908 = vlaneseq
        %v909 = vshrl.u32 %v908, 7
        %v910 = vsub.s32 1, %v909
        %v911 = vrot.slane %v221, %v910
        %v912 = vlaneseq
        %v913 = vshrl.u32 %v912, 7
        %v914 = vsub.s32 2, %v913
        %v915 = vrot.slane %v221, %v914
        %v916 = vlaneseq
        %v917 = vshrl.u32 %v916, 7
        %v918 = vsub.s32 3, %v917
        %v919 = vrot.slane %v221, %v918
        %v920 = vlaneseq
        %v921 = vshrl.u32 %v920, 7
        %v922 = vsub.s32 4, %v921
        %v923 = vrot.slane %v221, %v922
        %v924 = vlaneseq
        %v925 = vshrl.u32 %v924, 7
        %v926 = vsub.s32 5, %v925
        %v927 = vrot.slane %v221, %v926
        %v928 = vlaneseq
        %v929 = vshrl.u32 %v928, 7
        %v930 = vsub.s32 6, %v929
        %v931 = vrot.slane %v221, %v930
        %v932 = vlaneseq
        %v933 = vshrl.u32 %v932, 7
        %v934 = vsub.s32 7, %v933
        %v935 = vrot.slane %v221, %v934
        %v952 = vsel %vm854, %v875, 0.0
        %v953 = vsel %vm855, %v879, 0.0
        %v954 = vsel %vm856, %v883, 0.0
        %v955 = vsel %vm857, %v887, 0.0
        %v956 = vsel %vm858, %v891, 0.0
        %v957 = vsel %vm859, %v895, 0.0
        %v958 = vsel %vm860, %v899, 0.0
        %v959 = vsel %vm861, %v903, 0.0
        %v960 = vsel %vm862, %v907, 0.0
        %v961 = vsel %vm863, %v911, 0.0
        %v962 = vsel %vm864, %v915, 0.0
        %v963 = vsel %vm865, %v919, 0.0
        %v964 = vsel %vm866, %v923, 0.0
        %v965 = vsel %vm867, %v927, 0.0
        %v966 = vsel %vm868, %v931, 0.0
        %v967 = vsel %vm869, %v935, 0.0
        %v968 = vadd.f32 %v772, %v952
        %v969 = vadd.f32 %v773, %v953
        %v970 = vadd.f32 %v774, %v954
        %v971 = vadd.f32 %v775, %v955
        %v972 = vadd.f32 %v776, %v956
        %v973 = vadd.f32 %v777, %v957
        %v974 = vadd.f32 %v778, %v958
        %v975 = vadd.f32 %v779, %v959
        %v976 = vadd.f32 %v780, %v960
        %v977 = vadd.f32 %v781, %v961
        %v978 = vadd.f32 %v782, %v962
        %v979 = vadd.f32 %v783, %v963
        %v980 = vadd.f32 %v784, %v964
        %v981 = vadd.f32 %v785, %v965
        %v982 = vadd.f32 %v786, %v966
        %v983 = vadd.f32 %v787, %v967
        %v984 = vlaneseq
        %v985 = vshrl.u32 %v984, 7
        %v986 = vsub.s32 0, %v985
        %v987 = vrot.slane %v228, %v986
        %v988 = vlaneseq
        %v989 = vshrl.u32 %v988, 7
        %v990 = vsub.s32 1, %v989
        %v991 = vrot.slane %v228, %v990
        %v992 = vlaneseq
        %v993 = vshrl.u32 %v992, 7
        %v994 = vsub.s32 2, %v993
        %v995 = vrot.slane %v228, %v994
        %v996 = vlaneseq
        %v997 = vshrl.u32 %v996, 7
        %v998 = vsub.s32 3, %v997
        %v999 = vrot.slane %v228, %v998
        %v1000 = vlaneseq
        %v1001 = vshrl.u32 %v1000, 7
        %v1002 = vsub.s32 4, %v1001
        %v1003 = vrot.slane %v228, %v1002
        %v1004 = vlaneseq
        %v1005 = vshrl.u32 %v1004, 7
        %v1006 = vsub.s32 5, %v1005
        %v1007 = vrot.slane %v228, %v1006
        %v1008 = vlaneseq
        %v1009 = vshrl.u32 %v1008, 7
        %v1010 = vsub.s32 6, %v1009
        %v1011 = vrot.slane %v228, %v1010
        %v1012 = vlaneseq
        %v1013 = vshrl.u32 %v1012, 7
        %v1014 = vsub.s32 7, %v1013
        %v1015 = vrot.slane %v228, %v1014
        %v1016 = vlaneseq
        %v1017 = vshrl.u32 %v1016, 7
        %v1018 = vsub.s32 0, %v1017
        %v1019 = vrot.slane %v229, %v1018
        %v1020 = vlaneseq
        %v1021 = vshrl.u32 %v1020, 7
        %v1022 = vsub.s32 1, %v1021
        %v1023 = vrot.slane %v229, %v1022
        %v1024 = vlaneseq
        %v1025 = vshrl.u32 %v1024, 7
        %v1026 = vsub.s32 2, %v1025
        %v1027 = vrot.slane %v229, %v1026
        %v1028 = vlaneseq
        %v1029 = vshrl.u32 %v1028, 7
        %v1030 = vsub.s32 3, %v1029
        %v1031 = vrot.slane %v229, %v1030
        %v1032 = vlaneseq
        %v1033 = vshrl.u32 %v1032, 7
        %v1034 = vsub.s32 4, %v1033
        %v1035 = vrot.slane %v229, %v1034
        %v1036 = vlaneseq
        %v1037 = vshrl.u32 %v1036, 7
        %v1038 = vsub.s32 5, %v1037
        %v1039 = vrot.slane %v229, %v1038
        %v1040 = vlaneseq
        %v1041 = vshrl.u32 %v1040, 7
        %v1042 = vsub.s32 6, %v1041
        %v1043 = vrot.slane %v229, %v1042
        %v1044 = vlaneseq
        %v1045 = vshrl.u32 %v1044, 7
        %v1046 = vsub.s32 7, %v1045
        %v1047 = vrot.slane %v229, %v1046
        %vm1048 = vcmp.eq.s32.totalorder %v231, %v987
        %vm1049 = vcmp.eq.s32.totalorder %v231, %v991
        %vm1050 = vcmp.eq.s32.totalorder %v231, %v995
        %vm1051 = vcmp.eq.s32.totalorder %v231, %v999
        %vm1052 = vcmp.eq.s32.totalorder %v231, %v1003
        %vm1053 = vcmp.eq.s32.totalorder %v231, %v1007
        %vm1054 = vcmp.eq.s32.totalorder %v231, %v1011
        %vm1055 = vcmp.eq.s32.totalorder %v231, %v1015
        %vm1056 = vcmp.eq.s32.totalorder %v231, %v1019
        %vm1057 = vcmp.eq.s32.totalorder %v231, %v1023
        %vm1058 = vcmp.eq.s32.totalorder %v231, %v1027
        %vm1059 = vcmp.eq.s32.totalorder %v231, %v1031
        %vm1060 = vcmp.eq.s32.totalorder %v231, %v1035
        %vm1061 = vcmp.eq.s32.totalorder %v231, %v1039
        %vm1062 = vcmp.eq.s32.totalorder %v231, %v1043
        %vm1063 = vcmp.eq.s32.totalorder %v231, %v1047
        %v1064 = vsub.f32 1.0, %v222
        %v1065 = vsub.f32 1.0, %v223
        %v1068 = vlaneseq
        %v1069 = vshrl.u32 %v1068, 7
        %v1070 = vsub.s32 0, %v1069
        %v1071 = vrot.slane %v1064, %v1070
        %v1072 = vlaneseq
        %v1073 = vshrl.u32 %v1072, 7
        %v1074 = vsub.s32 1, %v1073
        %v1075 = vrot.slane %v1064, %v1074
        %v1076 = vlaneseq
        %v1077 = vshrl.u32 %v1076, 7
        %v1078 = vsub.s32 2, %v1077
        %v1079 = vrot.slane %v1064, %v1078
        %v1080 = vlaneseq
        %v1081 = vshrl.u32 %v1080, 7
        %v1082 = vsub.s32 3, %v1081
        %v1083 = vrot.slane %v1064, %v1082
        %v1084 = vlaneseq
        %v1085 = vshrl.u32 %v1084, 7
        %v1086 = vsub.s32 4, %v1085
        %v1087 = vrot.slane %v1064, %v1086
        %v1088 = vlaneseq
        %v1089 = vshrl.u32 %v1088, 7
        %v1090 = vsub.s32 5, %v1089
        %v1091 = vrot.slane %v1064, %v1090
        %v1092 = vlaneseq
        %v1093 = vshrl.u32 %v1092, 7
        %v1094 = vsub.s32 6, %v1093
        %v1095 = vrot.slane %v1064, %v1094
        %v1096 = vlaneseq
        %v1097 = vshrl.u32 %v1096, 7
        %v1098 = vsub.s32 7, %v1097
        %v1099 = vrot.slane %v1064, %v1098
        %v1100 = vlaneseq
        %v1101 = vshrl.u32 %v1100, 7
        %v1102 = vsub.s32 0, %v1101
        %v1103 = vrot.slane %v1065, %v1102
        %v1104 = vlaneseq
        %v1105 = vshrl.u32 %v1104, 7
        %v1106 = vsub.s32 1, %v1105
        %v1107 = vrot.slane %v1065, %v1106
        %v1108 = vlaneseq
        %v1109 = vshrl.u32 %v1108, 7
        %v1110 = vsub.s32 2, %v1109
        %v1111 = vrot.slane %v1065, %v1110
        %v1112 = vlaneseq
        %v1113 = vshrl.u32 %v1112, 7
        %v1114 = vsub.s32 3, %v1113
        %v1115 = vrot.slane %v1065, %v1114
        %v1116 = vlaneseq
        %v1117 = vshrl.u32 %v1116, 7
        %v1118 = vsub.s32 4, %v1117
        %v1119 = vrot.slane %v1065, %v1118
        %v1120 = vlaneseq
        %v1121 = vshrl.u32 %v1120, 7
        %v1122 = vsub.s32 5, %v1121
        %v1123 = vrot.slane %v1065, %v1122
        %v1124 = vlaneseq
        %v1125 = vshrl.u32 %v1124, 7
        %v1126 = vsub.s32 6, %v1125
        %v1127 = vrot.slane %v1065, %v1126
        %v1128 = vlaneseq
        %v1129 = vshrl.u32 %v1128, 7
        %v1130 = vsub.s32 7, %v1129
        %v1131 = vrot.slane %v1065, %v1130
        %v1148 = vsel %vm1048, %v1071, 0.0
        %v1149 = vsel %vm1049, %v1075, 0.0
        %v1150 = vsel %vm1050, %v1079, 0.0
        %v1151 = vsel %vm1051, %v1083, 0.0
        %v1152 = vsel %vm1052, %v1087, 0.0
        %v1153 = vsel %vm1053, %v1091, 0.0
        %v1154 = vsel %vm1054, %v1095, 0.0
        %v1155 = vsel %vm1055, %v1099, 0.0
        %v1156 = vsel %vm1056, %v1103, 0.0
        %v1157 = vsel %vm1057, %v1107, 0.0
        %v1158 = vsel %vm1058, %v1111, 0.0
        %v1159 = vsel %vm1059, %v1115, 0.0
        %v1160 = vsel %vm1060, %v1119, 0.0
        %v1161 = vsel %vm1061, %v1123, 0.0
        %v1162 = vsel %vm1062, %v1127, 0.0
        %v1163 = vsel %vm1063, %v1131, 0.0
        %v1164 = vadd.s32 %v228, 1
        %v1165 = vadd.s32 %v229, 1
        %v1166 = vlaneseq
        %v1167 = vshrl.u32 %v1166, 7
        %v1168 = vsub.s32 0, %v1167
        %v1169 = vrot.slane %v1164, %v1168
        %v1170 = vlaneseq
        %v1171 = vshrl.u32 %v1170, 7
        %v1172 = vsub.s32 1, %v1171
        %v1173 = vrot.slane %v1164, %v1172
        %v1174 = vlaneseq
        %v1175 = vshrl.u32 %v1174, 7
        %v1176 = vsub.s32 2, %v1175
        %v1177 = vrot.slane %v1164, %v1176
        %v1178 = vlaneseq
        %v1179 = vshrl.u32 %v1178, 7
        %v1180 = vsub.s32 3, %v1179
        %v1181 = vrot.slane %v1164, %v1180
        %v1182 = vlaneseq
        %v1183 = vshrl.u32 %v1182, 7
        %v1184 = vsub.s32 4, %v1183
        %v1185 = vrot.slane %v1164, %v1184
        %v1186 = vlaneseq
        %v1187 = vshrl.u32 %v1186, 7
        %v1188 = vsub.s32 5, %v1187
        %v1189 = vrot.slane %v1164, %v1188
        %v1190 = vlaneseq
        %v1191 = vshrl.u32 %v1190, 7
        %v1192 = vsub.s32 6, %v1191
        %v1193 = vrot.slane %v1164, %v1192
        %v1194 = vlaneseq
        %v1195 = vshrl.u32 %v1194, 7
        %v1196 = vsub.s32 7, %v1195
        %v1197 = vrot.slane %v1164, %v1196
        %v1198 = vlaneseq
        %v1199 = vshrl.u32 %v1198, 7
        %v1200 = vsub.s32 0, %v1199
        %v1201 = vrot.slane %v1165, %v1200
        %v1202 = vlaneseq
        %v1203 = vshrl.u32 %v1202, 7
        %v1204 = vsub.s32 1, %v1203
        %v1205 = vrot.slane %v1165, %v1204
        %v1206 = vlaneseq
        %v1207 = vshrl.u32 %v1206, 7
        %v1208 = vsub.s32 2, %v1207
        %v1209 = vrot.slane %v1165, %v1208
        %v1210 = vlaneseq
        %v1211 = vshrl.u32 %v1210, 7
        %v1212 = vsub.s32 3, %v1211
        %v1213 = vrot.slane %v1165, %v1212
        %v1214 = vlaneseq
        %v1215 = vshrl.u32 %v1214, 7
        %v1216 = vsub.s32 4, %v1215
        %v1217 = vrot.slane %v1165, %v1216
        %v1218 = vlaneseq
        %v1219 = vshrl.u32 %v1218, 7
        %v1220 = vsub.s32 5, %v1219
        %v1221 = vrot.slane %v1165, %v1220
        %v1222 = vlaneseq
        %v1223 = vshrl.u32 %v1222, 7
        %v1224 = vsub.s32 6, %v1223
        %v1225 = vrot.slane %v1165, %v1224
        %v1226 = vlaneseq
        %v1227 = vshrl.u32 %v1226, 7
        %v1228 = vsub.s32 7, %v1227
        %v1229 = vrot.slane %v1165, %v1228
        %vm1230 = vcmp.eq.s32.totalorder %v231, %v1169
        %vm1231 = vcmp.eq.s32.totalorder %v231, %v1173
        %vm1232 = vcmp.eq.s32.totalorder %v231, %v1177
        %vm1233 = vcmp.eq.s32.totalorder %v231, %v1181
        %vm1234 = vcmp.eq.s32.totalorder %v231, %v1185
        %vm1235 = vcmp.eq.s32.totalorder %v231, %v1189
        %vm1236 = vcmp.eq.s32.totalorder %v231, %v1193
        %vm1237 = vcmp.eq.s32.totalorder %v231, %v1197
        %vm1238 = vcmp.eq.s32.totalorder %v231, %v1201
        %vm1239 = vcmp.eq.s32.totalorder %v231, %v1205
        %vm1240 = vcmp.eq.s32.totalorder %v231, %v1209
        %vm1241 = vcmp.eq.s32.totalorder %v231, %v1213
        %vm1242 = vcmp.eq.s32.totalorder %v231, %v1217
        %vm1243 = vcmp.eq.s32.totalorder %v231, %v1221
        %vm1244 = vcmp.eq.s32.totalorder %v231, %v1225
        %vm1245 = vcmp.eq.s32.totalorder %v231, %v1229
        %v1248 = vlaneseq
        %v1249 = vshrl.u32 %v1248, 7
        %v1250 = vsub.s32 0, %v1249
        %v1251 = vrot.slane %v222, %v1250
        %v1252 = vlaneseq
        %v1253 = vshrl.u32 %v1252, 7
        %v1254 = vsub.s32 1, %v1253
        %v1255 = vrot.slane %v222, %v1254
        %v1256 = vlaneseq
        %v1257 = vshrl.u32 %v1256, 7
        %v1258 = vsub.s32 2, %v1257
        %v1259 = vrot.slane %v222, %v1258
        %v1260 = vlaneseq
        %v1261 = vshrl.u32 %v1260, 7
        %v1262 = vsub.s32 3, %v1261
        %v1263 = vrot.slane %v222, %v1262
        %v1264 = vlaneseq
        %v1265 = vshrl.u32 %v1264, 7
        %v1266 = vsub.s32 4, %v1265
        %v1267 = vrot.slane %v222, %v1266
        %v1268 = vlaneseq
        %v1269 = vshrl.u32 %v1268, 7
        %v1270 = vsub.s32 5, %v1269
        %v1271 = vrot.slane %v222, %v1270
        %v1272 = vlaneseq
        %v1273 = vshrl.u32 %v1272, 7
        %v1274 = vsub.s32 6, %v1273
        %v1275 = vrot.slane %v222, %v1274
        %v1276 = vlaneseq
        %v1277 = vshrl.u32 %v1276, 7
        %v1278 = vsub.s32 7, %v1277
        %v1279 = vrot.slane %v222, %v1278
        %v1280 = vlaneseq
        %v1281 = vshrl.u32 %v1280, 7
        %v1282 = vsub.s32 0, %v1281
        %v1283 = vrot.slane %v223, %v1282
        %v1284 = vlaneseq
        %v1285 = vshrl.u32 %v1284, 7
        %v1286 = vsub.s32 1, %v1285
        %v1287 = vrot.slane %v223, %v1286
        %v1288 = vlaneseq
        %v1289 = vshrl.u32 %v1288, 7
        %v1290 = vsub.s32 2, %v1289
        %v1291 = vrot.slane %v223, %v1290
        %v1292 = vlaneseq
        %v1293 = vshrl.u32 %v1292, 7
        %v1294 = vsub.s32 3, %v1293
        %v1295 = vrot.slane %v223, %v1294
        %v1296 = vlaneseq
        %v1297 = vshrl.u32 %v1296, 7
        %v1298 = vsub.s32 4, %v1297
        %v1299 = vrot.slane %v223, %v1298
        %v1300 = vlaneseq
        %v1301 = vshrl.u32 %v1300, 7
        %v1302 = vsub.s32 5, %v1301
        %v1303 = vrot.slane %v223, %v1302
        %v1304 = vlaneseq
        %v1305 = vshrl.u32 %v1304, 7
        %v1306 = vsub.s32 6, %v1305
        %v1307 = vrot.slane %v223, %v1306
        %v1308 = vlaneseq
        %v1309 = vshrl.u32 %v1308, 7
        %v1310 = vsub.s32 7, %v1309
        %v1311 = vrot.slane %v223, %v1310
        %v1328 = vsel %vm1230, %v1251, 0.0
        %v1329 = vsel %vm1231, %v1255, 0.0
        %v1330 = vsel %vm1232, %v1259, 0.0
        %v1331 = vsel %vm1233, %v1263, 0.0
        %v1332 = vsel %vm1234, %v1267, 0.0
        %v1333 = vsel %vm1235, %v1271, 0.0
        %v1334 = vsel %vm1236, %v1275, 0.0
        %v1335 = vsel %vm1237, %v1279, 0.0
        %v1336 = vsel %vm1238, %v1283, 0.0
        %v1337 = vsel %vm1239, %v1287, 0.0
        %v1338 = vsel %vm1240, %v1291, 0.0
        %v1339 = vsel %vm1241, %v1295, 0.0
        %v1340 = vsel %vm1242, %v1299, 0.0
        %v1341 = vsel %vm1243, %v1303, 0.0
        %v1342 = vsel %vm1244, %v1307, 0.0
        %v1343 = vsel %vm1245, %v1311, 0.0
        %v1344 = vadd.f32 %v1148, %v1328
        %v1345 = vadd.f32 %v1149, %v1329
        %v1346 = vadd.f32 %v1150, %v1330
        %v1347 = vadd.f32 %v1151, %v1331
        %v1348 = vadd.f32 %v1152, %v1332
        %v1349 = vadd.f32 %v1153, %v1333
        %v1350 = vadd.f32 %v1154, %v1334
        %v1351 = vadd.f32 %v1155, %v1335
        %v1352 = vadd.f32 %v1156, %v1336
        %v1353 = vadd.f32 %v1157, %v1337
        %v1354 = vadd.f32 %v1158, %v1338
        %v1355 = vadd.f32 %v1159, %v1339
        %v1356 = vadd.f32 %v1160, %v1340
        %v1357 = vadd.f32 %v1161, %v1341
        %v1358 = vadd.f32 %v1162, %v1342
        %v1359 = vadd.f32 %v1163, %v1343
        %v1376 = vcombine.low %v968, %v969
        %v1377 = vcombine.high %v968, %v969
        %v1378 = vcombine.low %v970, %v971
        %v1379 = vcombine.high %v970, %v971
        %v1380 = vcombine.low %v972, %v973
        %v1381 = vcombine.high %v972, %v973
        %v1382 = vcombine.low %v974, %v975
        %v1383 = vcombine.high %v974, %v975
        %v1385 = vunpack.c.l.s4 1966171168
        %v1386 = vunpack.c.0.s8 %v1385
        %v1387 = vlaneseq
        %v1388 = vshrl.u32 %v1387, 7
        %v1389 = vsub.s32 %v1386, %v1388
        %v1390 = vrot.slane %v1376, %v1389
        %v1392 = vunpack.c.l.s4 1966171168
        %v1393 = vunpack.c.0.s8 %v1392
        %v1394 = vlaneseq
        %v1395 = vshrl.u32 %v1394, 7
        %v1396 = vsub.s32 %v1393, %v1395
        %v1397 = vrot.slane %v1377, %v1396
        %v1399 = vunpack.c.l.s4 1966171168
        %v1400 = vunpack.c.0.s8 %v1399
        %v1401 = vlaneseq
        %v1402 = vshrl.u32 %v1401, 7
        %v1403 = vsub.s32 %v1400, %v1402
        %v1404 = vrot.slane %v1378, %v1403
        %v1406 = vunpack.c.l.s4 1966171168
        %v1407 = vunpack.c.0.s8 %v1406
        %v1408 = vlaneseq
        %v1409 = vshrl.u32 %v1408, 7
        %v1410 = vsub.s32 %v1407, %v1409
        %v1411 = vrot.slane %v1379, %v1410
        %v1413 = vunpack.c.l.s4 1966171168
        %v1414 = vunpack.c.0.s8 %v1413
        %v1415 = vlaneseq
        %v1416 = vshrl.u32 %v1415, 7
        %v1417 = vsub.s32 %v1414, %v1416
        %v1418 = vrot.slane %v1380, %v1417
        %v1420 = vunpack.c.l.s4 1966171168
        %v1421 = vunpack.c.0.s8 %v1420
        %v1422 = vlaneseq
        %v1423 = vshrl.u32 %v1422, 7
        %v1424 = vsub.s32 %v1421, %v1423
        %v1425 = vrot.slane %v1381, %v1424
        %v1427 = vunpack.c.l.s4 1966171168
        %v1428 = vunpack.c.0.s8 %v1427
        %v1429 = vlaneseq
        %v1430 = vshrl.u32 %v1429, 7
        %v1431 = vsub.s32 %v1428, %v1430
        %v1432 = vrot.slane %v1382, %v1431
        %v1434 = vunpack.c.l.s4 1966171168
        %v1435 = vunpack.c.0.s8 %v1434
        %v1436 = vlaneseq
        %v1437 = vshrl.u32 %v1436, 7
        %v1438 = vsub.s32 %v1435, %v1437
        %v1439 = vrot.slane %v1383, %v1438
        %v1440 = vcombine.low %v1390, %v1404
        %v1441 = vcombine.high %v1390, %v1404
        %v1442 = vcombine.low %v1397, %v1411
        %v1443 = vcombine.high %v1397, %v1411
        %v1444 = vcombine.low %v1418, %v1432
        %v1445 = vcombine.high %v1418, %v1432
        %v1446 = vcombine.low %v1425, %v1439
        %v1447 = vcombine.high %v1425, %v1439
        %v1449 = vunpack.c.l.s4 1966171168
        %v1450 = vunpack.c.0.s8 %v1449
        %v1451 = vlaneseq
        %v1452 = vshrl.u32 %v1451, 7
        %v1453 = vsub.s32 %v1450, %v1452
        %v1454 = vrot.slane %v1440, %v1453
        %v1456 = vunpack.c.l.s4 1966171168
        %v1457 = vunpack.c.0.s8 %v1456
        %v1458 = vlaneseq
        %v1459 = vshrl.u32 %v1458, 7
        %v1460 = vsub.s32 %v1457, %v1459
        %v1461 = vrot.slane %v1442, %v1460
        %v1463 = vunpack.c.l.s4 1966171168
        %v1464 = vunpack.c.0.s8 %v1463
        %v1465 = vlaneseq
        %v1466 = vshrl.u32 %v1465, 7
        %v1467 = vsub.s32 %v1464, %v1466
        %v1468 = vrot.slane %v1441, %v1467
        %v1470 = vunpack.c.l.s4 1966171168
        %v1471 = vunpack.c.0.s8 %v1470
        %v1472 = vlaneseq
        %v1473 = vshrl.u32 %v1472, 7
        %v1474 = vsub.s32 %v1471, %v1473
        %v1475 = vrot.slane %v1443, %v1474
        %v1477 = vunpack.c.l.s4 1966171168
        %v1478 = vunpack.c.0.s8 %v1477
        %v1479 = vlaneseq
        %v1480 = vshrl.u32 %v1479, 7
        %v1481 = vsub.s32 %v1478, %v1480
        %v1482 = vrot.slane %v1444, %v1481
        %v1484 = vunpack.c.l.s4 1966171168
        %v1485 = vunpack.c.0.s8 %v1484
        %v1486 = vlaneseq
        %v1487 = vshrl.u32 %v1486, 7
        %v1488 = vsub.s32 %v1485, %v1487
        %v1489 = vrot.slane %v1446, %v1488
        %v1491 = vunpack.c.l.s4 1966171168
        %v1492 = vunpack.c.0.s8 %v1491
        %v1493 = vlaneseq
        %v1494 = vshrl.u32 %v1493, 7
        %v1495 = vsub.s32 %v1492, %v1494
        %v1496 = vrot.slane %v1445, %v1495
        %v1498 = vunpack.c.l.s4 1966171168
        %v1499 = vunpack.c.0.s8 %v1498
        %v1500 = vlaneseq
        %v1501 = vshrl.u32 %v1500, 7
        %v1502 = vsub.s32 %v1499, %v1501
        %v1503 = vrot.slane %v1447, %v1502
        %v1504 = vcombine.low %v1454, %v1482
        %v1505 = vcombine.high %v1454, %v1482
        %v1506 = vcombine.low %v1461, %v1489
        %v1507 = vcombine.high %v1461, %v1489
        %v1508 = vcombine.low %v1468, %v1496
        %v1509 = vcombine.high %v1468, %v1496
        %v1510 = vcombine.low %v1475, %v1503
        %v1511 = vcombine.high %v1475, %v1503
        %v1512 = vcombine.low %v976, %v977
        %v1513 = vcombine.high %v976, %v977
        %v1514 = vcombine.low %v978, %v979
        %v1515 = vcombine.high %v978, %v979
        %v1516 = vcombine.low %v980, %v981
        %v1517 = vcombine.high %v980, %v981
        %v1518 = vcombine.low %v982, %v983
        %v1519 = vcombine.high %v982, %v983
        %v1521 = vunpack.c.l.s4 1966171168
        %v1522 = vunpack.c.0.s8 %v1521
        %v1523 = vlaneseq
        %v1524 = vshrl.u32 %v1523, 7
        %v1525 = vsub.s32 %v1522, %v1524
        %v1526 = vrot.slane %v1512, %v1525
        %v1528 = vunpack.c.l.s4 1966171168
        %v1529 = vunpack.c.0.s8 %v1528
        %v1530 = vlaneseq
        %v1531 = vshrl.u32 %v1530, 7
        %v1532 = vsub.s32 %v1529, %v1531
        %v1533 = vrot.slane %v1513, %v1532
        %v1535 = vunpack.c.l.s4 1966171168
        %v1536 = vunpack.c.0.s8 %v1535
        %v1537 = vlaneseq
        %v1538 = vshrl.u32 %v1537, 7
        %v1539 = vsub.s32 %v1536, %v1538
        %v1540 = vrot.slane %v1514, %v1539
        %v1542 = vunpack.c.l.s4 1966171168
        %v1543 = vunpack.c.0.s8 %v1542
        %v1544 = vlaneseq
        %v1545 = vshrl.u32 %v1544, 7
        %v1546 = vsub.s32 %v1543, %v1545
        %v1547 = vrot.slane %v1515, %v1546
        %v1549 = vunpack.c.l.s4 1966171168
        %v1550 = vunpack.c.0.s8 %v1549
        %v1551 = vlaneseq
        %v1552 = vshrl.u32 %v1551, 7
        %v1553 = vsub.s32 %v1550, %v1552
        %v1554 = vrot.slane %v1516, %v1553
        %v1556 = vunpack.c.l.s4 1966171168
        %v1557 = vunpack.c.0.s8 %v1556
        %v1558 = vlaneseq
        %v1559 = vshrl.u32 %v1558, 7
        %v1560 = vsub.s32 %v1557, %v1559
        %v1561 = vrot.slane %v1517, %v1560
        %v1563 = vunpack.c.l.s4 1966171168
        %v1564 = vunpack.c.0.s8 %v1563
        %v1565 = vlaneseq
        %v1566 = vshrl.u32 %v1565, 7
        %v1567 = vsub.s32 %v1564, %v1566
        %v1568 = vrot.slane %v1518, %v1567
        %v1570 = vunpack.c.l.s4 1966171168
        %v1571 = vunpack.c.0.s8 %v1570
        %v1572 = vlaneseq
        %v1573 = vshrl.u32 %v1572, 7
        %v1574 = vsub.s32 %v1571, %v1573
        %v1575 = vrot.slane %v1519, %v1574
        %v1576 = vcombine.low %v1526, %v1540
        %v1577 = vcombine.high %v1526, %v1540
        %v1578 = vcombine.low %v1533, %v1547
        %v1579 = vcombine.high %v1533, %v1547
        %v1580 = vcombine.low %v1554, %v1568
        %v1581 = vcombine.high %v1554, %v1568
        %v1582 = vcombine.low %v1561, %v1575
        %v1583 = vcombine.high %v1561, %v1575
        %v1585 = vunpack.c.l.s4 1966171168
        %v1586 = vunpack.c.0.s8 %v1585
        %v1587 = vlaneseq
        %v1588 = vshrl.u32 %v1587, 7
        %v1589 = vsub.s32 %v1586, %v1588
        %v1590 = vrot.slane %v1576, %v1589
        %v1592 = vunpack.c.l.s4 1966171168
        %v1593 = vunpack.c.0.s8 %v1592
        %v1594 = vlaneseq
        %v1595 = vshrl.u32 %v1594, 7
        %v1596 = vsub.s32 %v1593, %v1595
        %v1597 = vrot.slane %v1578, %v1596
        %v1599 = vunpack.c.l.s4 1966171168
        %v1600 = vunpack.c.0.s8 %v1599
        %v1601 = vlaneseq
        %v1602 = vshrl.u32 %v1601, 7
        %v1603 = vsub.s32 %v1600, %v1602
        %v1604 = vrot.slane %v1577, %v1603
        %v1606 = vunpack.c.l.s4 1966171168
        %v1607 = vunpack.c.0.s8 %v1606
        %v1608 = vlaneseq
        %v1609 = vshrl.u32 %v1608, 7
        %v1610 = vsub.s32 %v1607, %v1609
        %v1611 = vrot.slane %v1579, %v1610
        %v1613 = vunpack.c.l.s4 1966171168
        %v1614 = vunpack.c.0.s8 %v1613
        %v1615 = vlaneseq
        %v1616 = vshrl.u32 %v1615, 7
        %v1617 = vsub.s32 %v1614, %v1616
        %v1618 = vrot.slane %v1580, %v1617
        %v1620 = vunpack.c.l.s4 1966171168
        %v1621 = vunpack.c.0.s8 %v1620
        %v1622 = vlaneseq
        %v1623 = vshrl.u32 %v1622, 7
        %v1624 = vsub.s32 %v1621, %v1623
        %v1625 = vrot.slane %v1582, %v1624
        %v1627 = vunpack.c.l.s4 1966171168
        %v1628 = vunpack.c.0.s8 %v1627
        %v1629 = vlaneseq
        %v1630 = vshrl.u32 %v1629, 7
        %v1631 = vsub.s32 %v1628, %v1630
        %v1632 = vrot.slane %v1581, %v1631
        %v1634 = vunpack.c.l.s4 1966171168
        %v1635 = vunpack.c.0.s8 %v1634
        %v1636 = vlaneseq
        %v1637 = vshrl.u32 %v1636, 7
        %v1638 = vsub.s32 %v1635, %v1637
        %v1639 = vrot.slane %v1583, %v1638
        %v1640 = vcombine.low %v1590, %v1618
        %v1641 = vcombine.high %v1590, %v1618
        %v1642 = vcombine.low %v1597, %v1625
        %v1643 = vcombine.high %v1597, %v1625
        %v1644 = vcombine.low %v1604, %v1632
        %v1645 = vcombine.high %v1604, %v1632
        %v1646 = vcombine.low %v1611, %v1639
        %v1647 = vcombine.high %v1611, %v1639
        %v1648 = vlaneseq
        %v1649 = vshrl.u32 %v1648, 7
        %v1650 = vsub.s32 0, %v1649
        %v1651 = vrot.slane %v1504, %v1650
        %v1652 = vlaneseq
        %v1653 = vshrl.u32 %v1652, 7
        %v1654 = vsub.s32 1, %v1653
        %v1655 = vrot.slane %v1504, %v1654
        %v1656 = vlaneseq
        %v1657 = vshrl.u32 %v1656, 7
        %v1658 = vsub.s32 2, %v1657
        %v1659 = vrot.slane %v1504, %v1658
        %v1660 = vlaneseq
        %v1661 = vshrl.u32 %v1660, 7
        %v1662 = vsub.s32 3, %v1661
        %v1663 = vrot.slane %v1504, %v1662
        %v1664 = vlaneseq
        %v1665 = vshrl.u32 %v1664, 7
        %v1666 = vsub.s32 4, %v1665
        %v1667 = vrot.slane %v1504, %v1666
        %v1668 = vlaneseq
        %v1669 = vshrl.u32 %v1668, 7
        %v1670 = vsub.s32 5, %v1669
        %v1671 = vrot.slane %v1504, %v1670
        %v1672 = vlaneseq
        %v1673 = vshrl.u32 %v1672, 7
        %v1674 = vsub.s32 6, %v1673
        %v1675 = vrot.slane %v1504, %v1674
        %v1676 = vlaneseq
        %v1677 = vshrl.u32 %v1676, 7
        %v1678 = vsub.s32 7, %v1677
        %v1679 = vrot.slane %v1504, %v1678
        %v1680 = vlaneseq
        %v1681 = vshrl.u32 %v1680, 7
        %v1682 = vsub.s32 0, %v1681
        %v1683 = vrot.slane %v1640, %v1682
        %v1684 = vlaneseq
        %v1685 = vshrl.u32 %v1684, 7
        %v1686 = vsub.s32 1, %v1685
        %v1687 = vrot.slane %v1640, %v1686
        %v1688 = vlaneseq
        %v1689 = vshrl.u32 %v1688, 7
        %v1690 = vsub.s32 2, %v1689
        %v1691 = vrot.slane %v1640, %v1690
        %v1692 = vlaneseq
        %v1693 = vshrl.u32 %v1692, 7
        %v1694 = vsub.s32 3, %v1693
        %v1695 = vrot.slane %v1640, %v1694
        %v1696 = vlaneseq
        %v1697 = vshrl.u32 %v1696, 7
        %v1698 = vsub.s32 4, %v1697
        %v1699 = vrot.slane %v1640, %v1698
        %v1700 = vlaneseq
        %v1701 = vshrl.u32 %v1700, 7
        %v1702 = vsub.s32 5, %v1701
        %v1703 = vrot.slane %v1640, %v1702
        %v1704 = vlaneseq
        %v1705 = vshrl.u32 %v1704, 7
        %v1706 = vsub.s32 6, %v1705
        %v1707 = vrot.slane %v1640, %v1706
        %v1708 = vlaneseq
        %v1709 = vshrl.u32 %v1708, 7
        %v1710 = vsub.s32 7, %v1709
        %v1711 = vrot.slane %v1640, %v1710
        %v1712 = vlaneseq
        %v1713 = vshrl.u32 %v1712, 7
        %v1714 = vsub.s32 0, %v1713
        %v1715 = vrot.slane %v1508, %v1714
        %v1716 = vlaneseq
        %v1717 = vshrl.u32 %v1716, 7
        %v1718 = vsub.s32 1, %v1717
        %v1719 = vrot.slane %v1508, %v1718
        %v1720 = vlaneseq
        %v1721 = vshrl.u32 %v1720, 7
        %v1722 = vsub.s32 2, %v1721
        %v1723 = vrot.slane %v1508, %v1722
        %v1724 = vlaneseq
        %v1725 = vshrl.u32 %v1724, 7
        %v1726 = vsub.s32 3, %v1725
        %v1727 = vrot.slane %v1508, %v1726
        %v1728 = vlaneseq
        %v1729 = vshrl.u32 %v1728, 7
        %v1730 = vsub.s32 4, %v1729
        %v1731 = vrot.slane %v1508, %v1730
        %v1732 = vlaneseq
        %v1733 = vshrl.u32 %v1732, 7
        %v1734 = vsub.s32 5, %v1733
        %v1735 = vrot.slane %v1508, %v1734
        %v1736 = vlaneseq
        %v1737 = vshrl.u32 %v1736, 7
        %v1738 = vsub.s32 6, %v1737
        %v1739 = vrot.slane %v1508, %v1738
        %v1740 = vlaneseq
        %v1741 = vshrl.u32 %v1740, 7
        %v1742 = vsub.s32 7, %v1741
        %v1743 = vrot.slane %v1508, %v1742
        %v1744 = vlaneseq
        %v1745 = vshrl.u32 %v1744, 7
        %v1746 = vsub.s32 0, %v1745
        %v1747 = vrot.slane %v1644, %v1746
        %v1748 = vlaneseq
        %v1749 = vshrl.u32 %v1748, 7
        %v1750 = vsub.s32 1, %v1749
        %v1751 = vrot.slane %v1644, %v1750
        %v1752 = vlaneseq
        %v1753 = vshrl.u32 %v1752, 7
        %v1754 = vsub.s32 2, %v1753
        %v1755 = vrot.slane %v1644, %v1754
        %v1756 = vlaneseq
        %v1757 = vshrl.u32 %v1756, 7
        %v1758 = vsub.s32 3, %v1757
        %v1759 = vrot.slane %v1644, %v1758
        %v1760 = vlaneseq
        %v1761 = vshrl.u32 %v1760, 7
        %v1762 = vsub.s32 4, %v1761
        %v1763 = vrot.slane %v1644, %v1762
        %v1764 = vlaneseq
        %v1765 = vshrl.u32 %v1764, 7
        %v1766 = vsub.s32 5, %v1765
        %v1767 = vrot.slane %v1644, %v1766
        %v1768 = vlaneseq
        %v1769 = vshrl.u32 %v1768, 7
        %v1770 = vsub.s32 6, %v1769
        %v1771 = vrot.slane %v1644, %v1770
        %v1772 = vlaneseq
        %v1773 = vshrl.u32 %v1772, 7
        %v1774 = vsub.s32 7, %v1773
        %v1775 = vrot.slane %v1644, %v1774
        %v1776 = vlaneseq
        %v1777 = vshrl.u32 %v1776, 7
        %v1778 = vsub.s32 0, %v1777
        %v1779 = vrot.slane %v1505, %v1778
        %v1780 = vlaneseq
        %v1781 = vshrl.u32 %v1780, 7
        %v1782 = vsub.s32 1, %v1781
        %v1783 = vrot.slane %v1505, %v1782
        %v1784 = vlaneseq
        %v1785 = vshrl.u32 %v1784, 7
        %v1786 = vsub.s32 2, %v1785
        %v1787 = vrot.slane %v1505, %v1786
        %v1788 = vlaneseq
        %v1789 = vshrl.u32 %v1788, 7
        %v1790 = vsub.s32 3, %v1789
        %v1791 = vrot.slane %v1505, %v1790
        %v1792 = vlaneseq
        %v1793 = vshrl.u32 %v1792, 7
        %v1794 = vsub.s32 4, %v1793
        %v1795 = vrot.slane %v1505, %v1794
        %v1796 = vlaneseq
        %v1797 = vshrl.u32 %v1796, 7
        %v1798 = vsub.s32 5, %v1797
        %v1799 = vrot.slane %v1505, %v1798
        %v1800 = vlaneseq
        %v1801 = vshrl.u32 %v1800, 7
        %v1802 = vsub.s32 6, %v1801
        %v1803 = vrot.slane %v1505, %v1802
        %v1804 = vlaneseq
        %v1805 = vshrl.u32 %v1804, 7
        %v1806 = vsub.s32 7, %v1805
        %v1807 = vrot.slane %v1505, %v1806
        %v1808 = vlaneseq
        %v1809 = vshrl.u32 %v1808, 7
        %v1810 = vsub.s32 0, %v1809
        %v1811 = vrot.slane %v1641, %v1810
        %v1812 = vlaneseq
        %v1813 = vshrl.u32 %v1812, 7
        %v1814 = vsub.s32 1, %v1813
        %v1815 = vrot.slane %v1641, %v1814
        %v1816 = vlaneseq
        %v1817 = vshrl.u32 %v1816, 7
        %v1818 = vsub.s32 2, %v1817
        %v1819 = vrot.slane %v1641, %v1818
        %v1820 = vlaneseq
        %v1821 = vshrl.u32 %v1820, 7
        %v1822 = vsub.s32 3, %v1821
        %v1823 = vrot.slane %v1641, %v1822
        %v1824 = vlaneseq
        %v1825 = vshrl.u32 %v1824, 7
        %v1826 = vsub.s32 4, %v1825
        %v1827 = vrot.slane %v1641, %v1826
        %v1828 = vlaneseq
        %v1829 = vshrl.u32 %v1828, 7
        %v1830 = vsub.s32 5, %v1829
        %v1831 = vrot.slane %v1641, %v1830
        %v1832 = vlaneseq
        %v1833 = vshrl.u32 %v1832, 7
        %v1834 = vsub.s32 6, %v1833
        %v1835 = vrot.slane %v1641, %v1834
        %v1836 = vlaneseq
        %v1837 = vshrl.u32 %v1836, 7
        %v1838 = vsub.s32 7, %v1837
        %v1839 = vrot.slane %v1641, %v1838
        %v1840 = vlaneseq
        %v1841 = vshrl.u32 %v1840, 7
        %v1842 = vsub.s32 0, %v1841
        %v1843 = vrot.slane %v1509, %v1842
        %v1844 = vlaneseq
        %v1845 = vshrl.u32 %v1844, 7
        %v1846 = vsub.s32 1, %v1845
        %v1847 = vrot.slane %v1509, %v1846
        %v1848 = vlaneseq
        %v1849 = vshrl.u32 %v1848, 7
        %v1850 = vsub.s32 2, %v1849
        %v1851 = vrot.slane %v1509, %v1850
        %v1852 = vlaneseq
        %v1853 = vshrl.u32 %v1852, 7
        %v1854 = vsub.s32 3, %v1853
        %v1855 = vrot.slane %v1509, %v1854
        %v1856 = vlaneseq
        %v1857 = vshrl.u32 %v1856, 7
        %v1858 = vsub.s32 4, %v1857
        %v1859 = vrot.slane %v1509, %v1858
        %v1860 = vlaneseq
        %v1861 = vshrl.u32 %v1860, 7
        %v1862 = vsub.s32 5, %v1861
        %v1863 = vrot.slane %v1509, %v1862
        %v1864 = vlaneseq
        %v1865 = vshrl.u32 %v1864, 7
        %v1866 = vsub.s32 6, %v1865
        %v1867 = vrot.slane %v1509, %v1866
        %v1868 = vlaneseq
        %v1869 = vshrl.u32 %v1868, 7
        %v1870 = vsub.s32 7, %v1869
        %v1871 = vrot.slane %v1509, %v1870
        %v1872 = vlaneseq
        %v1873 = vshrl.u32 %v1872, 7
        %v1874 = vsub.s32 0, %v1873
        %v1875 = vrot.slane %v1645, %v1874
        %v1876 = vlaneseq
        %v1877 = vshrl.u32 %v1876, 7
        %v1878 = vsub.s32 1, %v1877
        %v1879 = vrot.slane %v1645, %v1878
        %v1880 = vlaneseq
        %v1881 = vshrl.u32 %v1880, 7
        %v1882 = vsub.s32 2, %v1881
        %v1883 = vrot.slane %v1645, %v1882
        %v1884 = vlaneseq
        %v1885 = vshrl.u32 %v1884, 7
        %v1886 = vsub.s32 3, %v1885
        %v1887 = vrot.slane %v1645, %v1886
        %v1888 = vlaneseq
        %v1889 = vshrl.u32 %v1888, 7
        %v1890 = vsub.s32 4, %v1889
        %v1891 = vrot.slane %v1645, %v1890
        %v1892 = vlaneseq
        %v1893 = vshrl.u32 %v1892, 7
        %v1894 = vsub.s32 5, %v1893
        %v1895 = vrot.slane %v1645, %v1894
        %v1896 = vlaneseq
        %v1897 = vshrl.u32 %v1896, 7
        %v1898 = vsub.s32 6, %v1897
        %v1899 = vrot.slane %v1645, %v1898
        %v1900 = vlaneseq
        %v1901 = vshrl.u32 %v1900, 7
        %v1902 = vsub.s32 7, %v1901
        %v1903 = vrot.slane %v1645, %v1902
        %v1904 = vlaneseq
        %v1905 = vshrl.u32 %v1904, 7
        %v1906 = vsub.s32 0, %v1905
        %v1907 = vrot.slane %v1506, %v1906
        %v1908 = vlaneseq
        %v1909 = vshrl.u32 %v1908, 7
        %v1910 = vsub.s32 1, %v1909
        %v1911 = vrot.slane %v1506, %v1910
        %v1912 = vlaneseq
        %v1913 = vshrl.u32 %v1912, 7
        %v1914 = vsub.s32 2, %v1913
        %v1915 = vrot.slane %v1506, %v1914
        %v1916 = vlaneseq
        %v1917 = vshrl.u32 %v1916, 7
        %v1918 = vsub.s32 3, %v1917
        %v1919 = vrot.slane %v1506, %v1918
        %v1920 = vlaneseq
        %v1921 = vshrl.u32 %v1920, 7
        %v1922 = vsub.s32 4, %v1921
        %v1923 = vrot.slane %v1506, %v1922
        %v1924 = vlaneseq
        %v1925 = vshrl.u32 %v1924, 7
        %v1926 = vsub.s32 5, %v1925
        %v1927 = vrot.slane %v1506, %v1926
        %v1928 = vlaneseq
        %v1929 = vshrl.u32 %v1928, 7
        %v1930 = vsub.s32 6, %v1929
        %v1931 = vrot.slane %v1506, %v1930
        %v1932 = vlaneseq
        %v1933 = vshrl.u32 %v1932, 7
        %v1934 = vsub.s32 7, %v1933
        %v1935 = vrot.slane %v1506, %v1934
        %v1936 = vlaneseq
        %v1937 = vshrl.u32 %v1936, 7
        %v1938 = vsub.s32 0, %v1937
        %v1939 = vrot.slane %v1642, %v1938
        %v1940 = vlaneseq
        %v1941 = vshrl.u32 %v1940, 7
        %v1942 = vsub.s32 1, %v1941
        %v1943 = vrot.slane %v1642, %v1942
        %v1944 = vlaneseq
        %v1945 = vshrl.u32 %v1944, 7
        %v1946 = vsub.s32 2, %v1945
        %v1947 = vrot.slane %v1642, %v1946
        %v1948 = vlaneseq
        %v1949 = vshrl.u32 %v1948, 7
        %v1950 = vsub.s32 3, %v1949
        %v1951 = vrot.slane %v1642, %v1950
        %v1952 = vlaneseq
        %v1953 = vshrl.u32 %v1952, 7
        %v1954 = vsub.s32 4, %v1953
        %v1955 = vrot.slane %v1642, %v1954
        %v1956 = vlaneseq
        %v1957 = vshrl.u32 %v1956, 7
        %v1958 = vsub.s32 5, %v1957
        %v1959 = vrot.slane %v1642, %v1958
        %v1960 = vlaneseq
        %v1961 = vshrl.u32 %v1960, 7
        %v1962 = vsub.s32 6, %v1961
        %v1963 = vrot.slane %v1642, %v1962
        %v1964 = vlaneseq
        %v1965 = vshrl.u32 %v1964, 7
        %v1966 = vsub.s32 7, %v1965
        %v1967 = vrot.slane %v1642, %v1966
        %v1968 = vlaneseq
        %v1969 = vshrl.u32 %v1968, 7
        %v1970 = vsub.s32 0, %v1969
        %v1971 = vrot.slane %v1510, %v1970
        %v1972 = vlaneseq
        %v1973 = vshrl.u32 %v1972, 7
        %v1974 = vsub.s32 1, %v1973
        %v1975 = vrot.slane %v1510, %v1974
        %v1976 = vlaneseq
        %v1977 = vshrl.u32 %v1976, 7
        %v1978 = vsub.s32 2, %v1977
        %v1979 = vrot.slane %v1510, %v1978
        %v1980 = vlaneseq
        %v1981 = vshrl.u32 %v1980, 7
        %v1982 = vsub.s32 3, %v1981
        %v1983 = vrot.slane %v1510, %v1982
        %v1984 = vlaneseq
        %v1985 = vshrl.u32 %v1984, 7
        %v1986 = vsub.s32 4, %v1985
        %v1987 = vrot.slane %v1510, %v1986
        %v1988 = vlaneseq
        %v1989 = vshrl.u32 %v1988, 7
        %v1990 = vsub.s32 5, %v1989
        %v1991 = vrot.slane %v1510, %v1990
        %v1992 = vlaneseq
        %v1993 = vshrl.u32 %v1992, 7
        %v1994 = vsub.s32 6, %v1993
        %v1995 = vrot.slane %v1510, %v1994
        %v1996 = vlaneseq
        %v1997 = vshrl.u32 %v1996, 7
        %v1998 = vsub.s32 7, %v1997
        %v1999 = vrot.slane %v1510, %v1998
        %v2000 = vlaneseq
        %v2001 = vshrl.u32 %v2000, 7
        %v2002 = vsub.s32 0, %v2001
        %v2003 = vrot.slane %v1646, %v2002
        %v2004 = vlaneseq
        %v2005 = vshrl.u32 %v2004, 7
        %v2006 = vsub.s32 1, %v2005
        %v2007 = vrot.slane %v1646, %v2006
        %v2008 = vlaneseq
        %v2009 = vshrl.u32 %v2008, 7
        %v2010 = vsub.s32 2, %v2009
        %v2011 = vrot.slane %v1646, %v2010
        %v2012 = vlaneseq
        %v2013 = vshrl.u32 %v2012, 7
        %v2014 = vsub.s32 3, %v2013
        %v2015 = vrot.slane %v1646, %v2014
        %v2016 = vlaneseq
        %v2017 = vshrl.u32 %v2016, 7
        %v2018 = vsub.s32 4, %v2017
        %v2019 = vrot.slane %v1646, %v2018
        %v2020 = vlaneseq
        %v2021 = vshrl.u32 %v2020, 7
        %v2022 = vsub.s32 5, %v2021
        %v2023 = vrot.slane %v1646, %v2022
        %v2024 = vlaneseq
        %v2025 = vshrl.u32 %v2024, 7
        %v2026 = vsub.s32 6, %v2025
        %v2027 = vrot.slane %v1646, %v2026
        %v2028 = vlaneseq
        %v2029 = vshrl.u32 %v2028, 7
        %v2030 = vsub.s32 7, %v2029
        %v2031 = vrot.slane %v1646, %v2030
        %v2032 = vlaneseq
        %v2033 = vshrl.u32 %v2032, 7
        %v2034 = vsub.s32 0, %v2033
        %v2035 = vrot.slane %v1507, %v2034
        %v2036 = vlaneseq
        %v2037 = vshrl.u32 %v2036, 7
        %v2038 = vsub.s32 1, %v2037
        %v2039 = vrot.slane %v1507, %v2038
        %v2040 = vlaneseq
        %v2041 = vshrl.u32 %v2040, 7
        %v2042 = vsub.s32 2, %v2041
        %v2043 = vrot.slane %v1507, %v2042
        %v2044 = vlaneseq
        %v2045 = vshrl.u32 %v2044, 7
        %v2046 = vsub.s32 3, %v2045
        %v2047 = vrot.slane %v1507, %v2046
        %v2048 = vlaneseq
        %v2049 = vshrl.u32 %v2048, 7
        %v2050 = vsub.s32 4, %v2049
        %v2051 = vrot.slane %v1507, %v2050
        %v2052 = vlaneseq
        %v2053 = vshrl.u32 %v2052, 7
        %v2054 = vsub.s32 5, %v2053
        %v2055 = vrot.slane %v1507, %v2054
        %v2056 = vlaneseq
        %v2057 = vshrl.u32 %v2056, 7
        %v2058 = vsub.s32 6, %v2057
        %v2059 = vrot.slane %v1507, %v2058
        %v2060 = vlaneseq
        %v2061 = vshrl.u32 %v2060, 7
        %v2062 = vsub.s32 7, %v2061
        %v2063 = vrot.slane %v1507, %v2062
        %v2064 = vlaneseq
        %v2065 = vshrl.u32 %v2064, 7
        %v2066 = vsub.s32 0, %v2065
        %v2067 = vrot.slane %v1643, %v2066
        %v2068 = vlaneseq
        %v2069 = vshrl.u32 %v2068, 7
        %v2070 = vsub.s32 1, %v2069
        %v2071 = vrot.slane %v1643, %v2070
        %v2072 = vlaneseq
        %v2073 = vshrl.u32 %v2072, 7
        %v2074 = vsub.s32 2, %v2073
        %v2075 = vrot.slane %v1643, %v2074
        %v2076 = vlaneseq
        %v2077 = vshrl.u32 %v2076, 7
        %v2078 = vsub.s32 3, %v2077
        %v2079 = vrot.slane %v1643, %v2078
        %v2080 = vlaneseq
        %v2081 = vshrl.u32 %v2080, 7
        %v2082 = vsub.s32 4, %v2081
        %v2083 = vrot.slane %v1643, %v2082
        %v2084 = vlaneseq
        %v2085 = vshrl.u32 %v2084, 7
        %v2086 = vsub.s32 5, %v2085
        %v2087 = vrot.slane %v1643, %v2086
        %v2088 = vlaneseq
        %v2089 = vshrl.u32 %v2088, 7
        %v2090 = vsub.s32 6, %v2089
        %v2091 = vrot.slane %v1643, %v2090
        %v2092 = vlaneseq
        %v2093 = vshrl.u32 %v2092, 7
        %v2094 = vsub.s32 7, %v2093
        %v2095 = vrot.slane %v1643, %v2094
        %v2096 = vlaneseq
        %v2097 = vshrl.u32 %v2096, 7
        %v2098 = vsub.s32 0, %v2097
        %v2099 = vrot.slane %v1511, %v2098
        %v2100 = vlaneseq
        %v2101 = vshrl.u32 %v2100, 7
        %v2102 = vsub.s32 1, %v2101
        %v2103 = vrot.slane %v1511, %v2102
        %v2104 = vlaneseq
        %v2105 = vshrl.u32 %v2104, 7
        %v2106 = vsub.s32 2, %v2105
        %v2107 = vrot.slane %v1511, %v2106
        %v2108 = vlaneseq
        %v2109 = vshrl.u32 %v2108, 7
        %v2110 = vsub.s32 3, %v2109
        %v2111 = vrot.slane %v1511, %v2110
        %v2112 = vlaneseq
        %v2113 = vshrl.u32 %v2112, 7
        %v2114 = vsub.s32 4, %v2113
        %v2115 = vrot.slane %v1511, %v2114
        %v2116 = vlaneseq
        %v2117 = vshrl.u32 %v2116, 7
        %v2118 = vsub.s32 5, %v2117
        %v2119 = vrot.slane %v1511, %v2118
        %v2120 = vlaneseq
        %v2121 = vshrl.u32 %v2120, 7
        %v2122 = vsub.s32 6, %v2121
        %v2123 = vrot.slane %v1511, %v2122
        %v2124 = vlaneseq
        %v2125 = vshrl.u32 %v2124, 7
        %v2126 = vsub.s32 7, %v2125
        %v2127 = vrot.slane %v1511, %v2126
        %v2128 = vlaneseq
        %v2129 = vshrl.u32 %v2128, 7
        %v2130 = vsub.s32 0, %v2129
        %v2131 = vrot.slane %v1647, %v2130
        %v2132 = vlaneseq
        %v2133 = vshrl.u32 %v2132, 7
        %v2134 = vsub.s32 1, %v2133
        %v2135 = vrot.slane %v1647, %v2134
        %v2136 = vlaneseq
        %v2137 = vshrl.u32 %v2136, 7
        %v2138 = vsub.s32 2, %v2137
        %v2139 = vrot.slane %v1647, %v2138
        %v2140 = vlaneseq
        %v2141 = vshrl.u32 %v2140, 7
        %v2142 = vsub.s32 3, %v2141
        %v2143 = vrot.slane %v1647, %v2142
        %v2144 = vlaneseq
        %v2145 = vshrl.u32 %v2144, 7
        %v2146 = vsub.s32 4, %v2145
        %v2147 = vrot.slane %v1647, %v2146
        %v2148 = vlaneseq
        %v2149 = vshrl.u32 %v2148, 7
        %v2150 = vsub.s32 5, %v2149
        %v2151 = vrot.slane %v1647, %v2150
        %v2152 = vlaneseq
        %v2153 = vshrl.u32 %v2152, 7
        %v2154 = vsub.s32 6, %v2153
        %v2155 = vrot.slane %v1647, %v2154
        %v2156 = vlaneseq
        %v2157 = vshrl.u32 %v2156, 7
        %v2158 = vsub.s32 7, %v2157
        %v2159 = vrot.slane %v1647, %v2158
        %v2288 = vmul.f32 %v1651, %v592
        %v2289 = vmul.f32 %v1655, %v593
        %v2290 = vmul.f32 %v1659, %v594
        %v2291 = vmul.f32 %v1663, %v595
        %v2292 = vmul.f32 %v1667, %v596
        %v2293 = vmul.f32 %v1671, %v597
        %v2294 = vmul.f32 %v1675, %v598
        %v2295 = vmul.f32 %v1679, %v599
        %v2296 = vmul.f32 %v1683, %v600
        %v2297 = vmul.f32 %v1687, %v601
        %v2298 = vmul.f32 %v1691, %v602
        %v2299 = vmul.f32 %v1695, %v603
        %v2300 = vmul.f32 %v1699, %v604
        %v2301 = vmul.f32 %v1703, %v605
        %v2302 = vmul.f32 %v1707, %v606
        %v2303 = vmul.f32 %v1711, %v607
        %v2304 = vmul.f32 %v1715, %v592
        %v2305 = vmul.f32 %v1719, %v593
        %v2306 = vmul.f32 %v1723, %v594
        %v2307 = vmul.f32 %v1727, %v595
        %v2308 = vmul.f32 %v1731, %v596
        %v2309 = vmul.f32 %v1735, %v597
        %v2310 = vmul.f32 %v1739, %v598
        %v2311 = vmul.f32 %v1743, %v599
        %v2312 = vmul.f32 %v1747, %v600
        %v2313 = vmul.f32 %v1751, %v601
        %v2314 = vmul.f32 %v1755, %v602
        %v2315 = vmul.f32 %v1759, %v603
        %v2316 = vmul.f32 %v1763, %v604
        %v2317 = vmul.f32 %v1767, %v605
        %v2318 = vmul.f32 %v1771, %v606
        %v2319 = vmul.f32 %v1775, %v607
        %v2320 = vmul.f32 %v1779, %v592
        %v2321 = vmul.f32 %v1783, %v593
        %v2322 = vmul.f32 %v1787, %v594
        %v2323 = vmul.f32 %v1791, %v595
        %v2324 = vmul.f32 %v1795, %v596
        %v2325 = vmul.f32 %v1799, %v597
        %v2326 = vmul.f32 %v1803, %v598
        %v2327 = vmul.f32 %v1807, %v599
        %v2328 = vmul.f32 %v1811, %v600
        %v2329 = vmul.f32 %v1815, %v601
        %v2330 = vmul.f32 %v1819, %v602
        %v2331 = vmul.f32 %v1823, %v603
        %v2332 = vmul.f32 %v1827, %v604
        %v2333 = vmul.f32 %v1831, %v605
        %v2334 = vmul.f32 %v1835, %v606
        %v2335 = vmul.f32 %v1839, %v607
        %v2336 = vmul.f32 %v1843, %v592
        %v2337 = vmul.f32 %v1847, %v593
        %v2338 = vmul.f32 %v1851, %v594
        %v2339 = vmul.f32 %v1855, %v595
        %v2340 = vmul.f32 %v1859, %v596
        %v2341 = vmul.f32 %v1863, %v597
        %v2342 = vmul.f32 %v1867, %v598
        %v2343 = vmul.f32 %v1871, %v599
        %v2344 = vmul.f32 %v1875, %v600
        %v2345 = vmul.f32 %v1879, %v601
        %v2346 = vmul.f32 %v1883, %v602
        %v2347 = vmul.f32 %v1887, %v603
        %v2348 = vmul.f32 %v1891, %v604
        %v2349 = vmul.f32 %v1895, %v605
        %v2350 = vmul.f32 %v1899, %v606
        %v2351 = vmul.f32 %v1903, %v607
        %v2352 = vmul.f32 %v1907, %v592
        %v2353 = vmul.f32 %v1911, %v593
        %v2354 = vmul.f32 %v1915, %v594
        %v2355 = vmul.f32 %v1919, %v595
        %v2356 = vmul.f32 %v1923, %v596
        %v2357 = vmul.f32 %v1927, %v597
        %v2358 = vmul.f32 %v1931, %v598
        %v2359 = vmul.f32 %v1935, %v599
        %v2360 = vmul.f32 %v1939, %v600
        %v2361 = vmul.f32 %v1943, %v601
        %v2362 = vmul.f32 %v1947, %v602
        %v2363 = vmul.f32 %v1951, %v603
        %v2364 = vmul.f32 %v1955, %v604
        %v2365 = vmul.f32 %v1959, %v605
        %v2366 = vmul.f32 %v1963, %v606
        %v2367 = vmul.f32 %v1967, %v607
        %v2368 = vmul.f32 %v1971, %v592
        %v2369 = vmul.f32 %v1975, %v593
        %v2370 = vmul.f32 %v1979, %v594
        %v2371 = vmul.f32 %v1983, %v595
        %v2372 = vmul.f32 %v1987, %v596
        %v2373 = vmul.f32 %v1991, %v597
        %v2374 = vmul.f32 %v1995, %v598
        %v2375 = vmul.f32 %v1999, %v599
        %v2376 = vmul.f32 %v2003, %v600
        %v2377 = vmul.f32 %v2007, %v601
        %v2378 = vmul.f32 %v2011, %v602
        %v2379 = vmul.f32 %v2015, %v603
        %v2380 = vmul.f32 %v2019, %v604
        %v2381 = vmul.f32 %v2023, %v605
        %v2382 = vmul.f32 %v2027, %v606
        %v2383 = vmul.f32 %v2031, %v607
        %v2384 = vmul.f32 %v2035, %v592
        %v2385 = vmul.f32 %v2039, %v593
        %v2386 = vmul.f32 %v2043, %v594
        %v2387 = vmul.f32 %v2047, %v595
        %v2388 = vmul.f32 %v2051, %v596
        %v2389 = vmul.f32 %v2055, %v597
        %v2390 = vmul.f32 %v2059, %v598
        %v2391 = vmul.f32 %v2063, %v599
        %v2392 = vmul.f32 %v2067, %v600
        %v2393 = vmul.f32 %v2071, %v601
        %v2394 = vmul.f32 %v2075, %v602
        %v2395 = vmul.f32 %v2079, %v603
        %v2396 = vmul.f32 %v2083, %v604
        %v2397 = vmul.f32 %v2087, %v605
        %v2398 = vmul.f32 %v2091, %v606
        %v2399 = vmul.f32 %v2095, %v607
        %v2400 = vmul.f32 %v2099, %v592
        %v2401 = vmul.f32 %v2103, %v593
        %v2402 = vmul.f32 %v2107, %v594
        %v2403 = vmul.f32 %v2111, %v595
        %v2404 = vmul.f32 %v2115, %v596
        %v2405 = vmul.f32 %v2119, %v597
        %v2406 = vmul.f32 %v2123, %v598
        %v2407 = vmul.f32 %v2127, %v599
        %v2408 = vmul.f32 %v2131, %v600
        %v2409 = vmul.f32 %v2135, %v601
        %v2410 = vmul.f32 %v2139, %v602
        %v2411 = vmul.f32 %v2143, %v603
        %v2412 = vmul.f32 %v2147, %v604
        %v2413 = vmul.f32 %v2151, %v605
        %v2414 = vmul.f32 %v2155, %v606
        %v2415 = vmul.f32 %v2159, %v607
        %v2416 = vld [vmem:[#allocation5] sm:$0xff]
        %v2417 = vld [vmem:[#allocation5 + $0x8] sm:$0xff]
        %v2418 = vld [vmem:[#allocation5 + $0x10] sm:$0xff]
        %v2419 = vld [vmem:[#allocation5 + $0x18] sm:$0xff]
        %vm2420 = vcmask 523264
        %v2422 = vsel %vm2420, %v2416, 0
        %v2425 = vsel %vm2420, %v2417, 0
        %v2428 = vsel %vm2420, %v2418, 0
        %v2431 = vsel %vm2420, %v2419, 0
        %2433 = vmatprep.subr.mxu0 0.0
        %2434 = vmatpush1.msra.mxu0 0.0
        %2435 = vmatprep.subr.mxu0 0.0
        %2436 = vmatpush1.msra.mxu0 0.0
        %2437 = vmatprep.subr.mxu0 0.0
        %2438 = vmatpush1.msra.mxu0 0.0
        %2439 = vmatprep.subr.mxu0 0.0
        %2440 = vmatpush1.msra.mxu0 0.0
        %2441 = vmatprep.subr.mxu0 0.0
        %2442 = vmatpush1.msra.mxu0 0.0
        %2443 = vmatprep.subr.mxu0 0.0
        %2444 = vmatpush1.msra.mxu0 0.0
        %2445 = vmatprep.subr.mxu0 0.0
        %2446 = vmatpush1.msra.mxu0 0.0
        %2447 = vmatprep.subr.mxu0 0.0
        %2448 = vmatpush1.msra.mxu0 0.0
        %2449 = vmatprep.subr.mxu0 %v2401
        %2450 = vmatpush1.msra.mxu0 %v2400
        %2451 = vmatprep.subr.mxu0 %v2385
        %2452 = vmatpush1.msra.mxu0 %v2384
        %2453 = vmatprep.subr.mxu0 %v2369
        %2454 = vmatpush1.msra.mxu0 %v2368
        %2455 = vmatprep.subr.mxu0 %v2353
        %2456 = vmatpush1.msra.mxu0 %v2352
        %2457 = vmatprep.subr.mxu0 %v2337
        %2458 = vmatpush1.msra.mxu0 %v2336
        %2459 = vmatprep.subr.mxu0 %v2321
        %2460 = vmatpush1.msra.mxu0 %v2320
        %2461 = vmatprep.subr.mxu0 %v2305
        %2462 = vmatpush1.msra.mxu0 %v2304
        %2463 = vmatprep.subr.mxu0 %v2289
        %2464 = vmatpush1.msra.mxu0 %v2288
        %2465 = vmatprep.subr.mxu0 0.0
        %2466 = vmatpush2.msra.mxu0 0.0
        %2467 = vmatprep.subr.mxu0 0.0
        %2468 = vmatpush2.msra.mxu0 0.0
        %2469 = vmatprep.subr.mxu0 0.0
        %2470 = vmatpush2.msra.mxu0 0.0
        %2471 = vmatprep.subr.mxu0 0.0
        %2472 = vmatpush2.msra.mxu0 0.0
        %2473 = vmatprep.subr.mxu0 0.0
        %2474 = vmatpush2.msra.mxu0 0.0
        %2475 = vmatprep.subr.mxu0 0.0
        %2476 = vmatpush2.msra.mxu0 0.0
        %2477 = vmatprep.subr.mxu0 0.0
        %2478 = vmatpush2.msra.mxu0 0.0
        %2479 = vmatprep.subr.mxu0 0.0
        %2480 = vmatpush2.msra.mxu0 0.0
        %2481 = vmatprep.subr.mxu0 0.0
        %2482 = vmatpush2.msra.mxu0 0.0
        %2483 = vmatprep.subr.mxu0 0.0
        %2484 = vmatpush2.msra.mxu0 0.0
        %2485 = vmatprep.subr.mxu0 0.0
        %2486 = vmatpush2.msra.mxu0 0.0
        %2487 = vmatprep.subr.mxu0 0.0
        %2488 = vmatpush2.msra.mxu0 0.0
        %2489 = vmatprep.subr.mxu0 0.0
        %2490 = vmatpush2.msra.mxu0 0.0
        %2491 = vmatprep.subr.mxu0 0.0
        %2492 = vmatpush2.msra.mxu0 0.0
        %2493 = vmatprep.subr.mxu0 0.0
        %2494 = vmatpush2.msra.mxu0 0.0
        %2495 = vmatprep.subr.mxu0 0.0
        %2496 = vmatpush2.msra.mxu0 0.0
        %2497 = vmatprep.mubr.f32.mxu0 0.0
        %2498 = vmatmul.mubr.f32.gmra.mxu0 %v2422
        %v2499 = vpop.f32.mrf.mxu0
        %v2500 = vadd.f32 0.0, %v2499
        %v2501 = vpop.f32.mrf.mxu0
        %v2502 = vadd.f32 0.0, %v2501
        %2503 = vmatprep.mubr.f32.mxu0 0.0
        %2504 = vmatmul.mubr.f32.gmra.mxu0 %v2425
        %v2505 = vpop.f32.mrf.mxu0
        %v2506 = vadd.f32 0.0, %v2505
        %v2507 = vpop.f32.mrf.mxu0
        %v2508 = vadd.f32 0.0, %v2507
        %2509 = vmatprep.mubr.f32.mxu0 0.0
        %2510 = vmatmul.mubr.f32.gmra.mxu0 %v2428
        %v2511 = vpop.f32.mrf.mxu0
        %v2512 = vadd.f32 0.0, %v2511
        %v2513 = vpop.f32.mrf.mxu0
        %v2514 = vadd.f32 0.0, %v2513
        %2515 = vmatprep.mubr.f32.mxu0 0.0
        %2516 = vmatmul.mubr.f32.gmra.mxu0 %v2431
        %v2517 = vpop.f32.mrf.mxu0
        %v2518 = vadd.f32 0.0, %v2517
        %v2519 = vpop.f32.mrf.mxu0
        %v2520 = vadd.f32 0.0, %v2519
        %2521 = vdwg.mxu0
        %2522 = vmatprep.subr.mxu0 0.0
        %2523 = vmatpush1.msra.mxu0 0.0
        %2524 = vmatprep.subr.mxu0 0.0
        %2525 = vmatpush1.msra.mxu0 0.0
        %2526 = vmatprep.subr.mxu0 0.0
        %2527 = vmatpush1.msra.mxu0 0.0
        %2528 = vmatprep.subr.mxu0 0.0
        %2529 = vmatpush1.msra.mxu0 0.0
        %2530 = vmatprep.subr.mxu0 0.0
        %2531 = vmatpush1.msra.mxu0 0.0
        %2532 = vmatprep.subr.mxu0 0.0
        %2533 = vmatpush1.msra.mxu0 0.0
        %2534 = vmatprep.subr.mxu0 0.0
        %2535 = vmatpush1.msra.mxu0 0.0
        %2536 = vmatprep.subr.mxu0 0.0
        %2537 = vmatpush1.msra.mxu0 0.0
        %2538 = vmatprep.subr.mxu0 %v2403
        %2539 = vmatpush1.msra.mxu0 %v2402
        %2540 = vmatprep.subr.mxu0 %v2387
        %2541 = vmatpush1.msra.mxu0 %v2386
        %2542 = vmatprep.subr.mxu0 %v2371
        %2543 = vmatpush1.msra.mxu0 %v2370
        %2544 = vmatprep.subr.mxu0 %v2355
        %2545 = vmatpush1.msra.mxu0 %v2354
        %2546 = vmatprep.subr.mxu0 %v2339
        %2547 = vmatpush1.msra.mxu0 %v2338
        %2548 = vmatprep.subr.mxu0 %v2323
        %2549 = vmatpush1.msra.mxu0 %v2322
        %2550 = vmatprep.subr.mxu0 %v2307
        %2551 = vmatpush1.msra.mxu0 %v2306
        %2552 = vmatprep.subr.mxu0 %v2291
        %2553 = vmatpush1.msra.mxu0 %v2290
        %2554 = vmatprep.subr.mxu0 0.0
        %2555 = vmatpush2.msra.mxu0 0.0
        %2556 = vmatprep.subr.mxu0 0.0
        %2557 = vmatpush2.msra.mxu0 0.0
        %2558 = vmatprep.subr.mxu0 0.0
        %2559 = vmatpush2.msra.mxu0 0.0
        %2560 = vmatprep.subr.mxu0 0.0
        %2561 = vmatpush2.msra.mxu0 0.0
        %2562 = vmatprep.subr.mxu0 0.0
        %2563 = vmatpush2.msra.mxu0 0.0
        %2564 = vmatprep.subr.mxu0 0.0
        %2565 = vmatpush2.msra.mxu0 0.0
        %2566 = vmatprep.subr.mxu0 0.0
        %2567 = vmatpush2.msra.mxu0 0.0
        %2568 = vmatprep.subr.mxu0 0.0
        %2569 = vmatpush2.msra.mxu0 0.0
        %2570 = vmatprep.subr.mxu0 0.0
        %2571 = vmatpush2.msra.mxu0 0.0
        %2572 = vmatprep.subr.mxu0 0.0
        %2573 = vmatpush2.msra.mxu0 0.0
        %2574 = vmatprep.subr.mxu0 0.0
        %2575 = vmatpush2.msra.mxu0 0.0
        %2576 = vmatprep.subr.mxu0 0.0
        %2577 = vmatpush2.msra.mxu0 0.0
        %2578 = vmatprep.subr.mxu0 0.0
        %2579 = vmatpush2.msra.mxu0 0.0
        %2580 = vmatprep.subr.mxu0 0.0
        %2581 = vmatpush2.msra.mxu0 0.0
        %2582 = vmatprep.subr.mxu0 0.0
        %2583 = vmatpush2.msra.mxu0 0.0
        %2584 = vmatprep.subr.mxu0 0.0
        %2585 = vmatpush2.msra.mxu0 0.0
        %2586 = vmatprep.mubr.f32.mxu0 0.0
        %2587 = vmatmul.mubr.f32.gmra.mxu0 %v2422
        %v2588 = vpop.f32.mrf.mxu0
        %v2589 = vadd.f32 0.0, %v2588
        %v2590 = vpop.f32.mrf.mxu0
        %v2591 = vadd.f32 0.0, %v2590
        %2592 = vmatprep.mubr.f32.mxu0 0.0
        %2593 = vmatmul.mubr.f32.gmra.mxu0 %v2425
        %v2594 = vpop.f32.mrf.mxu0
        %v2595 = vadd.f32 0.0, %v2594
        %v2596 = vpop.f32.mrf.mxu0
        %v2597 = vadd.f32 0.0, %v2596
        %2598 = vmatprep.mubr.f32.mxu0 0.0
        %2599 = vmatmul.mubr.f32.gmra.mxu0 %v2428
        %v2600 = vpop.f32.mrf.mxu0
        %v2601 = vadd.f32 0.0, %v2600
        %v2602 = vpop.f32.mrf.mxu0
        %v2603 = vadd.f32 0.0, %v2602
        %2604 = vmatprep.mubr.f32.mxu0 0.0
        %2605 = vmatmul.mubr.f32.gmra.mxu0 %v2431
        %v2606 = vpop.f32.mrf.mxu0
        %v2607 = vadd.f32 0.0, %v2606
        %v2608 = vpop.f32.mrf.mxu0
        %v2609 = vadd.f32 0.0, %v2608
        %2610 = vdwg.mxu0
        %2611 = vmatprep.subr.mxu0 0.0
        %2612 = vmatpush1.msra.mxu0 0.0
        %2613 = vmatprep.subr.mxu0 0.0
        %2614 = vmatpush1.msra.mxu0 0.0
        %2615 = vmatprep.subr.mxu0 0.0
        %2616 = vmatpush1.msra.mxu0 0.0
        %2617 = vmatprep.subr.mxu0 0.0
        %2618 = vmatpush1.msra.mxu0 0.0
        %2619 = vmatprep.subr.mxu0 0.0
        %2620 = vmatpush1.msra.mxu0 0.0
        %2621 = vmatprep.subr.mxu0 0.0
        %2622 = vmatpush1.msra.mxu0 0.0
        %2623 = vmatprep.subr.mxu0 0.0
        %2624 = vmatpush1.msra.mxu0 0.0
        %2625 = vmatprep.subr.mxu0 0.0
        %2626 = vmatpush1.msra.mxu0 0.0
        %2627 = vmatprep.subr.mxu0 %v2405
        %2628 = vmatpush1.msra.mxu0 %v2404
        %2629 = vmatprep.subr.mxu0 %v2389
        %2630 = vmatpush1.msra.mxu0 %v2388
        %2631 = vmatprep.subr.mxu0 %v2373
        %2632 = vmatpush1.msra.mxu0 %v2372
        %2633 = vmatprep.subr.mxu0 %v2357
        %2634 = vmatpush1.msra.mxu0 %v2356
        %2635 = vmatprep.subr.mxu0 %v2341
        %2636 = vmatpush1.msra.mxu0 %v2340
        %2637 = vmatprep.subr.mxu0 %v2325
        %2638 = vmatpush1.msra.mxu0 %v2324
        %2639 = vmatprep.subr.mxu0 %v2309
        %2640 = vmatpush1.msra.mxu0 %v2308
        %2641 = vmatprep.subr.mxu0 %v2293
        %2642 = vmatpush1.msra.mxu0 %v2292
        %2643 = vmatprep.subr.mxu0 0.0
        %2644 = vmatpush2.msra.mxu0 0.0
        %2645 = vmatprep.subr.mxu0 0.0
        %2646 = vmatpush2.msra.mxu0 0.0
        %2647 = vmatprep.subr.mxu0 0.0
        %2648 = vmatpush2.msra.mxu0 0.0
        %2649 = vmatprep.subr.mxu0 0.0
        %2650 = vmatpush2.msra.mxu0 0.0
        %2651 = vmatprep.subr.mxu0 0.0
        %2652 = vmatpush2.msra.mxu0 0.0
        %2653 = vmatprep.subr.mxu0 0.0
        %2654 = vmatpush2.msra.mxu0 0.0
        %2655 = vmatprep.subr.mxu0 0.0
        %2656 = vmatpush2.msra.mxu0 0.0
        %2657 = vmatprep.subr.mxu0 0.0
        %2658 = vmatpush2.msra.mxu0 0.0
        %2659 = vmatprep.subr.mxu0 0.0
        %2660 = vmatpush2.msra.mxu0 0.0
        %2661 = vmatprep.subr.mxu0 0.0
        %2662 = vmatpush2.msra.mxu0 0.0
        %2663 = vmatprep.subr.mxu0 0.0
        %2664 = vmatpush2.msra.mxu0 0.0
        %2665 = vmatprep.subr.mxu0 0.0
        %2666 = vmatpush2.msra.mxu0 0.0
        %2667 = vmatprep.subr.mxu0 0.0
        %2668 = vmatpush2.msra.mxu0 0.0
        %2669 = vmatprep.subr.mxu0 0.0
        %2670 = vmatpush2.msra.mxu0 0.0
        %2671 = vmatprep.subr.mxu0 0.0
        %2672 = vmatpush2.msra.mxu0 0.0
        %2673 = vmatprep.subr.mxu0 0.0
        %2674 = vmatpush2.msra.mxu0 0.0
        %2675 = vmatprep.mubr.f32.mxu0 0.0
        %2676 = vmatmul.mubr.f32.gmra.mxu0 %v2422
        %v2677 = vpop.f32.mrf.mxu0
        %v2678 = vadd.f32 0.0, %v2677
        %v2679 = vpop.f32.mrf.mxu0
        %v2680 = vadd.f32 0.0, %v2679
        %2681 = vmatprep.mubr.f32.mxu0 0.0
        %2682 = vmatmul.mubr.f32.gmra.mxu0 %v2425
        %v2683 = vpop.f32.mrf.mxu0
        %v2684 = vadd.f32 0.0, %v2683
        %v2685 = vpop.f32.mrf.mxu0
        %v2686 = vadd.f32 0.0, %v2685
        %2687 = vmatprep.mubr.f32.mxu0 0.0
        %2688 = vmatmul.mubr.f32.gmra.mxu0 %v2428
        %v2689 = vpop.f32.mrf.mxu0
        %v2690 = vadd.f32 0.0, %v2689
        %v2691 = vpop.f32.mrf.mxu0
        %v2692 = vadd.f32 0.0, %v2691
        %2693 = vmatprep.mubr.f32.mxu0 0.0
        %2694 = vmatmul.mubr.f32.gmra.mxu0 %v2431
        %v2695 = vpop.f32.mrf.mxu0
        %v2696 = vadd.f32 0.0, %v2695
        %v2697 = vpop.f32.mrf.mxu0
        %v2698 = vadd.f32 0.0, %v2697
        %2699 = vdwg.mxu0
        %2700 = vmatprep.subr.mxu0 0.0
        %2701 = vmatpush1.msra.mxu0 0.0
        %2702 = vmatprep.subr.mxu0 0.0
        %2703 = vmatpush1.msra.mxu0 0.0
        %2704 = vmatprep.subr.mxu0 0.0
        %2705 = vmatpush1.msra.mxu0 0.0
        %2706 = vmatprep.subr.mxu0 0.0
        %2707 = vmatpush1.msra.mxu0 0.0
        %2708 = vmatprep.subr.mxu0 0.0
        %2709 = vmatpush1.msra.mxu0 0.0
        %2710 = vmatprep.subr.mxu0 0.0
        %2711 = vmatpush1.msra.mxu0 0.0
        %2712 = vmatprep.subr.mxu0 0.0
        %2713 = vmatpush1.msra.mxu0 0.0
        %2714 = vmatprep.subr.mxu0 0.0
        %2715 = vmatpush1.msra.mxu0 0.0
        %2716 = vmatprep.subr.mxu0 %v2407
        %2717 = vmatpush1.msra.mxu0 %v2406
        %2718 = vmatprep.subr.mxu0 %v2391
        %2719 = vmatpush1.msra.mxu0 %v2390
        %2720 = vmatprep.subr.mxu0 %v2375
        %2721 = vmatpush1.msra.mxu0 %v2374
        %2722 = vmatprep.subr.mxu0 %v2359
        %2723 = vmatpush1.msra.mxu0 %v2358
        %2724 = vmatprep.subr.mxu0 %v2343
        %2725 = vmatpush1.msra.mxu0 %v2342
        %2726 = vmatprep.subr.mxu0 %v2327
        %2727 = vmatpush1.msra.mxu0 %v2326
        %2728 = vmatprep.subr.mxu0 %v2311
        %2729 = vmatpush1.msra.mxu0 %v2310
        %2730 = vmatprep.subr.mxu0 %v2295
        %2731 = vmatpush1.msra.mxu0 %v2294
        %2732 = vmatprep.subr.mxu0 0.0
        %2733 = vmatpush2.msra.mxu0 0.0
        %2734 = vmatprep.subr.mxu0 0.0
        %2735 = vmatpush2.msra.mxu0 0.0
        %2736 = vmatprep.subr.mxu0 0.0
        %2737 = vmatpush2.msra.mxu0 0.0
        %2738 = vmatprep.subr.mxu0 0.0
        %2739 = vmatpush2.msra.mxu0 0.0
        %2740 = vmatprep.subr.mxu0 0.0
        %2741 = vmatpush2.msra.mxu0 0.0
        %2742 = vmatprep.subr.mxu0 0.0
        %2743 = vmatpush2.msra.mxu0 0.0
        %2744 = vmatprep.subr.mxu0 0.0
        %2745 = vmatpush2.msra.mxu0 0.0
        %2746 = vmatprep.subr.mxu0 0.0
        %2747 = vmatpush2.msra.mxu0 0.0
        %2748 = vmatprep.subr.mxu0 0.0
        %2749 = vmatpush2.msra.mxu0 0.0
        %2750 = vmatprep.subr.mxu0 0.0
        %2751 = vmatpush2.msra.mxu0 0.0
        %2752 = vmatprep.subr.mxu0 0.0
        %2753 = vmatpush2.msra.mxu0 0.0
        %2754 = vmatprep.subr.mxu0 0.0
        %2755 = vmatpush2.msra.mxu0 0.0
        %2756 = vmatprep.subr.mxu0 0.0
        %2757 = vmatpush2.msra.mxu0 0.0
        %2758 = vmatprep.subr.mxu0 0.0
        %2759 = vmatpush2.msra.mxu0 0.0
        %2760 = vmatprep.subr.mxu0 0.0
        %2761 = vmatpush2.msra.mxu0 0.0
        %2762 = vmatprep.subr.mxu0 0.0
        %2763 = vmatpush2.msra.mxu0 0.0
        %2764 = vmatprep.mubr.f32.mxu0 0.0
        %2765 = vmatmul.mubr.f32.gmra.mxu0 %v2422
        %v2766 = vpop.f32.mrf.mxu0
        %v2767 = vadd.f32 0.0, %v2766
        %v2768 = vpop.f32.mrf.mxu0
        %v2769 = vadd.f32 0.0, %v2768
        %2770 = vmatprep.mubr.f32.mxu0 0.0
        %2771 = vmatmul.mubr.f32.gmra.mxu0 %v2425
        %v2772 = vpop.f32.mrf.mxu0
        %v2773 = vadd.f32 0.0, %v2772
        %v2774 = vpop.f32.mrf.mxu0
        %v2775 = vadd.f32 0.0, %v2774
        %2776 = vmatprep.mubr.f32.mxu0 0.0
        %2777 = vmatmul.mubr.f32.gmra.mxu0 %v2428
        %v2778 = vpop.f32.mrf.mxu0
        %v2779 = vadd.f32 0.0, %v2778
        %v2780 = vpop.f32.mrf.mxu0
        %v2781 = vadd.f32 0.0, %v2780
        %2782 = vmatprep.mubr.f32.mxu0 0.0
        %2783 = vmatmul.mubr.f32.gmra.mxu0 %v2431
        %v2784 = vpop.f32.mrf.mxu0
        %v2785 = vadd.f32 0.0, %v2784
        %v2786 = vpop.f32.mrf.mxu0
        %v2787 = vadd.f32 0.0, %v2786
        %2788 = vdwg.mxu0
        %2789 = vmatprep.subr.mxu0 0.0
        %2790 = vmatpush1.msra.mxu0 0.0
        %2791 = vmatprep.subr.mxu0 0.0
        %2792 = vmatpush1.msra.mxu0 0.0
        %2793 = vmatprep.subr.mxu0 0.0
        %2794 = vmatpush1.msra.mxu0 0.0
        %2795 = vmatprep.subr.mxu0 0.0
        %2796 = vmatpush1.msra.mxu0 0.0
        %2797 = vmatprep.subr.mxu0 0.0
        %2798 = vmatpush1.msra.mxu0 0.0
        %2799 = vmatprep.subr.mxu0 0.0
        %2800 = vmatpush1.msra.mxu0 0.0
        %2801 = vmatprep.subr.mxu0 0.0
        %2802 = vmatpush1.msra.mxu0 0.0
        %2803 = vmatprep.subr.mxu0 0.0
        %2804 = vmatpush1.msra.mxu0 0.0
        %2805 = vmatprep.subr.mxu0 %v2409
        %2806 = vmatpush1.msra.mxu0 %v2408
        %2807 = vmatprep.subr.mxu0 %v2393
        %2808 = vmatpush1.msra.mxu0 %v2392
        %2809 = vmatprep.subr.mxu0 %v2377
        %2810 = vmatpush1.msra.mxu0 %v2376
        %2811 = vmatprep.subr.mxu0 %v2361
        %2812 = vmatpush1.msra.mxu0 %v2360
        %2813 = vmatprep.subr.mxu0 %v2345
        %2814 = vmatpush1.msra.mxu0 %v2344
        %2815 = vmatprep.subr.mxu0 %v2329
        %2816 = vmatpush1.msra.mxu0 %v2328
        %2817 = vmatprep.subr.mxu0 %v2313
        %2818 = vmatpush1.msra.mxu0 %v2312
        %2819 = vmatprep.subr.mxu0 %v2297
        %2820 = vmatpush1.msra.mxu0 %v2296
        %2821 = vmatprep.subr.mxu0 0.0
        %2822 = vmatpush2.msra.mxu0 0.0
        %2823 = vmatprep.subr.mxu0 0.0
        %2824 = vmatpush2.msra.mxu0 0.0
        %2825 = vmatprep.subr.mxu0 0.0
        %2826 = vmatpush2.msra.mxu0 0.0
        %2827 = vmatprep.subr.mxu0 0.0
        %2828 = vmatpush2.msra.mxu0 0.0
        %2829 = vmatprep.subr.mxu0 0.0
        %2830 = vmatpush2.msra.mxu0 0.0
        %2831 = vmatprep.subr.mxu0 0.0
        %2832 = vmatpush2.msra.mxu0 0.0
        %2833 = vmatprep.subr.mxu0 0.0
        %2834 = vmatpush2.msra.mxu0 0.0
        %2835 = vmatprep.subr.mxu0 0.0
        %2836 = vmatpush2.msra.mxu0 0.0
        %2837 = vmatprep.subr.mxu0 0.0
        %2838 = vmatpush2.msra.mxu0 0.0
        %2839 = vmatprep.subr.mxu0 0.0
        %2840 = vmatpush2.msra.mxu0 0.0
        %2841 = vmatprep.subr.mxu0 0.0
        %2842 = vmatpush2.msra.mxu0 0.0
        %2843 = vmatprep.subr.mxu0 0.0
        %2844 = vmatpush2.msra.mxu0 0.0
        %2845 = vmatprep.subr.mxu0 0.0
        %2846 = vmatpush2.msra.mxu0 0.0
        %2847 = vmatprep.subr.mxu0 0.0
        %2848 = vmatpush2.msra.mxu0 0.0
        %2849 = vmatprep.subr.mxu0 0.0
        %2850 = vmatpush2.msra.mxu0 0.0
        %2851 = vmatprep.subr.mxu0 0.0
        %2852 = vmatpush2.msra.mxu0 0.0
        %2853 = vmatprep.mubr.f32.mxu0 0.0
        %2854 = vmatmul.mubr.f32.gmra.mxu0 %v2422
        %v2855 = vpop.f32.mrf.mxu0
        %v2856 = vadd.f32 0.0, %v2855
        %v2857 = vpop.f32.mrf.mxu0
        %v2858 = vadd.f32 0.0, %v2857
        %2859 = vmatprep.mubr.f32.mxu0 0.0
        %2860 = vmatmul.mubr.f32.gmra.mxu0 %v2425
        %v2861 = vpop.f32.mrf.mxu0
        %v2862 = vadd.f32 0.0, %v2861
        %v2863 = vpop.f32.mrf.mxu0
        %v2864 = vadd.f32 0.0, %v2863
        %2865 = vmatprep.mubr.f32.mxu0 0.0
        %2866 = vmatmul.mubr.f32.gmra.mxu0 %v2428
        %v2867 = vpop.f32.mrf.mxu0
        %v2868 = vadd.f32 0.0, %v2867
        %v2869 = vpop.f32.mrf.mxu0
        %v2870 = vadd.f32 0.0, %v2869
        %2871 = vmatprep.mubr.f32.mxu0 0.0
        %2872 = vmatmul.mubr.f32.gmra.mxu0 %v2431
        %v2873 = vpop.f32.mrf.mxu0
        %v2874 = vadd.f32 0.0, %v2873
        %v2875 = vpop.f32.mrf.mxu0
        %v2876 = vadd.f32 0.0, %v2875
        %2877 = vdwg.mxu0
        %2878 = vmatprep.subr.mxu0 0.0
        %2879 = vmatpush1.msra.mxu0 0.0
        %2880 = vmatprep.subr.mxu0 0.0
        %2881 = vmatpush1.msra.mxu0 0.0
        %2882 = vmatprep.subr.mxu0 0.0
        %2883 = vmatpush1.msra.mxu0 0.0
        %2884 = vmatprep.subr.mxu0 0.0
        %2885 = vmatpush1.msra.mxu0 0.0
        %2886 = vmatprep.subr.mxu0 0.0
        %2887 = vmatpush1.msra.mxu0 0.0
        %2888 = vmatprep.subr.mxu0 0.0
        %2889 = vmatpush1.msra.mxu0 0.0
        %2890 = vmatprep.subr.mxu0 0.0
        %2891 = vmatpush1.msra.mxu0 0.0
        %2892 = vmatprep.subr.mxu0 0.0
        %2893 = vmatpush1.msra.mxu0 0.0
        %2894 = vmatprep.subr.mxu0 %v2411
        %2895 = vmatpush1.msra.mxu0 %v2410
        %2896 = vmatprep.subr.mxu0 %v2395
        %2897 = vmatpush1.msra.mxu0 %v2394
        %2898 = vmatprep.subr.mxu0 %v2379
        %2899 = vmatpush1.msra.mxu0 %v2378
        %2900 = vmatprep.subr.mxu0 %v2363
        %2901 = vmatpush1.msra.mxu0 %v2362
        %2902 = vmatprep.subr.mxu0 %v2347
        %2903 = vmatpush1.msra.mxu0 %v2346
        %2904 = vmatprep.subr.mxu0 %v2331
        %2905 = vmatpush1.msra.mxu0 %v2330
        %2906 = vmatprep.subr.mxu0 %v2315
        %2907 = vmatpush1.msra.mxu0 %v2314
        %2908 = vmatprep.subr.mxu0 %v2299
        %2909 = vmatpush1.msra.mxu0 %v2298
        %2910 = vmatprep.subr.mxu0 0.0
        %2911 = vmatpush2.msra.mxu0 0.0
        %2912 = vmatprep.subr.mxu0 0.0
        %2913 = vmatpush2.msra.mxu0 0.0
        %2914 = vmatprep.subr.mxu0 0.0
        %2915 = vmatpush2.msra.mxu0 0.0
        %2916 = vmatprep.subr.mxu0 0.0
        %2917 = vmatpush2.msra.mxu0 0.0
        %2918 = vmatprep.subr.mxu0 0.0
        %2919 = vmatpush2.msra.mxu0 0.0
        %2920 = vmatprep.subr.mxu0 0.0
        %2921 = vmatpush2.msra.mxu0 0.0
        %2922 = vmatprep.subr.mxu0 0.0
        %2923 = vmatpush2.msra.mxu0 0.0
        %2924 = vmatprep.subr.mxu0 0.0
        %2925 = vmatpush2.msra.mxu0 0.0
        %2926 = vmatprep.subr.mxu0 0.0
        %2927 = vmatpush2.msra.mxu0 0.0
        %2928 = vmatprep.subr.mxu0 0.0
        %2929 = vmatpush2.msra.mxu0 0.0
        %2930 = vmatprep.subr.mxu0 0.0
        %2931 = vmatpush2.msra.mxu0 0.0
        %2932 = vmatprep.subr.mxu0 0.0
        %2933 = vmatpush2.msra.mxu0 0.0
        %2934 = vmatprep.subr.mxu0 0.0
        %2935 = vmatpush2.msra.mxu0 0.0
        %2936 = vmatprep.subr.mxu0 0.0
        %2937 = vmatpush2.msra.mxu0 0.0
        %2938 = vmatprep.subr.mxu0 0.0
        %2939 = vmatpush2.msra.mxu0 0.0
        %2940 = vmatprep.subr.mxu0 0.0
        %2941 = vmatpush2.msra.mxu0 0.0
        %2942 = vmatprep.mubr.f32.mxu0 0.0
        %2943 = vmatmul.mubr.f32.gmra.mxu0 %v2422
        %v2944 = vpop.f32.mrf.mxu0
        %v2945 = vadd.f32 0.0, %v2944
        %v2946 = vpop.f32.mrf.mxu0
        %v2947 = vadd.f32 0.0, %v2946
        %2948 = vmatprep.mubr.f32.mxu0 0.0
        %2949 = vmatmul.mubr.f32.gmra.mxu0 %v2425
        %v2950 = vpop.f32.mrf.mxu0
        %v2951 = vadd.f32 0.0, %v2950
        %v2952 = vpop.f32.mrf.mxu0
        %v2953 = vadd.f32 0.0, %v2952
        %2954 = vmatprep.mubr.f32.mxu0 0.0
        %2955 = vmatmul.mubr.f32.gmra.mxu0 %v2428
        %v2956 = vpop.f32.mrf.mxu0
        %v2957 = vadd.f32 0.0, %v2956
        %v2958 = vpop.f32.mrf.mxu0
        %v2959 = vadd.f32 0.0, %v2958
        %2960 = vmatprep.mubr.f32.mxu0 0.0
        %2961 = vmatmul.mubr.f32.gmra.mxu0 %v2431
        %v2962 = vpop.f32.mrf.mxu0
        %v2963 = vadd.f32 0.0, %v2962
        %v2964 = vpop.f32.mrf.mxu0
        %v2965 = vadd.f32 0.0, %v2964
        %2966 = vdwg.mxu0
        %2967 = vmatprep.subr.mxu0 0.0
        %2968 = vmatpush1.msra.mxu0 0.0
        %2969 = vmatprep.subr.mxu0 0.0
        %2970 = vmatpush1.msra.mxu0 0.0
        %2971 = vmatprep.subr.mxu0 0.0
        %2972 = vmatpush1.msra.mxu0 0.0
        %2973 = vmatprep.subr.mxu0 0.0
        %2974 = vmatpush1.msra.mxu0 0.0
        %2975 = vmatprep.subr.mxu0 0.0
        %2976 = vmatpush1.msra.mxu0 0.0
        %2977 = vmatprep.subr.mxu0 0.0
        %2978 = vmatpush1.msra.mxu0 0.0
        %2979 = vmatprep.subr.mxu0 0.0
        %2980 = vmatpush1.msra.mxu0 0.0
        %2981 = vmatprep.subr.mxu0 0.0
        %2982 = vmatpush1.msra.mxu0 0.0
        %2983 = vmatprep.subr.mxu0 %v2413
        %2984 = vmatpush1.msra.mxu0 %v2412
        %2985 = vmatprep.subr.mxu0 %v2397
        %2986 = vmatpush1.msra.mxu0 %v2396
        %2987 = vmatprep.subr.mxu0 %v2381
        %2988 = vmatpush1.msra.mxu0 %v2380
        %2989 = vmatprep.subr.mxu0 %v2365
        %2990 = vmatpush1.msra.mxu0 %v2364
        %2991 = vmatprep.subr.mxu0 %v2349
        %2992 = vmatpush1.msra.mxu0 %v2348
        %2993 = vmatprep.subr.mxu0 %v2333
        %2994 = vmatpush1.msra.mxu0 %v2332
        %2995 = vmatprep.subr.mxu0 %v2317
        %2996 = vmatpush1.msra.mxu0 %v2316
        %2997 = vmatprep.subr.mxu0 %v2301
        %2998 = vmatpush1.msra.mxu0 %v2300
        %2999 = vmatprep.subr.mxu0 0.0
        %3000 = vmatpush2.msra.mxu0 0.0
        %3001 = vmatprep.subr.mxu0 0.0
        %3002 = vmatpush2.msra.mxu0 0.0
        %3003 = vmatprep.subr.mxu0 0.0
        %3004 = vmatpush2.msra.mxu0 0.0
        %3005 = vmatprep.subr.mxu0 0.0
        %3006 = vmatpush2.msra.mxu0 0.0
        %3007 = vmatprep.subr.mxu0 0.0
        %3008 = vmatpush2.msra.mxu0 0.0
        %3009 = vmatprep.subr.mxu0 0.0
        %3010 = vmatpush2.msra.mxu0 0.0
        %3011 = vmatprep.subr.mxu0 0.0
        %3012 = vmatpush2.msra.mxu0 0.0
        %3013 = vmatprep.subr.mxu0 0.0
        %3014 = vmatpush2.msra.mxu0 0.0
        %3015 = vmatprep.subr.mxu0 0.0
        %3016 = vmatpush2.msra.mxu0 0.0
        %3017 = vmatprep.subr.mxu0 0.0
        %3018 = vmatpush2.msra.mxu0 0.0
        %3019 = vmatprep.subr.mxu0 0.0
        %3020 = vmatpush2.msra.mxu0 0.0
        %3021 = vmatprep.subr.mxu0 0.0
        %3022 = vmatpush2.msra.mxu0 0.0
        %3023 = vmatprep.subr.mxu0 0.0
        %3024 = vmatpush2.msra.mxu0 0.0
        %3025 = vmatprep.subr.mxu0 0.0
        %3026 = vmatpush2.msra.mxu0 0.0
        %3027 = vmatprep.subr.mxu0 0.0
        %3028 = vmatpush2.msra.mxu0 0.0
        %3029 = vmatprep.subr.mxu0 0.0
        %3030 = vmatpush2.msra.mxu0 0.0
        %3031 = vmatprep.mubr.f32.mxu0 0.0
        %3032 = vmatmul.mubr.f32.gmra.mxu0 %v2422
        %v3033 = vpop.f32.mrf.mxu0
        %v3034 = vadd.f32 0.0, %v3033
        %v3035 = vpop.f32.mrf.mxu0
        %v3036 = vadd.f32 0.0, %v3035
        %3037 = vmatprep.mubr.f32.mxu0 0.0
        %3038 = vmatmul.mubr.f32.gmra.mxu0 %v2425
        %v3039 = vpop.f32.mrf.mxu0
        %v3040 = vadd.f32 0.0, %v3039
        %v3041 = vpop.f32.mrf.mxu0
        %v3042 = vadd.f32 0.0, %v3041
        %3043 = vmatprep.mubr.f32.mxu0 0.0
        %3044 = vmatmul.mubr.f32.gmra.mxu0 %v2428
        %v3045 = vpop.f32.mrf.mxu0
        %v3046 = vadd.f32 0.0, %v3045
        %v3047 = vpop.f32.mrf.mxu0
        %v3048 = vadd.f32 0.0, %v3047
        %3049 = vmatprep.mubr.f32.mxu0 0.0
        %3050 = vmatmul.mubr.f32.gmra.mxu0 %v2431
        %v3051 = vpop.f32.mrf.mxu0
        %v3052 = vadd.f32 0.0, %v3051
        %v3053 = vpop.f32.mrf.mxu0
        %v3054 = vadd.f32 0.0, %v3053
        %3055 = vdwg.mxu0
        %3056 = vmatprep.subr.mxu0 0.0
        %3057 = vmatpush1.msra.mxu0 0.0
        %3058 = vmatprep.subr.mxu0 0.0
        %3059 = vmatpush1.msra.mxu0 0.0
        %3060 = vmatprep.subr.mxu0 0.0
        %3061 = vmatpush1.msra.mxu0 0.0
        %3062 = vmatprep.subr.mxu0 0.0
        %3063 = vmatpush1.msra.mxu0 0.0
        %3064 = vmatprep.subr.mxu0 0.0
        %3065 = vmatpush1.msra.mxu0 0.0
        %3066 = vmatprep.subr.mxu0 0.0
        %3067 = vmatpush1.msra.mxu0 0.0
        %3068 = vmatprep.subr.mxu0 0.0
        %3069 = vmatpush1.msra.mxu0 0.0
        %3070 = vmatprep.subr.mxu0 0.0
        %3071 = vmatpush1.msra.mxu0 0.0
        %3072 = vmatprep.subr.mxu0 %v2415
        %3073 = vmatpush1.msra.mxu0 %v2414
        %3074 = vmatprep.subr.mxu0 %v2399
        %3075 = vmatpush1.msra.mxu0 %v2398
        %3076 = vmatprep.subr.mxu0 %v2383
        %3077 = vmatpush1.msra.mxu0 %v2382
        %3078 = vmatprep.subr.mxu0 %v2367
        %3079 = vmatpush1.msra.mxu0 %v2366
        %3080 = vmatprep.subr.mxu0 %v2351
        %3081 = vmatpush1.msra.mxu0 %v2350
        %3082 = vmatprep.subr.mxu0 %v2335
        %3083 = vmatpush1.msra.mxu0 %v2334
        %3084 = vmatprep.subr.mxu0 %v2319
        %3085 = vmatpush1.msra.mxu0 %v2318
        %3086 = vmatprep.subr.mxu0 %v2303
        %3087 = vmatpush1.msra.mxu0 %v2302
        %3088 = vmatprep.subr.mxu0 0.0
        %3089 = vmatpush2.msra.mxu0 0.0
        %3090 = vmatprep.subr.mxu0 0.0
        %3091 = vmatpush2.msra.mxu0 0.0
        %3092 = vmatprep.subr.mxu0 0.0
        %3093 = vmatpush2.msra.mxu0 0.0
        %3094 = vmatprep.subr.mxu0 0.0
        %3095 = vmatpush2.msra.mxu0 0.0
        %3096 = vmatprep.subr.mxu0 0.0
        %3097 = vmatpush2.msra.mxu0 0.0
        %3098 = vmatprep.subr.mxu0 0.0
        %3099 = vmatpush2.msra.mxu0 0.0
        %3100 = vmatprep.subr.mxu0 0.0
        %3101 = vmatpush2.msra.mxu0 0.0
        %3102 = vmatprep.subr.mxu0 0.0
        %3103 = vmatpush2.msra.mxu0 0.0
        %3104 = vmatprep.subr.mxu0 0.0
        %3105 = vmatpush2.msra.mxu0 0.0
        %3106 = vmatprep.subr.mxu0 0.0
        %3107 = vmatpush2.msra.mxu0 0.0
        %3108 = vmatprep.subr.mxu0 0.0
        %3109 = vmatpush2.msra.mxu0 0.0
        %3110 = vmatprep.subr.mxu0 0.0
        %3111 = vmatpush2.msra.mxu0 0.0
        %3112 = vmatprep.subr.mxu0 0.0
        %3113 = vmatpush2.msra.mxu0 0.0
        %3114 = vmatprep.subr.mxu0 0.0
        %3115 = vmatpush2.msra.mxu0 0.0
        %3116 = vmatprep.subr.mxu0 0.0
        %3117 = vmatpush2.msra.mxu0 0.0
        %3118 = vmatprep.subr.mxu0 0.0
        %3119 = vmatpush2.msra.mxu0 0.0
        %3120 = vmatprep.mubr.f32.mxu0 0.0
        %3121 = vmatmul.mubr.f32.gmra.mxu0 %v2422
        %v3122 = vpop.f32.mrf.mxu0
        %v3123 = vadd.f32 0.0, %v3122
        %v3124 = vpop.f32.mrf.mxu0
        %v3125 = vadd.f32 0.0, %v3124
        %3126 = vmatprep.mubr.f32.mxu0 0.0
        %3127 = vmatmul.mubr.f32.gmra.mxu0 %v2425
        %v3128 = vpop.f32.mrf.mxu0
        %v3129 = vadd.f32 0.0, %v3128
        %v3130 = vpop.f32.mrf.mxu0
        %v3131 = vadd.f32 0.0, %v3130
        %3132 = vmatprep.mubr.f32.mxu0 0.0
        %3133 = vmatmul.mubr.f32.gmra.mxu0 %v2428
        %v3134 = vpop.f32.mrf.mxu0
        %v3135 = vadd.f32 0.0, %v3134
        %v3136 = vpop.f32.mrf.mxu0
        %v3137 = vadd.f32 0.0, %v3136
        %3138 = vmatprep.mubr.f32.mxu0 0.0
        %3139 = vmatmul.mubr.f32.gmra.mxu0 %v2431
        %v3140 = vpop.f32.mrf.mxu0
        %v3141 = vadd.f32 0.0, %v3140
        %v3142 = vpop.f32.mrf.mxu0
        %v3143 = vadd.f32 0.0, %v3142
        %3144 = vdwg.mxu0
        %v3145 = vmul.f32 %v2500, %v1344
        %v3146 = vmul.f32 %v2502, %v1345
        %v3147 = vmul.f32 %v2589, %v1346
        %v3148 = vmul.f32 %v2591, %v1347
        %v3149 = vmul.f32 %v2678, %v1348
        %v3150 = vmul.f32 %v2680, %v1349
        %v3151 = vmul.f32 %v2767, %v1350
        %v3152 = vmul.f32 %v2769, %v1351
        %v3153 = vmul.f32 %v2856, %v1352
        %v3154 = vmul.f32 %v2858, %v1353
        %v3155 = vmul.f32 %v2945, %v1354
        %v3156 = vmul.f32 %v2947, %v1355
        %v3157 = vmul.f32 %v3034, %v1356
        %v3158 = vmul.f32 %v3036, %v1357
        %v3159 = vmul.f32 %v3123, %v1358
        %v3160 = vmul.f32 %v3125, %v1359
        %v3161 = vmul.f32 %v2506, %v1344
        %v3162 = vmul.f32 %v2508, %v1345
        %v3163 = vmul.f32 %v2595, %v1346
        %v3164 = vmul.f32 %v2597, %v1347
        %v3165 = vmul.f32 %v2684, %v1348
        %v3166 = vmul.f32 %v2686, %v1349
        %v3167 = vmul.f32 %v2773, %v1350
        %v3168 = vmul.f32 %v2775, %v1351
        %v3169 = vmul.f32 %v2862, %v1352
        %v3170 = vmul.f32 %v2864, %v1353
        %v3171 = vmul.f32 %v2951, %v1354
        %v3172 = vmul.f32 %v2953, %v1355
        %v3173 = vmul.f32 %v3040, %v1356
        %v3174 = vmul.f32 %v3042, %v1357
        %v3175 = vmul.f32 %v3129, %v1358
        %v3176 = vmul.f32 %v3131, %v1359
        %v3177 = vmul.f32 %v2512, %v1344
        %v3178 = vmul.f32 %v2514, %v1345
        %v3179 = vmul.f32 %v2601, %v1346
        %v3180 = vmul.f32 %v2603, %v1347
        %v3181 = vmul.f32 %v2690, %v1348
        %v3182 = vmul.f32 %v2692, %v1349
        %v3183 = vmul.f32 %v2779, %v1350
        %v3184 = vmul.f32 %v2781, %v1351
        %v3185 = vmul.f32 %v2868, %v1352
        %v3186 = vmul.f32 %v2870, %v1353
        %v3187 = vmul.f32 %v2957, %v1354
        %v3188 = vmul.f32 %v2959, %v1355
        %v3189 = vmul.f32 %v3046, %v1356
        %v3190 = vmul.f32 %v3048, %v1357
        %v3191 = vmul.f32 %v3135, %v1358
        %v3192 = vmul.f32 %v3137, %v1359
        %v3193 = vmul.f32 %v2518, %v1344
        %v3194 = vmul.f32 %v2520, %v1345
        %v3195 = vmul.f32 %v2607, %v1346
        %v3196 = vmul.f32 %v2609, %v1347
        %v3197 = vmul.f32 %v2696, %v1348
        %v3198 = vmul.f32 %v2698, %v1349
        %v3199 = vmul.f32 %v2785, %v1350
        %v3200 = vmul.f32 %v2787, %v1351
        %v3201 = vmul.f32 %v2874, %v1352
        %v3202 = vmul.f32 %v2876, %v1353
        %v3203 = vmul.f32 %v2963, %v1354
        %v3204 = vmul.f32 %v2965, %v1355
        %v3205 = vmul.f32 %v3052, %v1356
        %v3206 = vmul.f32 %v3054, %v1357
        %v3207 = vmul.f32 %v3141, %v1358
        %v3208 = vmul.f32 %v3143, %v1359
        %v3209 = vrot.slane %v3145, 4
        %v3210 = vadd.f32 %v3145, %v3209
        %v3211 = vrot.slane %v3210, 2
        %v3212 = vadd.f32 %v3210, %v3211
        %v3213 = vrot.slane %v3212, 1
        %v3214 = vadd.f32 %v3212, %v3213
        %v3215 = vrot.slane %v3146, 4
        %v3216 = vadd.f32 %v3146, %v3215
        %v3217 = vrot.slane %v3216, 2
        %v3218 = vadd.f32 %v3216, %v3217
        %v3219 = vrot.slane %v3218, 1
        %v3220 = vadd.f32 %v3218, %v3219
        %v3221 = vrot.slane %v3147, 4
        %v3222 = vadd.f32 %v3147, %v3221
        %v3223 = vrot.slane %v3222, 2
        %v3224 = vadd.f32 %v3222, %v3223
        %v3225 = vrot.slane %v3224, 1
        %v3226 = vadd.f32 %v3224, %v3225
        %v3227 = vrot.slane %v3148, 4
        %v3228 = vadd.f32 %v3148, %v3227
        %v3229 = vrot.slane %v3228, 2
        %v3230 = vadd.f32 %v3228, %v3229
        %v3231 = vrot.slane %v3230, 1
        %v3232 = vadd.f32 %v3230, %v3231
        %v3233 = vrot.slane %v3149, 4
        %v3234 = vadd.f32 %v3149, %v3233
        %v3235 = vrot.slane %v3234, 2
        %v3236 = vadd.f32 %v3234, %v3235
        %v3237 = vrot.slane %v3236, 1
        %v3238 = vadd.f32 %v3236, %v3237
        %v3239 = vrot.slane %v3150, 4
        %v3240 = vadd.f32 %v3150, %v3239
        %v3241 = vrot.slane %v3240, 2
        %v3242 = vadd.f32 %v3240, %v3241
        %v3243 = vrot.slane %v3242, 1
        %v3244 = vadd.f32 %v3242, %v3243
        %v3245 = vrot.slane %v3151, 4
        %v3246 = vadd.f32 %v3151, %v3245
        %v3247 = vrot.slane %v3246, 2
        %v3248 = vadd.f32 %v3246, %v3247
        %v3249 = vrot.slane %v3248, 1
        %v3250 = vadd.f32 %v3248, %v3249
        %v3251 = vrot.slane %v3152, 4
        %v3252 = vadd.f32 %v3152, %v3251
        %v3253 = vrot.slane %v3252, 2
        %v3254 = vadd.f32 %v3252, %v3253
        %v3255 = vrot.slane %v3254, 1
        %v3256 = vadd.f32 %v3254, %v3255
        %v3257 = vrot.slane %v3153, 4
        %v3258 = vadd.f32 %v3153, %v3257
        %v3259 = vrot.slane %v3258, 2
        %v3260 = vadd.f32 %v3258, %v3259
        %v3261 = vrot.slane %v3260, 1
        %v3262 = vadd.f32 %v3260, %v3261
        %v3263 = vrot.slane %v3154, 4
        %v3264 = vadd.f32 %v3154, %v3263
        %v3265 = vrot.slane %v3264, 2
        %v3266 = vadd.f32 %v3264, %v3265
        %v3267 = vrot.slane %v3266, 1
        %v3268 = vadd.f32 %v3266, %v3267
        %v3269 = vrot.slane %v3155, 4
        %v3270 = vadd.f32 %v3155, %v3269
        %v3271 = vrot.slane %v3270, 2
        %v3272 = vadd.f32 %v3270, %v3271
        %v3273 = vrot.slane %v3272, 1
        %v3274 = vadd.f32 %v3272, %v3273
        %v3275 = vrot.slane %v3156, 4
        %v3276 = vadd.f32 %v3156, %v3275
        %v3277 = vrot.slane %v3276, 2
        %v3278 = vadd.f32 %v3276, %v3277
        %v3279 = vrot.slane %v3278, 1
        %v3280 = vadd.f32 %v3278, %v3279
        %v3281 = vrot.slane %v3157, 4
        %v3282 = vadd.f32 %v3157, %v3281
        %v3283 = vrot.slane %v3282, 2
        %v3284 = vadd.f32 %v3282, %v3283
        %v3285 = vrot.slane %v3284, 1
        %v3286 = vadd.f32 %v3284, %v3285
        %v3287 = vrot.slane %v3158, 4
        %v3288 = vadd.f32 %v3158, %v3287
        %v3289 = vrot.slane %v3288, 2
        %v3290 = vadd.f32 %v3288, %v3289
        %v3291 = vrot.slane %v3290, 1
        %v3292 = vadd.f32 %v3290, %v3291
        %v3293 = vrot.slane %v3159, 4
        %v3294 = vadd.f32 %v3159, %v3293
        %v3295 = vrot.slane %v3294, 2
        %v3296 = vadd.f32 %v3294, %v3295
        %v3297 = vrot.slane %v3296, 1
        %v3298 = vadd.f32 %v3296, %v3297
        %v3299 = vrot.slane %v3160, 4
        %v3300 = vadd.f32 %v3160, %v3299
        %v3301 = vrot.slane %v3300, 2
        %v3302 = vadd.f32 %v3300, %v3301
        %v3303 = vrot.slane %v3302, 1
        %v3304 = vadd.f32 %v3302, %v3303
        %v3305 = vrot.slane %v3161, 4
        %v3306 = vadd.f32 %v3161, %v3305
        %v3307 = vrot.slane %v3306, 2
        %v3308 = vadd.f32 %v3306, %v3307
        %v3309 = vrot.slane %v3308, 1
        %v3310 = vadd.f32 %v3308, %v3309
        %v3311 = vrot.slane %v3162, 4
        %v3312 = vadd.f32 %v3162, %v3311
        %v3313 = vrot.slane %v3312, 2
        %v3314 = vadd.f32 %v3312, %v3313
        %v3315 = vrot.slane %v3314, 1
        %v3316 = vadd.f32 %v3314, %v3315
        %v3317 = vrot.slane %v3163, 4
        %v3318 = vadd.f32 %v3163, %v3317
        %v3319 = vrot.slane %v3318, 2
        %v3320 = vadd.f32 %v3318, %v3319
        %v3321 = vrot.slane %v3320, 1
        %v3322 = vadd.f32 %v3320, %v3321
        %v3323 = vrot.slane %v3164, 4
        %v3324 = vadd.f32 %v3164, %v3323
        %v3325 = vrot.slane %v3324, 2
        %v3326 = vadd.f32 %v3324, %v3325
        %v3327 = vrot.slane %v3326, 1
        %v3328 = vadd.f32 %v3326, %v3327
        %v3329 = vrot.slane %v3165, 4
        %v3330 = vadd.f32 %v3165, %v3329
        %v3331 = vrot.slane %v3330, 2
        %v3332 = vadd.f32 %v3330, %v3331
        %v3333 = vrot.slane %v3332, 1
        %v3334 = vadd.f32 %v3332, %v3333
        %v3335 = vrot.slane %v3166, 4
        %v3336 = vadd.f32 %v3166, %v3335
        %v3337 = vrot.slane %v3336, 2
        %v3338 = vadd.f32 %v3336, %v3337
        %v3339 = vrot.slane %v3338, 1
        %v3340 = vadd.f32 %v3338, %v3339
        %v3341 = vrot.slane %v3167, 4
        %v3342 = vadd.f32 %v3167, %v3341
        %v3343 = vrot.slane %v3342, 2
        %v3344 = vadd.f32 %v3342, %v3343
        %v3345 = vrot.slane %v3344, 1
        %v3346 = vadd.f32 %v3344, %v3345
        %v3347 = vrot.slane %v3168, 4
        %v3348 = vadd.f32 %v3168, %v3347
        %v3349 = vrot.slane %v3348, 2
        %v3350 = vadd.f32 %v3348, %v3349
        %v3351 = vrot.slane %v3350, 1
        %v3352 = vadd.f32 %v3350, %v3351
        %v3353 = vrot.slane %v3169, 4
        %v3354 = vadd.f32 %v3169, %v3353
        %v3355 = vrot.slane %v3354, 2
        %v3356 = vadd.f32 %v3354, %v3355
        %v3357 = vrot.slane %v3356, 1
        %v3358 = vadd.f32 %v3356, %v3357
        %v3359 = vrot.slane %v3170, 4
        %v3360 = vadd.f32 %v3170, %v3359
        %v3361 = vrot.slane %v3360, 2
        %v3362 = vadd.f32 %v3360, %v3361
        %v3363 = vrot.slane %v3362, 1
        %v3364 = vadd.f32 %v3362, %v3363
        %v3365 = vrot.slane %v3171, 4
        %v3366 = vadd.f32 %v3171, %v3365
        %v3367 = vrot.slane %v3366, 2
        %v3368 = vadd.f32 %v3366, %v3367
        %v3369 = vrot.slane %v3368, 1
        %v3370 = vadd.f32 %v3368, %v3369
        %v3371 = vrot.slane %v3172, 4
        %v3372 = vadd.f32 %v3172, %v3371
        %v3373 = vrot.slane %v3372, 2
        %v3374 = vadd.f32 %v3372, %v3373
        %v3375 = vrot.slane %v3374, 1
        %v3376 = vadd.f32 %v3374, %v3375
        %v3377 = vrot.slane %v3173, 4
        %v3378 = vadd.f32 %v3173, %v3377
        %v3379 = vrot.slane %v3378, 2
        %v3380 = vadd.f32 %v3378, %v3379
        %v3381 = vrot.slane %v3380, 1
        %v3382 = vadd.f32 %v3380, %v3381
        %v3383 = vrot.slane %v3174, 4
        %v3384 = vadd.f32 %v3174, %v3383
        %v3385 = vrot.slane %v3384, 2
        %v3386 = vadd.f32 %v3384, %v3385
        %v3387 = vrot.slane %v3386, 1
        %v3388 = vadd.f32 %v3386, %v3387
        %v3389 = vrot.slane %v3175, 4
        %v3390 = vadd.f32 %v3175, %v3389
        %v3391 = vrot.slane %v3390, 2
        %v3392 = vadd.f32 %v3390, %v3391
        %v3393 = vrot.slane %v3392, 1
        %v3394 = vadd.f32 %v3392, %v3393
        %v3395 = vrot.slane %v3176, 4
        %v3396 = vadd.f32 %v3176, %v3395
        %v3397 = vrot.slane %v3396, 2
        %v3398 = vadd.f32 %v3396, %v3397
        %v3399 = vrot.slane %v3398, 1
        %v3400 = vadd.f32 %v3398, %v3399
        %v3401 = vrot.slane %v3177, 4
        %v3402 = vadd.f32 %v3177, %v3401
        %v3403 = vrot.slane %v3402, 2
        %v3404 = vadd.f32 %v3402, %v3403
        %v3405 = vrot.slane %v3404, 1
        %v3406 = vadd.f32 %v3404, %v3405
        %v3407 = vrot.slane %v3178, 4
        %v3408 = vadd.f32 %v3178, %v3407
        %v3409 = vrot.slane %v3408, 2
        %v3410 = vadd.f32 %v3408, %v3409
        %v3411 = vrot.slane %v3410, 1
        %v3412 = vadd.f32 %v3410, %v3411
        %v3413 = vrot.slane %v3179, 4
        %v3414 = vadd.f32 %v3179, %v3413
        %v3415 = vrot.slane %v3414, 2
        %v3416 = vadd.f32 %v3414, %v3415
        %v3417 = vrot.slane %v3416, 1
        %v3418 = vadd.f32 %v3416, %v3417
        %v3419 = vrot.slane %v3180, 4
        %v3420 = vadd.f32 %v3180, %v3419
        %v3421 = vrot.slane %v3420, 2
        %v3422 = vadd.f32 %v3420, %v3421
        %v3423 = vrot.slane %v3422, 1
        %v3424 = vadd.f32 %v3422, %v3423
        %v3425 = vrot.slane %v3181, 4
        %v3426 = vadd.f32 %v3181, %v3425
        %v3427 = vrot.slane %v3426, 2
        %v3428 = vadd.f32 %v3426, %v3427
        %v3429 = vrot.slane %v3428, 1
        %v3430 = vadd.f32 %v3428, %v3429
        %v3431 = vrot.slane %v3182, 4
        %v3432 = vadd.f32 %v3182, %v3431
        %v3433 = vrot.slane %v3432, 2
        %v3434 = vadd.f32 %v3432, %v3433
        %v3435 = vrot.slane %v3434, 1
        %v3436 = vadd.f32 %v3434, %v3435
        %v3437 = vrot.slane %v3183, 4
        %v3438 = vadd.f32 %v3183, %v3437
        %v3439 = vrot.slane %v3438, 2
        %v3440 = vadd.f32 %v3438, %v3439
        %v3441 = vrot.slane %v3440, 1
        %v3442 = vadd.f32 %v3440, %v3441
        %v3443 = vrot.slane %v3184, 4
        %v3444 = vadd.f32 %v3184, %v3443
        %v3445 = vrot.slane %v3444, 2
        %v3446 = vadd.f32 %v3444, %v3445
        %v3447 = vrot.slane %v3446, 1
        %v3448 = vadd.f32 %v3446, %v3447
        %v3449 = vrot.slane %v3185, 4
        %v3450 = vadd.f32 %v3185, %v3449
        %v3451 = vrot.slane %v3450, 2
        %v3452 = vadd.f32 %v3450, %v3451
        %v3453 = vrot.slane %v3452, 1
        %v3454 = vadd.f32 %v3452, %v3453
        %v3455 = vrot.slane %v3186, 4
        %v3456 = vadd.f32 %v3186, %v3455
        %v3457 = vrot.slane %v3456, 2
        %v3458 = vadd.f32 %v3456, %v3457
        %v3459 = vrot.slane %v3458, 1
        %v3460 = vadd.f32 %v3458, %v3459
        %v3461 = vrot.slane %v3187, 4
        %v3462 = vadd.f32 %v3187, %v3461
        %v3463 = vrot.slane %v3462, 2
        %v3464 = vadd.f32 %v3462, %v3463
        %v3465 = vrot.slane %v3464, 1
        %v3466 = vadd.f32 %v3464, %v3465
        %v3467 = vrot.slane %v3188, 4
        %v3468 = vadd.f32 %v3188, %v3467
        %v3469 = vrot.slane %v3468, 2
        %v3470 = vadd.f32 %v3468, %v3469
        %v3471 = vrot.slane %v3470, 1
        %v3472 = vadd.f32 %v3470, %v3471
        %v3473 = vrot.slane %v3189, 4
        %v3474 = vadd.f32 %v3189, %v3473
        %v3475 = vrot.slane %v3474, 2
        %v3476 = vadd.f32 %v3474, %v3475
        %v3477 = vrot.slane %v3476, 1
        %v3478 = vadd.f32 %v3476, %v3477
        %v3479 = vrot.slane %v3190, 4
        %v3480 = vadd.f32 %v3190, %v3479
        %v3481 = vrot.slane %v3480, 2
        %v3482 = vadd.f32 %v3480, %v3481
        %v3483 = vrot.slane %v3482, 1
        %v3484 = vadd.f32 %v3482, %v3483
        %v3485 = vrot.slane %v3191, 4
        %v3486 = vadd.f32 %v3191, %v3485
        %v3487 = vrot.slane %v3486, 2
        %v3488 = vadd.f32 %v3486, %v3487
        %v3489 = vrot.slane %v3488, 1
        %v3490 = vadd.f32 %v3488, %v3489
        %v3491 = vrot.slane %v3192, 4
        %v3492 = vadd.f32 %v3192, %v3491
        %v3493 = vrot.slane %v3492, 2
        %v3494 = vadd.f32 %v3492, %v3493
        %v3495 = vrot.slane %v3494, 1
        %v3496 = vadd.f32 %v3494, %v3495
        %v3497 = vrot.slane %v3193, 4
        %v3498 = vadd.f32 %v3193, %v3497
        %v3499 = vrot.slane %v3498, 2
        %v3500 = vadd.f32 %v3498, %v3499
        %v3501 = vrot.slane %v3500, 1
        %v3502 = vadd.f32 %v3500, %v3501
        %v3503 = vrot.slane %v3194, 4
        %v3504 = vadd.f32 %v3194, %v3503
        %v3505 = vrot.slane %v3504, 2
        %v3506 = vadd.f32 %v3504, %v3505
        %v3507 = vrot.slane %v3506, 1
        %v3508 = vadd.f32 %v3506, %v3507
        %v3509 = vrot.slane %v3195, 4
        %v3510 = vadd.f32 %v3195, %v3509
        %v3511 = vrot.slane %v3510, 2
        %v3512 = vadd.f32 %v3510, %v3511
        %v3513 = vrot.slane %v3512, 1
        %v3514 = vadd.f32 %v3512, %v3513
        %v3515 = vrot.slane %v3196, 4
        %v3516 = vadd.f32 %v3196, %v3515
        %v3517 = vrot.slane %v3516, 2
        %v3518 = vadd.f32 %v3516, %v3517
        %v3519 = vrot.slane %v3518, 1
        %v3520 = vadd.f32 %v3518, %v3519
        %v3521 = vrot.slane %v3197, 4
        %v3522 = vadd.f32 %v3197, %v3521
        %v3523 = vrot.slane %v3522, 2
        %v3524 = vadd.f32 %v3522, %v3523
        %v3525 = vrot.slane %v3524, 1
        %v3526 = vadd.f32 %v3524, %v3525
        %v3527 = vrot.slane %v3198, 4
        %v3528 = vadd.f32 %v3198, %v3527
        %v3529 = vrot.slane %v3528, 2
        %v3530 = vadd.f32 %v3528, %v3529
        %v3531 = vrot.slane %v3530, 1
        %v3532 = vadd.f32 %v3530, %v3531
        %v3533 = vrot.slane %v3199, 4
        %v3534 = vadd.f32 %v3199, %v3533
        %v3535 = vrot.slane %v3534, 2
        %v3536 = vadd.f32 %v3534, %v3535
        %v3537 = vrot.slane %v3536, 1
        %v3538 = vadd.f32 %v3536, %v3537
        %v3539 = vrot.slane %v3200, 4
        %v3540 = vadd.f32 %v3200, %v3539
        %v3541 = vrot.slane %v3540, 2
        %v3542 = vadd.f32 %v3540, %v3541
        %v3543 = vrot.slane %v3542, 1
        %v3544 = vadd.f32 %v3542, %v3543
        %v3545 = vrot.slane %v3201, 4
        %v3546 = vadd.f32 %v3201, %v3545
        %v3547 = vrot.slane %v3546, 2
        %v3548 = vadd.f32 %v3546, %v3547
        %v3549 = vrot.slane %v3548, 1
        %v3550 = vadd.f32 %v3548, %v3549
        %v3551 = vrot.slane %v3202, 4
        %v3552 = vadd.f32 %v3202, %v3551
        %v3553 = vrot.slane %v3552, 2
        %v3554 = vadd.f32 %v3552, %v3553
        %v3555 = vrot.slane %v3554, 1
        %v3556 = vadd.f32 %v3554, %v3555
        %v3557 = vrot.slane %v3203, 4
        %v3558 = vadd.f32 %v3203, %v3557
        %v3559 = vrot.slane %v3558, 2
        %v3560 = vadd.f32 %v3558, %v3559
        %v3561 = vrot.slane %v3560, 1
        %v3562 = vadd.f32 %v3560, %v3561
        %v3563 = vrot.slane %v3204, 4
        %v3564 = vadd.f32 %v3204, %v3563
        %v3565 = vrot.slane %v3564, 2
        %v3566 = vadd.f32 %v3564, %v3565
        %v3567 = vrot.slane %v3566, 1
        %v3568 = vadd.f32 %v3566, %v3567
        %v3569 = vrot.slane %v3205, 4
        %v3570 = vadd.f32 %v3205, %v3569
        %v3571 = vrot.slane %v3570, 2
        %v3572 = vadd.f32 %v3570, %v3571
        %v3573 = vrot.slane %v3572, 1
        %v3574 = vadd.f32 %v3572, %v3573
        %v3575 = vrot.slane %v3206, 4
        %v3576 = vadd.f32 %v3206, %v3575
        %v3577 = vrot.slane %v3576, 2
        %v3578 = vadd.f32 %v3576, %v3577
        %v3579 = vrot.slane %v3578, 1
        %v3580 = vadd.f32 %v3578, %v3579
        %v3581 = vrot.slane %v3207, 4
        %v3582 = vadd.f32 %v3207, %v3581
        %v3583 = vrot.slane %v3582, 2
        %v3584 = vadd.f32 %v3582, %v3583
        %v3585 = vrot.slane %v3584, 1
        %v3586 = vadd.f32 %v3584, %v3585
        %v3587 = vrot.slane %v3208, 4
        %v3588 = vadd.f32 %v3208, %v3587
        %v3589 = vrot.slane %v3588, 2
        %v3590 = vadd.f32 %v3588, %v3589
        %v3591 = vrot.slane %v3590, 1
        %v3592 = vadd.f32 %v3590, %v3591
        %v3657 = vcombine.low %v3214, %v3220
        %v3658 = vcombine.low %v3226, %v3232
        %v3659 = vcombine.low %v3238, %v3244
        %v3660 = vcombine.low %v3250, %v3256
        %v3661 = vcombine.low %v3262, %v3268
        %v3662 = vcombine.low %v3274, %v3280
        %v3663 = vcombine.low %v3286, %v3292
        %v3664 = vcombine.low %v3298, %v3304
        %v3665 = vcombine.low %v3310, %v3316
        %v3666 = vcombine.low %v3322, %v3328
        %v3667 = vcombine.low %v3334, %v3340
        %v3668 = vcombine.low %v3346, %v3352
        %v3669 = vcombine.low %v3358, %v3364
        %v3670 = vcombine.low %v3370, %v3376
        %v3671 = vcombine.low %v3382, %v3388
        %v3672 = vcombine.low %v3394, %v3400
        %v3673 = vcombine.low %v3406, %v3412
        %v3674 = vcombine.low %v3418, %v3424
        %v3675 = vcombine.low %v3430, %v3436
        %v3676 = vcombine.low %v3442, %v3448
        %v3677 = vcombine.low %v3454, %v3460
        %v3678 = vcombine.low %v3466, %v3472
        %v3679 = vcombine.low %v3478, %v3484
        %v3680 = vcombine.low %v3490, %v3496
        %v3681 = vcombine.low %v3502, %v3508
        %v3682 = vcombine.low %v3514, %v3520
        %v3683 = vcombine.low %v3526, %v3532
        %v3684 = vcombine.low %v3538, %v3544
        %v3685 = vcombine.low %v3550, %v3556
        %v3686 = vcombine.low %v3562, %v3568
        %v3687 = vcombine.low %v3574, %v3580
        %v3688 = vcombine.low %v3586, %v3592
        %v3689 = vrot.slane %v3665, 7
        %vm3690 = vcmask 1041409
        %v3691 = vsel %vm3690, %v3689, %v3657
        %vm3692 = vcmask 1045509
        %v3693 = vsel %vm3692, %v3689, %v3691
        %v3694 = vrot.slane %v3673, 6
        %vm3695 = vcmask 1042434
        %v3696 = vsel %vm3695, %v3694, %v3693
        %vm3697 = vcmask 1046534
        %v3698 = vsel %vm3697, %v3694, %v3696
        %v3699 = vrot.slane %v3681, 5
        %vm3700 = vcmask 1043459
        %v3701 = vsel %vm3700, %v3699, %v3698
        %vm3702 = vcmask 1047559
        %v3703 = vsel %vm3702, %v3699, %v3701
        %v3704 = vrot.slane %v3666, 7
        %v3705 = vsel %vm3690, %v3704, %v3658
        %v3706 = vsel %vm3692, %v3704, %v3705
        %v3707 = vrot.slane %v3674, 6
        %v3708 = vsel %vm3695, %v3707, %v3706
        %v3709 = vsel %vm3697, %v3707, %v3708
        %v3710 = vrot.slane %v3682, 5
        %v3711 = vsel %vm3700, %v3710, %v3709
        %v3712 = vsel %vm3702, %v3710, %v3711
        %v3713 = vrot.slane %v3667, 7
        %v3714 = vsel %vm3690, %v3713, %v3659
        %v3715 = vsel %vm3692, %v3713, %v3714
        %v3716 = vrot.slane %v3675, 6
        %v3717 = vsel %vm3695, %v3716, %v3715
        %v3718 = vsel %vm3697, %v3716, %v3717
        %v3719 = vrot.slane %v3683, 5
        %v3720 = vsel %vm3700, %v3719, %v3718
        %v3721 = vsel %vm3702, %v3719, %v3720
        %v3722 = vrot.slane %v3668, 7
        %v3723 = vsel %vm3690, %v3722, %v3660
        %v3724 = vsel %vm3692, %v3722, %v3723
        %v3725 = vrot.slane %v3676, 6
        %v3726 = vsel %vm3695, %v3725, %v3724
        %v3727 = vsel %vm3697, %v3725, %v3726
        %v3728 = vrot.slane %v3684, 5
        %v3729 = vsel %vm3700, %v3728, %v3727
        %v3730 = vsel %vm3702, %v3728, %v3729
        %v3731 = vrot.slane %v3669, 7
        %v3732 = vsel %vm3690, %v3731, %v3661
        %v3733 = vsel %vm3692, %v3731, %v3732
        %v3734 = vrot.slane %v3677, 6
        %v3735 = vsel %vm3695, %v3734, %v3733
        %v3736 = vsel %vm3697, %v3734, %v3735
        %v3737 = vrot.slane %v3685, 5
        %v3738 = vsel %vm3700, %v3737, %v3736
        %v3739 = vsel %vm3702, %v3737, %v3738
        %v3740 = vrot.slane %v3670, 7
        %v3741 = vsel %vm3690, %v3740, %v3662
        %v3742 = vsel %vm3692, %v3740, %v3741
        %v3743 = vrot.slane %v3678, 6
        %v3744 = vsel %vm3695, %v3743, %v3742
        %v3745 = vsel %vm3697, %v3743, %v3744
        %v3746 = vrot.slane %v3686, 5
        %v3747 = vsel %vm3700, %v3746, %v3745
        %v3748 = vsel %vm3702, %v3746, %v3747
        %v3749 = vrot.slane %v3671, 7
        %v3750 = vsel %vm3690, %v3749, %v3663
        %v3751 = vsel %vm3692, %v3749, %v3750
        %v3752 = vrot.slane %v3679, 6
        %v3753 = vsel %vm3695, %v3752, %v3751
        %v3754 = vsel %vm3697, %v3752, %v3753
        %v3755 = vrot.slane %v3687, 5
        %v3756 = vsel %vm3700, %v3755, %v3754
        %v3757 = vsel %vm3702, %v3755, %v3756
        %v3758 = vrot.slane %v3672, 7
        %v3759 = vsel %vm3690, %v3758, %v3664
        %v3760 = vsel %vm3692, %v3758, %v3759
        %v3761 = vrot.slane %v3680, 6
        %v3762 = vsel %vm3695, %v3761, %v3760
        %v3763 = vsel %vm3697, %v3761, %v3762
        %v3764 = vrot.slane %v3688, 5
        %v3765 = vsel %vm3700, %v3764, %v3763
        %v3766 = vsel %vm3702, %v3764, %v3765
        %3775 = vst [vmem:[%s174] sm:$0xff] %v3703
        %3776 = vst [vmem:[%s174 + $0x8] sm:$0xff] %v3712
        %3777 = vst [vmem:[%s174 + $0x10] sm:$0xff] %v3721
        %3778 = vst [vmem:[%s174 + $0x18] sm:$0xff] %v3730
        %3779 = vst [vmem:[%s174 + $0x20] sm:$0xff] %v3739
        %3780 = vst [vmem:[%s174 + $0x28] sm:$0xff] %v3748
        %3781 = vst [vmem:[%s174 + $0x30] sm:$0xff] %v3757
        %3782 = vst [vmem:[%s174 + $0x38] sm:$0xff] %v3766
        %s3783 = sand.u32 %s75, 1
        %s3784 = scalar_lea.sflag [#allocation4], %s3783
        %s3785 = sand.u32 %s75, 1
        %s3786 = smul.addr %s3785, 64
        %s3787 = scalar_lea.vmem [#allocation7], %s3786
        // Predicated region
        $region37: #{tpu_custom_call.1} parent=27 // pred_check
          %p3788 = pneg %p85
        $region38: #{tpu_custom_call.1} parent=27 // pred_check_branch
          %3790 = sbr.rel (%p3788) target = $region40
        $region39: #{tpu_custom_call.1} parent=27 // pred_region
          %s3791 = smul.u32 16, %s20
          %s3793 = ssub.s32 1024, 1024
          %3794 = vsyncadd %s3784, %s3793
          %s3795 = smul.addr %s3791, 64
          %s3796 = scalar_lea.hbm %s2, %s3795
          %s3798 = sshll.u32 %s3787, 4
          %s3799 = int_to_ptr.vmem [resolvable:$true] %s3798
          %3801 = dma.vmem_to_hbm [thread:$0]  %s3799, 1024, %s3796, %s3784
        $region40: #{tpu_custom_call.1} parent=27 // pred_fallthru
          _
      $region28: #{tpu_custom_call.1} parent=5 // pred_fallthru
        _
      %p3802 = scmp.le.s32.totalorder 2, %s15
      // Predicated region
      $region41: #{tpu_custom_call.1} parent=5 // pred_check
        %p3803 = pneg %p3802
      $region42: #{tpu_custom_call.1} parent=5 // pred_check_branch
        %3805 = sbr.rel (%p3803) target = $region44
      $region43: #{tpu_custom_call.1} parent=5 // pred_region
        %s3806 = ssub.s32 %s15, 2
        // Predicated region
        $region45: #{tpu_custom_call.1} parent=43 // pred_check
          %p3807 = pneg %p91
        $region46: #{tpu_custom_call.1} parent=43 // pred_check_branch
          %3809 = sbr.rel (%p3807) target = $region48
        $region47: #{tpu_custom_call.1} parent=43 // pred_region
          %s3810 = sand.u32 %s76, 1
          %s3811 = scalar_lea.sflag [#allocation4], %s3810
          %s3812 = sand.u32 %s76, 1
          %s3813 = smul.addr %s3812, 64
          %s3814 = scalar_lea.vmem [#allocation7], %s3813
          %3815 = dma.done %s3811, 1024
        $region48: #{tpu_custom_call.1} parent=43 // pred_fallthru
          _
      $region44: #{tpu_custom_call.1} parent=5 // pred_fallthru
        _
    $region6: #{tpu_custom_call.1} parent=1 // loop_footer
      %s19 = sadd.s32 1, %s15
    $region7: #{tpu_custom_call.1} parent=1 // loop_footer_branch
      %14 = sbr.rel target = $region3
    $region8: #{tpu_custom_call.1} parent=1 // loop_exit
      _
    %3816 = vsyncpa [#allocation3], 1
    %s3817 = scalar_lea.sflag [#allocation3], 1
    %3818 = vsyncpa %s3817, 1
    %3819 = vsyncpa [#allocation6], 1
    %3820 = vsyncpa [#allocation4], 1
    %s3821 = scalar_lea.sflag [#allocation4], 1
    %3822 = vsyncpa %s3821, 1

</llo_original>
